<compile_context>
chip_gen: v5e
topology: v5e:2x2
jax: 0.10.0
libtpu: 0.0.40
codegen_flags: <defaults>
</compile_context>

<pallas_src>
import functools

import jax
import jax.numpy as jnp
from jax.experimental import pallas as pl
from jax.experimental.pallas import tpu as pltpu


# -----------------------------------------------------------------------------
# Pallas kernels
# -----------------------------------------------------------------------------
def _pointwise_conv_kernel(a_ref, w_ref, b_ref, *rest, relu, has_res):
    """o = maybe_relu(a @ w + bias [+ residual]); bf16 MXU, f32 epilogue."""
    if has_res:
        res_ref, o_ref = rest
    else:
        (o_ref,) = rest
    acc = jnp.dot(a_ref[...], w_ref[...], preferred_element_type=jnp.float32)
    y = acc + b_ref[...]
    if has_res:
        y = y + res_ref[...]
    if relu:
        y = jnp.maximum(y, 0.0)
    o_ref[...] = y.astype(o_ref.dtype)


def _conv3x3_s1_kernel(x_ref, w_ref, b_ref, o_ref, *, Ho, Wo, relu):
    """Implicit-GEMM 3x3 stride-1 conv for one image.

    x_ref: (3, Hp*Wo, C) bf16 — three W-shifted copies of the spatially padded
           input, rows flattened as h*Wo + w (so every tap is a contiguous,
           tile-aligned row slice).
    w_ref: (9, C, Cout) bf16, BN scale folded, taps ordered (kh, kw).
    b_ref: (1, Cout) f32 folded-BN bias.
    o_ref: (Ho*Wo, Cout).
    """
    cout = o_ref.shape[-1]
    acc = jnp.zeros((Ho * Wo, cout), jnp.float32)
    for kh in range(3):
        for kw in range(3):
            patch = x_ref[kw, kh * Wo:(kh + Ho) * Wo, :]     # (Ho*Wo, C) bf16
            acc = acc + jnp.dot(patch, w_ref[3 * kh + kw],
                                preferred_element_type=jnp.float32)
    y = acc + b_ref[...]
    if relu:
        y = jnp.maximum(y, 0.0)
    o_ref[...] = y.astype(o_ref.dtype)


# -----------------------------------------------------------------------------
# Pallas wrappers
# -----------------------------------------------------------------------------
def _round_up(x, m):
    return (x + m - 1) // m * m


def pointwise_conv(a2d, w, bias, residual=None, relu=True, out_dtype=jnp.float32):
    """Fused 1x1-conv GEMM.  a2d: (M, K); w: (K, N) bf16 (BN scale folded);
    bias: (1, N) f32; residual: optional (M, N) f32."""
    M, K = a2d.shape
    N = w.shape[1]
    a = a2d if a2d.dtype == jnp.bfloat16 else a2d.astype(jnp.bfloat16)

    # Largest MXU-friendly M tile that divides M → no per-call pad round-trips.
    # 256 fills the 256-wide MXU on v6e/v7x; 128 is the natural v5e tile.
    if M % 256 == 0:
        tm = 256
    elif M % 128 == 0:
        tm = 128
    else:
        tm = min(_round_up(M, 8), 128)
    Mp = _round_up(M, tm)
    if Mp != M:
        a = jnp.pad(a, ((0, Mp - M), (0, 0)))

    has_res = residual is not None
    operands = [a, w, bias]
    in_specs = [
        pl.BlockSpec((tm, K), lambda i: (i, 0)),
        pl.BlockSpec((K, N), lambda i: (0, 0)),   # resident weight block
        pl.BlockSpec((1, N), lambda i: (0, 0)),
    ]
    if has_res:
        r = residual if Mp == M else jnp.pad(residual, ((0, Mp - M), (0, 0)))
        operands.append(r)
        in_specs.append(pl.BlockSpec((tm, N), lambda i: (i, 0)))

    out = pl.pallas_call(
        functools.partial(_pointwise_conv_kernel, relu=relu, has_res=has_res),
        out_shape=jax.ShapeDtypeStruct((Mp, N), out_dtype),
        grid=(Mp // tm,),
        in_specs=in_specs,
        out_specs=pl.BlockSpec((tm, N), lambda i: (i, 0)),
        compiler_params=pltpu.CompilerParams(dimension_semantics=("parallel",)),
    )(*operands)
    return out if Mp == M else out[:M]


def _im2col(x, kh, kw, stride, pad):
    """x: (N, H, W, C) -> (N*Ho*Wo, kh*kw*C), column order (kh, kw, Cin)."""
    N, H, W, C = x.shape
    Ho = (H + 2 * pad - kh) // stride + 1
    Wo = (W + 2 * pad - kw) // stride + 1
    xp = jnp.pad(x, ((0, 0), (pad, pad), (pad, pad), (0, 0)))
    cols = []
    for i in range(kh):
        for j in range(kw):
            cols.append(xp[:, i:i + stride * (Ho - 1) + 1:stride,
                           j:j + stride * (Wo - 1) + 1:stride, :])
    return jnp.concatenate(cols, axis=-1).reshape(N * Ho * Wo, kh * kw * C), Ho, Wo


def conv3x3_bn_relu(x, w9, bias, stride):
    """x: (N, H, W, C) NHWC; w9: (9, C, Cout) bf16 (BN folded); bias: (1, Cout).
    Returns ((N*Ho*Wo, Cout) bf16, Ho, Wo)."""
    N, H, W, C = x.shape
    Cout = w9.shape[-1]
    Ho = (H + 2 - 3) // stride + 1
    Wo = (W + 2 - 3) // stride + 1

    if stride != 1:
        # TODO(synk): implicit-GEMM kernel covers stride=1 only; the strided
        # case falls back to an XLA im2col feeding the same fused GEMM kernel.
        a, _, _ = _im2col(x, 3, 3, stride, 1)
        out = pointwise_conv(a, w9.reshape(9 * C, Cout), bias, relu=True,
                             out_dtype=jnp.bfloat16)
        return out, Ho, Wo

    Hp = H + 2
    xp = jnp.pad(x.astype(jnp.bfloat16), ((0, 0), (1, 1), (1, 1), (0, 0)))
    # Three W-shifted copies so every in-kernel tap is a contiguous row slice.
    xw = jnp.stack([xp[:, :, kw:kw + Wo, :] for kw in range(3)], axis=1)
    xw = xw.reshape(N, 3, Hp * Wo, C)

    out = pl.pallas_call(
        functools.partial(_conv3x3_s1_kernel, Ho=Ho, Wo=Wo, relu=True),
        out_shape=jax.ShapeDtypeStruct((N * Ho * Wo, Cout), jnp.bfloat16),
        grid=(N,),
        in_specs=[
            pl.BlockSpec((None, 3, Hp * Wo, C), lambda n: (n, 0, 0, 0)),
            pl.BlockSpec((9, C, Cout), lambda n: (0, 0, 0)),
            pl.BlockSpec((1, Cout), lambda n: (0, 0)),
        ],
        out_specs=pl.BlockSpec((Ho * Wo, Cout), lambda n: (n, 0)),
        compiler_params=pltpu.CompilerParams(dimension_semantics=("parallel",)),
    )(xw, w9, bias)
    return out, Ho, Wo


# -----------------------------------------------------------------------------
# Bottleneck forward (matches the PyTorch module in eval mode)
# -----------------------------------------------------------------------------
def bottleneck_forward(x_nchw, params, *, stride=1):
    x = jnp.transpose(x_nchw, (0, 2, 3, 1))  # NCHW -> NHWC
    N, H, W, Cin = x.shape

    # conv1 (1x1) + bn1 + relu
    planes = params["w1"].shape[1]
    out = pointwise_conv(x.reshape(N * H * W, Cin), params["w1"], params["b1"],
                         relu=True, out_dtype=jnp.bfloat16)
    out = out.reshape(N, H, W, planes)

    # conv2 (3x3, stride) + bn2 + relu  — implicit GEMM
    out, Ho, Wo = conv3x3_bn_relu(out, params["w2"], params["b2"], stride)

    # residual branch (optional downsample = 1x1 conv stride s + bn)
    if "wd" in params:
        xs = x if stride == 1 else x[:, ::stride, ::stride, :]
        residual = pointwise_conv(xs.reshape(N * Ho * Wo, Cin),
                                  params["wd"], params["bd"],
                                  relu=False, out_dtype=jnp.float32)
    else:
        residual = x.reshape(N * Ho * Wo, Cin).astype(jnp.float32)

    # conv3 (1x1) + bn3 + residual add + relu — fully fused epilogue
    cout = params["w3"].shape[1]
    y = pointwise_conv(out, params["w3"], params["b3"],
                       residual=residual, relu=True, out_dtype=jnp.float32)
    return jnp.transpose(y.reshape(N, Ho, Wo, cout), (0, 3, 1, 2))  # back to NCHW


# -----------------------------------------------------------------------------
# Deterministic synthetic parameters, pre-transformed for the kernels:
#   * weights stored as (K, N) / (9, Cin, Cout) matrices, BN scale folded,
#     cast to bf16 once at init (no per-forward transposes / folding).
# -----------------------------------------------------------------------------
def init_params(key, inplanes, planes, stride=1):
    expansion = 4

    def conv_w(k, cout, cin, kh, kw):
        fan_in = cin * kh * kw
        return jax.random.normal(k, (cout, cin, kh, kw), jnp.float32) * (2.0 / fan_in) ** 0.5

    def bn(k, c):
        k1, k2, k3, k4 = jax.random.split(k, 4)
        gamma = 1.0 + 0.1 * jax.random.normal(k1, (c,), jnp.float32)
        beta = 0.1 * jax.random.normal(k2, (c,), jnp.float32)
        mean = 0.1 * jax.random.normal(k3, (c,), jnp.float32)
        var = jax.random.uniform(k4, (c,), jnp.float32, minval=0.5, maxval=1.5)
        scale = gamma / jnp.sqrt(var + 1e-5)       # eval-mode BN folded
        bias = beta - mean * scale
        return scale, bias

    ks = iter(jax.random.split(key, 8))
    p = {}

    w1 = conv_w(next(ks), planes, inplanes, 1, 1)
    s1, b1 = bn(next(ks), planes)
    p["w1"] = (w1[:, :, 0, 0].T * s1[None, :]).astype(jnp.bfloat16)
    p["b1"] = b1.reshape(1, -1)

    w2 = conv_w(next(ks), planes, planes, 3, 3)
    s2, b2 = bn(next(ks), planes)
    w2t = jnp.transpose(w2, (2, 3, 1, 0)).reshape(9, planes, planes)  # (kh,kw,Cin,Cout)
    p["w2"] = (w2t * s2[None, None, :]).astype(jnp.bfloat16)
    p["b2"] = b2.reshape(1, -1)

    w3 = conv_w(next(ks), planes * expansion, planes, 1, 1)
    s3, b3 = bn(next(ks), planes * expansion)
    p["w3"] = (w3[:, :, 0, 0].T * s3[None, :]).astype(jnp.bfloat16)
    p["b3"] = b3.reshape(1, -1)

    if stride != 1 or inplanes != planes * expansion:
        wd = conv_w(next(ks), planes * expansion, inplanes, 1, 1)
        sd, bd = bn(next(ks), planes * expansion)
        p["wd"] = (wd[:, :, 0, 0].T * sd[None, :]).astype(jnp.bfloat16)
        p["bd"] = bd.reshape(1, -1)
    return p


# -----------------------------------------------------------------------------
if __name__ == "__main__":
    key = jax.random.PRNGKey(0)
    k_param, k_x = jax.random.split(key)

    # Small shapes consistent with a Bottleneck block: inplanes=64, planes=64
    # (expansion 4 -> 256 output channels, downsample branch active), 16x16.
    inplanes, planes, stride = 64, 64, 1
    params = init_params(k_param, inplanes, planes, stride)
    x = jax.random.normal(k_x, (2, inplanes, 16, 16), jnp.float32)

    fwd = jax.jit(functools.partial(bottleneck_forward, stride=stride))
    y = fwd(x, params)
    jax.block_until_ready(y)

    assert y.shape == (2, planes * 4, 16, 16), y.shape
    assert bool(jnp.all(jnp.isfinite(y)))
    print("KERNEL_OK")
</pallas_src>

<mosaic_0001>
module attributes {stable_mosaic.version = 11 : i64} {
  func.func @_pointwise_conv_kernel(%arg0: i32, %arg1: memref<256x64xbf16, #tpu.memory_space<vmem>>, %arg2: memref<64x64xbf16, #tpu.memory_space<vmem>>, %arg3: memref<1x64xf32, #tpu.memory_space<vmem>>, %arg4: memref<256x64xbf16, #tpu.memory_space<vmem>>) attributes {dimension_semantics = [#tpu.dimension_semantics<parallel>], iteration_bounds = array<i64: 2>, scalar_prefetch = 0 : i64, scratch_operands = 0 : i64, tpu.core_type = #tpu.core_type<tc>, window_params = [{transform_indices = @transform_0, window_bounds = array<i64: 256, 64>}, {pipeline_mode = #tpu.pipeline_mode<synchronous>, transform_indices = @transform_1, window_bounds = array<i64: 64, 64>}, {pipeline_mode = #tpu.pipeline_mode<synchronous>, transform_indices = @transform_2, window_bounds = array<i64: 1, 64>}, {transform_indices = @transform_3, window_bounds = array<i64: 256, 64>}]} {
    %c0 = arith.constant 0 : index
    %c0_0 = arith.constant 0 : index
    %0 = vector.load %arg1[%c0, %c0_0] : memref<256x64xbf16, #tpu.memory_space<vmem>>, vector<256x64xbf16>
    %c0_1 = arith.constant 0 : index
    %c0_2 = arith.constant 0 : index
    %1 = vector.load %arg2[%c0_1, %c0_2] : memref<64x64xbf16, #tpu.memory_space<vmem>>, vector<64x64xbf16>
    %cst = arith.constant dense<0.000000e+00> : vector<256x64xf32>
    %2 = tpu.matmul %0, %1, %cst {dimension_numbers = #tpu.dot_dimension_numbers<[1], [0], [0], [1], [0, 0, 1, 1], [], []>} : vector<256x64xbf16>, vector<64x64xbf16>, vector<256x64xf32> -> vector<256x64xf32>
    %c0_3 = arith.constant 0 : index
    %c0_4 = arith.constant 0 : index
    %3 = vector.load %arg3[%c0_3, %c0_4] : memref<1x64xf32, #tpu.memory_space<vmem>>, vector<1x64xf32>
    %4 = vector.broadcast %3 : vector<1x64xf32> to vector<256x64xf32>
    %5 = arith.addf %2, %4 : vector<256x64xf32>
    %cst_5 = arith.constant 0.000000e+00 : f32
    %6 = vector.broadcast %cst_5 : f32 to vector<256x64xf32>
    %7 = arith.maximumf %5, %6 : vector<256x64xf32>
    %8 = arith.truncf %7 : vector<256x64xf32> to vector<256x64xbf16>
    %c0_6 = arith.constant 0 : index
    %c0_7 = arith.constant 0 : index
    %9 = vector.load %arg4[%c0_6, %c0_7] : memref<256x64xbf16, #tpu.memory_space<vmem>>, vector<256x64xbf16>
    tpu.vector_store %arg4[%c0_6, %c0_7], %8 {strides = array<i32>} : memref<256x64xbf16, #tpu.memory_space<vmem>>, vector<256x64xbf16>,
    return
  }
  func.func @transform_0(%arg0: i32) -> (i32, i32) {
    %c0_i32 = arith.constant 0 : i32
    %c0_i32_0 = arith.constant 0 : i32
    return %arg0, %c0_i32 : i32, i32
  }
  func.func @transform_1(%arg0: i32) -> (i32, i32) {
    %c0_i32 = arith.constant 0 : i32
    %c0_i32_0 = arith.constant 0 : i32
    %c0_i32_1 = arith.constant 0 : i32
    return %c0_i32, %c0_i32_0 : i32, i32
  }
  func.func @transform_2(%arg0: i32) -> (i32, i32) {
    %c0_i32 = arith.constant 0 : i32
    %c0_i32_0 = arith.constant 0 : i32
    %c0_i32_1 = arith.constant 0 : i32
    return %c0_i32, %c0_i32_0 : i32, i32
  }
  func.func @transform_3(%arg0: i32) -> (i32, i32) {
    %c0_i32 = arith.constant 0 : i32
    %c0_i32_0 = arith.constant 0 : i32
    return %arg0, %c0_i32 : i32, i32
  }
}

module attributes {stable_mosaic.version = 11 : i64} {
  func.func @_conv3x3_s1_kernel(%arg0: i32, %arg1: memref<1x3x288x64xbf16, #tpu.memory_space<vmem>>, %arg2: memref<9x64x64xbf16, #tpu.memory_space<vmem>>, %arg3: memref<1x64xf32, #tpu.memory_space<vmem>>, %arg4: memref<256x64xbf16, #tpu.memory_space<vmem>>) attributes {dimension_semantics = [#tpu.dimension_semantics<parallel>], iteration_bounds = array<i64: 2>, scalar_prefetch = 0 : i64, scratch_operands = 0 : i64, tpu.core_type = #tpu.core_type<tc>, window_params = [{transform_indices = @transform_0, window_bounds = array<i64: 1, 3, 288, 64>}, {pipeline_mode = #tpu.pipeline_mode<synchronous>, transform_indices = @transform_1, window_bounds = array<i64: 9, 64, 64>}, {pipeline_mode = #tpu.pipeline_mode<synchronous>, transform_indices = @transform_2, window_bounds = array<i64: 1, 64>}, {transform_indices = @transform_3, window_bounds = array<i64: 256, 64>}]} {
    %cst = arith.constant 0.000000e+00 : f32
    %0 = vector.broadcast %cst : f32 to vector<256x64xf32>
    %c0 = arith.constant 0 : index
    %c0_0 = arith.constant 0 : index
    %c0_1 = arith.constant 0 : index
    %c0_2 = arith.constant 0 : index
    %1 = vector.load %arg1[%c0, %c0_0, %c0_1, %c0_2] : memref<1x3x288x64xbf16, #tpu.memory_space<vmem>>, vector<1x1x256x64xbf16>
    %2 = vector.shape_cast %1 : vector<1x1x256x64xbf16> to vector<256x64xbf16>
    %c0_3 = arith.constant 0 : index
    %c0_4 = arith.constant 0 : index
    %c0_5 = arith.constant 0 : index
    %3 = vector.load %arg2[%c0_3, %c0_4, %c0_5] : memref<9x64x64xbf16, #tpu.memory_space<vmem>>, vector<1x64x64xbf16>
    %4 = vector.shape_cast %3 : vector<1x64x64xbf16> to vector<64x64xbf16>
    %cst_6 = arith.constant dense<0.000000e+00> : vector<256x64xf32>
    %5 = tpu.matmul %2, %4, %cst_6 {dimension_numbers = #tpu.dot_dimension_numbers<[1], [0], [0], [1], [0, 0, 1, 1], [], []>} : vector<256x64xbf16>, vector<64x64xbf16>, vector<256x64xf32> -> vector<256x64xf32>
    %6 = arith.addf %0, %5 : vector<256x64xf32>
    %c0_7 = arith.constant 0 : index
    %c1 = arith.constant 1 : index
    %c0_8 = arith.constant 0 : index
    %c0_9 = arith.constant 0 : index
    %7 = vector.load %arg1[%c0_7, %c1, %c0_8, %c0_9] : memref<1x3x288x64xbf16, #tpu.memory_space<vmem>>, vector<1x1x256x64xbf16>
    %8 = vector.shape_cast %7 : vector<1x1x256x64xbf16> to vector<256x64xbf16>
    %c1_10 = arith.constant 1 : index
    %c0_11 = arith.constant 0 : index
    %c0_12 = arith.constant 0 : index
    %9 = vector.load %arg2[%c1_10, %c0_11, %c0_12] : memref<9x64x64xbf16, #tpu.memory_space<vmem>>, vector<1x64x64xbf16>
    %10 = vector.shape_cast %9 : vector<1x64x64xbf16> to vector<64x64xbf16>
    %cst_13 = arith.constant dense<0.000000e+00> : vector<256x64xf32>
    %11 = tpu.matmul %8, %10, %cst_13 {dimension_numbers = #tpu.dot_dimension_numbers<[1], [0], [0], [1], [0, 0, 1, 1], [], []>} : vector<256x64xbf16>, vector<64x64xbf16>, vector<256x64xf32> -> vector<256x64xf32>
    %12 = arith.addf %6, %11 : vector<256x64xf32>
    %c0_14 = arith.constant 0 : index
    %c2 = arith.constant 2 : index
    %c0_15 = arith.constant 0 : index
    %c0_16 = arith.constant 0 : index
    %13 = vector.load %arg1[%c0_14, %c2, %c0_15, %c0_16] : memref<1x3x288x64xbf16, #tpu.memory_space<vmem>>, vector<1x1x256x64xbf16>
    %14 = vector.shape_cast %13 : vector<1x1x256x64xbf16> to vector<256x64xbf16>
    %c2_17 = arith.constant 2 : index
    %c0_18 = arith.constant 0 : index
    %c0_19 = arith.constant 0 : index
    %15 = vector.load %arg2[%c2_17, %c0_18, %c0_19] : memref<9x64x64xbf16, #tpu.memory_space<vmem>>, vector<1x64x64xbf16>
    %16 = vector.shape_cast %15 : vector<1x64x64xbf16> to vector<64x64xbf16>
    %cst_20 = arith.constant dense<0.000000e+00> : vector<256x64xf32>
    %17 = tpu.matmul %14, %16, %cst_20 {dimension_numbers = #tpu.dot_dimension_numbers<[1], [0], [0], [1], [0, 0, 1, 1], [], []>} : vector<256x64xbf16>, vector<64x64xbf16>, vector<256x64xf32> -> vector<256x64xf32>
    %18 = arith.addf %12, %17 : vector<256x64xf32>
    %c0_21 = arith.constant 0 : index
    %c0_22 = arith.constant 0 : index
    %c16 = arith.constant 16 : index
    %c0_23 = arith.constant 0 : index
    %19 = vector.load %arg1[%c0_21, %c0_22, %c16, %c0_23] : memref<1x3x288x64xbf16, #tpu.memory_space<vmem>>, vector<1x1x256x64xbf16>
    %20 = vector.shape_cast %19 : vector<1x1x256x64xbf16> to vector<256x64xbf16>
    %c3 = arith.constant 3 : index
    %c0_24 = arith.constant 0 : index
    %c0_25 = arith.constant 0 : index
    %21 = vector.load %arg2[%c3, %c0_24, %c0_25] : memref<9x64x64xbf16, #tpu.memory_space<vmem>>, vector<1x64x64xbf16>
    %22 = vector.shape_cast %21 : vector<1x64x64xbf16> to vector<64x64xbf16>
    %cst_26 = arith.constant dense<0.000000e+00> : vector<256x64xf32>
    %23 = tpu.matmul %20, %22, %cst_26 {dimension_numbers = #tpu.dot_dimension_numbers<[1], [0], [0], [1], [0, 0, 1, 1], [], []>} : vector<256x64xbf16>, vector<64x64xbf16>, vector<256x64xf32> -> vector<256x64xf32>
    %24 = arith.addf %18, %23 : vector<256x64xf32>
    %c0_27 = arith.constant 0 : index
    %c1_28 = arith.constant 1 : index
    %c16_29 = arith.constant 16 : index
    %c0_30 = arith.constant 0 : index
    %25 = vector.load %arg1[%c0_27, %c1_28, %c16_29, %c0_30] : memref<1x3x288x64xbf16, #tpu.memory_space<vmem>>, vector<1x1x256x64xbf16>
    %26 = vector.shape_cast %25 : vector<1x1x256x64xbf16> to vector<256x64xbf16>
    %c4 = arith.constant 4 : index
    %c0_31 = arith.constant 0 : index
    %c0_32 = arith.constant 0 : index
    %27 = vector.load %arg2[%c4, %c0_31, %c0_32] : memref<9x64x64xbf16, #tpu.memory_space<vmem>>, vector<1x64x64xbf16>
    %28 = vector.shape_cast %27 : vector<1x64x64xbf16> to vector<64x64xbf16>
    %cst_33 = arith.constant dense<0.000000e+00> : vector<256x64xf32>
    %29 = tpu.matmul %26, %28, %cst_33 {dimension_numbers = #tpu.dot_dimension_numbers<[1], [0], [0], [1], [0, 0, 1, 1], [], []>} : vector<256x64xbf16>, vector<64x64xbf16>, vector<256x64xf32> -> vector<256x64xf32>
    %30 = arith.addf %24, %29 : vector<256x64xf32>
    %c0_34 = arith.constant 0 : index
    %c2_35 = arith.constant 2 : index
    %c16_36 = arith.constant 16 : index
    %c0_37 = arith.constant 0 : index
    %31 = vector.load %arg1[%c0_34, %c2_35, %c16_36, %c0_37] : memref<1x3x288x64xbf16, #tpu.memory_space<vmem>>, vector<1x1x256x64xbf16>
    %32 = vector.shape_cast %31 : vector<1x1x256x64xbf16> to vector<256x64xbf16>
    %c5 = arith.constant 5 : index
    %c0_38 = arith.constant 0 : index
    %c0_39 = arith.constant 0 : index
    %33 = vector.load %arg2[%c5, %c0_38, %c0_39] : memref<9x64x64xbf16, #tpu.memory_space<vmem>>, vector<1x64x64xbf16>
    %34 = vector.shape_cast %33 : vector<1x64x64xbf16> to vector<64x64xbf16>
    %cst_40 = arith.constant dense<0.000000e+00> : vector<256x64xf32>
    %35 = tpu.matmul %32, %34, %cst_40 {dimension_numbers = #tpu.dot_dimension_numbers<[1], [0], [0], [1], [0, 0, 1, 1], [], []>} : vector<256x64xbf16>, vector<64x64xbf16>, vector<256x64xf32> -> vector<256x64xf32>
    %36 = arith.addf %30, %35 : vector<256x64xf32>
    %c0_41 = arith.constant 0 : index
    %c0_42 = arith.constant 0 : index
    %c32 = arith.constant 32 : index
    %c0_43 = arith.constant 0 : index
    %37 = vector.load %arg1[%c0_41, %c0_42, %c32, %c0_43] : memref<1x3x288x64xbf16, #tpu.memory_space<vmem>>, vector<1x1x256x64xbf16>
    %38 = vector.shape_cast %37 : vector<1x1x256x64xbf16> to vector<256x64xbf16>
    %c6 = arith.constant 6 : index
    %c0_44 = arith.constant 0 : index
    %c0_45 = arith.constant 0 : index
    %39 = vector.load %arg2[%c6, %c0_44, %c0_45] : memref<9x64x64xbf16, #tpu.memory_space<vmem>>, vector<1x64x64xbf16>
    %40 = vector.shape_cast %39 : vector<1x64x64xbf16> to vector<64x64xbf16>
    %cst_46 = arith.constant dense<0.000000e+00> : vector<256x64xf32>
    %41 = tpu.matmul %38, %40, %cst_46 {dimension_numbers = #tpu.dot_dimension_numbers<[1], [0], [0], [1], [0, 0, 1, 1], [], []>} : vector<256x64xbf16>, vector<64x64xbf16>, vector<256x64xf32> -> vector<256x64xf32>
    %42 = arith.addf %36, %41 : vector<256x64xf32>
    %c0_47 = arith.constant 0 : index
    %c1_48 = arith.constant 1 : index
    %c32_49 = arith.constant 32 : index
    %c0_50 = arith.constant 0 : index
    %43 = vector.load %arg1[%c0_47, %c1_48, %c32_49, %c0_50] : memref<1x3x288x64xbf16, #tpu.memory_space<vmem>>, vector<1x1x256x64xbf16>
    %44 = vector.shape_cast %43 : vector<1x1x256x64xbf16> to vector<256x64xbf16>
    %c7 = arith.constant 7 : index
    %c0_51 = arith.constant 0 : index
    %c0_52 = arith.constant 0 : index
    %45 = vector.load %arg2[%c7, %c0_51, %c0_52] : memref<9x64x64xbf16, #tpu.memory_space<vmem>>, vector<1x64x64xbf16>
    %46 = vector.shape_cast %45 : vector<1x64x64xbf16> to vector<64x64xbf16>
    %cst_53 = arith.constant dense<0.000000e+00> : vector<256x64xf32>
    %47 = tpu.matmul %44, %46, %cst_53 {dimension_numbers = #tpu.dot_dimension_numbers<[1], [0], [0], [1], [0, 0, 1, 1], [], []>} : vector<256x64xbf16>, vector<64x64xbf16>, vector<256x64xf32> -> vector<256x64xf32>
    %48 = arith.addf %42, %47 : vector<256x64xf32>
    %c0_54 = arith.constant 0 : index
    %c2_55 = arith.constant 2 : index
    %c32_56 = arith.constant 32 : index
    %c0_57 = arith.constant 0 : index
    %49 = vector.load %arg1[%c0_54, %c2_55, %c32_56, %c0_57] : memref<1x3x288x64xbf16, #tpu.memory_space<vmem>>, vector<1x1x256x64xbf16>
    %50 = vector.shape_cast %49 : vector<1x1x256x64xbf16> to vector<256x64xbf16>
    %c8 = arith.constant 8 : index
    %c0_58 = arith.constant 0 : index
    %c0_59 = arith.constant 0 : index
    %51 = vector.load %arg2[%c8, %c0_58, %c0_59] : memref<9x64x64xbf16, #tpu.memory_space<vmem>>, vector<1x64x64xbf16>
    %52 = vector.shape_cast %51 : vector<1x64x64xbf16> to vector<64x64xbf16>
    %cst_60 = arith.constant dense<0.000000e+00> : vector<256x64xf32>
    %53 = tpu.matmul %50, %52, %cst_60 {dimension_numbers = #tpu.dot_dimension_numbers<[1], [0], [0], [1], [0, 0, 1, 1], [], []>} : vector<256x64xbf16>, vector<64x64xbf16>, vector<256x64xf32> -> vector<256x64xf32>
    %54 = arith.addf %48, %53 : vector<256x64xf32>
    %c0_61 = arith.constant 0 : index
    %c0_62 = arith.constant 0 : index
    %55 = vector.load %arg3[%c0_61, %c0_62] : memref<1x64xf32, #tpu.memory_space<vmem>>, vector<1x64xf32>
    %56 = vector.broadcast %55 : vector<1x64xf32> to vector<256x64xf32>
    %57 = arith.addf %54, %56 : vector<256x64xf32>
    %cst_63 = arith.constant 0.000000e+00 : f32
    %58 = vector.broadcast %cst_63 : f32 to vector<256x64xf32>
    %59 = arith.maximumf %57, %58 : vector<256x64xf32>
    %60 = arith.truncf %59 : vector<256x64xf32> to vector<256x64xbf16>
    %c0_64 = arith.constant 0 : index
    %c0_65 = arith.constant 0 : index
    %61 = vector.load %arg4[%c0_64, %c0_65] : memref<256x64xbf16, #tpu.memory_space<vmem>>, vector<256x64xbf16>
    tpu.vector_store %arg4[%c0_64, %c0_65], %60 {strides = array<i32>} : memref<256x64xbf16, #tpu.memory_space<vmem>>, vector<256x64xbf16>,
    return
  }
  func.func @transform_0(%arg0: i32) -> (i32, i32, i32, i32) {
    %c0_i32 = arith.constant 0 : i32
    %c0_i32_0 = arith.constant 0 : i32
    %c0_i32_1 = arith.constant 0 : i32
    %c0_i32_2 = arith.constant 0 : i32
    return %arg0, %c0_i32, %c0_i32_0, %c0_i32_1 : i32, i32, i32, i32
  }
  func.func @transform_1(%arg0: i32) -> (i32, i32, i32) {
    %c0_i32 = arith.constant 0 : i32
    %c0_i32_0 = arith.constant 0 : i32
    %c0_i32_1 = arith.constant 0 : i32
    %c0_i32_2 = arith.constant 0 : i32
    return %c0_i32, %c0_i32_0, %c0_i32_1 : i32, i32, i32
  }
  func.func @transform_2(%arg0: i32) -> (i32, i32) {
    %c0_i32 = arith.constant 0 : i32
    %c0_i32_0 = arith.constant 0 : i32
    %c0_i32_1 = arith.constant 0 : i32
    return %c0_i32, %c0_i32_0 : i32, i32
  }
  func.func @transform_3(%arg0: i32) -> (i32, i32) {
    %c0_i32 = arith.constant 0 : i32
    %c0_i32_0 = arith.constant 0 : i32
    return %arg0, %c0_i32 : i32, i32
  }
}

module attributes {stable_mosaic.version = 11 : i64} {
  func.func @_pointwise_conv_kernel(%arg0: i32, %arg1: memref<256x64xbf16, #tpu.memory_space<vmem>>, %arg2: memref<64x256xbf16, #tpu.memory_space<vmem>>, %arg3: memref<1x256xf32, #tpu.memory_space<vmem>>, %arg4: memref<256x256xf32, #tpu.memory_space<vmem>>) attributes {dimension_semantics = [#tpu.dimension_semantics<parallel>], iteration_bounds = array<i64: 2>, scalar_prefetch = 0 : i64, scratch_operands = 0 : i64, tpu.core_type = #tpu.core_type<tc>, window_params = [{transform_indices = @transform_0, window_bounds = array<i64: 256, 64>}, {pipeline_mode = #tpu.pipeline_mode<synchronous>, transform_indices = @transform_1, window_bounds = array<i64: 64, 256>}, {pipeline_mode = #tpu.pipeline_mode<synchronous>, transform_indices = @transform_2, window_bounds = array<i64: 1, 256>}, {transform_indices = @transform_3, window_bounds = array<i64: 256, 256>}]} {
    %c0 = arith.constant 0 : index
    %c0_0 = arith.constant 0 : index
    %0 = vector.load %arg1[%c0, %c0_0] : memref<256x64xbf16, #tpu.memory_space<vmem>>, vector<256x64xbf16>
    %c0_1 = arith.constant 0 : index
    %c0_2 = arith.constant 0 : index
    %1 = vector.load %arg2[%c0_1, %c0_2] : memref<64x256xbf16, #tpu.memory_space<vmem>>, vector<64x256xbf16>
    %cst = arith.constant dense<0.000000e+00> : vector<256x256xf32>
    %2 = tpu.matmul %0, %1, %cst {dimension_numbers = #tpu.dot_dimension_numbers<[1], [0], [0], [1], [0, 0, 1, 1], [], []>} : vector<256x64xbf16>, vector<64x256xbf16>, vector<256x256xf32> -> vector<256x256xf32>
    %c0_3 = arith.constant 0 : index
    %c0_4 = arith.constant 0 : index
    %3 = vector.load %arg3[%c0_3, %c0_4] : memref<1x256xf32, #tpu.memory_space<vmem>>, vector<1x256xf32>
    %4 = vector.broadcast %3 : vector<1x256xf32> to vector<256x256xf32>
    %5 = arith.addf %2, %4 : vector<256x256xf32>
    %c0_5 = arith.constant 0 : index
    %c0_6 = arith.constant 0 : index
    %6 = vector.load %arg4[%c0_5, %c0_6] : memref<256x256xf32, #tpu.memory_space<vmem>>, vector<256x256xf32>
    tpu.vector_store %arg4[%c0_5, %c0_6], %5 {strides = array<i32>} : memref<256x256xf32, #tpu.memory_space<vmem>>, vector<256x256xf32>,
    return
  }
  func.func @transform_0(%arg0: i32) -> (i32, i32) {
    %c0_i32 = arith.constant 0 : i32
    %c0_i32_0 = arith.constant 0 : i32
    return %arg0, %c0_i32 : i32, i32
  }
  func.func @transform_1(%arg0: i32) -> (i32, i32) {
    %c0_i32 = arith.constant 0 : i32
    %c0_i32_0 = arith.constant 0 : i32
    %c0_i32_1 = arith.constant 0 : i32
    return %c0_i32, %c0_i32_0 : i32, i32
  }
  func.func @transform_2(%arg0: i32) -> (i32, i32) {
    %c0_i32 = arith.constant 0 : i32
    %c0_i32_0 = arith.constant 0 : i32
    %c0_i32_1 = arith.constant 0 : i32
    return %c0_i32, %c0_i32_0 : i32, i32
  }
  func.func @transform_3(%arg0: i32) -> (i32, i32) {
    %c0_i32 = arith.constant 0 : i32
    %c0_i32_0 = arith.constant 0 : i32
    return %arg0, %c0_i32 : i32, i32
  }
}

module attributes {stable_mosaic.version = 11 : i64} {
  func.func @_pointwise_conv_kernel(%arg0: i32, %arg1: memref<256x64xbf16, #tpu.memory_space<vmem>>, %arg2: memref<64x256xbf16, #tpu.memory_space<vmem>>, %arg3: memref<1x256xf32, #tpu.memory_space<vmem>>, %arg4: memref<256x256xf32, #tpu.memory_space<vmem>>, %arg5: memref<256x256xf32, #tpu.memory_space<vmem>>) attributes {dimension_semantics = [#tpu.dimension_semantics<parallel>], iteration_bounds = array<i64: 2>, scalar_prefetch = 0 : i64, scratch_operands = 0 : i64, tpu.core_type = #tpu.core_type<tc>, window_params = [{transform_indices = @transform_0, window_bounds = array<i64: 256, 64>}, {pipeline_mode = #tpu.pipeline_mode<synchronous>, transform_indices = @transform_1, window_bounds = array<i64: 64, 256>}, {pipeline_mode = #tpu.pipeline_mode<synchronous>, transform_indices = @transform_2, window_bounds = array<i64: 1, 256>}, {transform_indices = @transform_3, window_bounds = array<i64: 256, 256>}, {transform_indices = @transform_4, window_bounds = array<i64: 256, 256>}]} {
    %c0 = arith.constant 0 : index
    %c0_0 = arith.constant 0 : index
    %0 = vector.load %arg1[%c0, %c0_0] : memref<256x64xbf16, #tpu.memory_space<vmem>>, vector<256x64xbf16>
    %c0_1 = arith.constant 0 : index
    %c0_2 = arith.constant 0 : index
    %1 = vector.load %arg2[%c0_1, %c0_2] : memref<64x256xbf16, #tpu.memory_space<vmem>>, vector<64x256xbf16>
    %cst = arith.constant dense<0.000000e+00> : vector<256x256xf32>
    %2 = tpu.matmul %0, %1, %cst {dimension_numbers = #tpu.dot_dimension_numbers<[1], [0], [0], [1], [0, 0, 1, 1], [], []>} : vector<256x64xbf16>, vector<64x256xbf16>, vector<256x256xf32> -> vector<256x256xf32>
    %c0_3 = arith.constant 0 : index
    %c0_4 = arith.constant 0 : index
    %3 = vector.load %arg3[%c0_3, %c0_4] : memref<1x256xf32, #tpu.memory_space<vmem>>, vector<1x256xf32>
    %4 = vector.broadcast %3 : vector<1x256xf32> to vector<256x256xf32>
    %5 = arith.addf %2, %4 : vector<256x256xf32>
    %c0_5 = arith.constant 0 : index
    %c0_6 = arith.constant 0 : index
    %6 = vector.load %arg4[%c0_5, %c0_6] : memref<256x256xf32, #tpu.memory_space<vmem>>, vector<256x256xf32>
    %7 = arith.addf %5, %6 : vector<256x256xf32>
    %cst_7 = arith.constant 0.000000e+00 : f32
    %8 = vector.broadcast %cst_7 : f32 to vector<256x256xf32>
    %9 = arith.maximumf %7, %8 : vector<256x256xf32>
    %c0_8 = arith.constant 0 : index
    %c0_9 = arith.constant 0 : index
    %10 = vector.load %arg5[%c0_8, %c0_9] : memref<256x256xf32, #tpu.memory_space<vmem>>, vector<256x256xf32>
    tpu.vector_store %arg5[%c0_8, %c0_9], %9 {strides = array<i32>} : memref<256x256xf32, #tpu.memory_space<vmem>>, vector<256x256xf32>,
    return
  }
  func.func @transform_0(%arg0: i32) -> (i32, i32) {
    %c0_i32 = arith.constant 0 : i32
    %c0_i32_0 = arith.constant 0 : i32
    return %arg0, %c0_i32 : i32, i32
  }
  func.func @transform_1(%arg0: i32) -> (i32, i32) {
    %c0_i32 = arith.constant 0 : i32
    %c0_i32_0 = arith.constant 0 : i32
    %c0_i32_1 = arith.constant 0 : i32
    return %c0_i32, %c0_i32_0 : i32, i32
  }
  func.func @transform_2(%arg0: i32) -> (i32, i32) {
    %c0_i32 = arith.constant 0 : i32
    %c0_i32_0 = arith.constant 0 : i32
    %c0_i32_1 = arith.constant 0 : i32
    return %c0_i32, %c0_i32_0 : i32, i32
  }
  func.func @transform_3(%arg0: i32) -> (i32, i32) {
    %c0_i32 = arith.constant 0 : i32
    %c0_i32_0 = arith.constant 0 : i32
    return %arg0, %c0_i32 : i32, i32
  }
  func.func @transform_4(%arg0: i32) -> (i32, i32) {
    %c0_i32 = arith.constant 0 : i32
    %c0_i32_0 = arith.constant 0 : i32
    return %arg0, %c0_i32 : i32, i32
  }
}

</mosaic_0001>

<llo_original>
// kernel: bottleneck_forward.4
$region0: #{bottleneck_forward.4}
  #allocation0 [shape = 'u32[]', space=smem, size = 0x4, offset = 0x4, fixed_abs, tag = 'smem constant byte address 0x4 - core index']
  #allocation1 [shape = 'u32[72,128]{1,0:T(1,128)}', space=vmem, size = 0x9000, scoped, tag = 'internal scratch']
  %s0 = inlined_call_operand.vmem [shape: bf16[512,64], index: 0, kind: input, shape index: {}]
  %s1 = inlined_call_operand.vmem [shape: bf16[64,64], index: 1, kind: input, shape index: {}]
  %s2 = inlined_call_operand.vmem [shape: f32[1,64], index: 2, kind: input, shape index: {}]
  %s3 = inlined_call_operand.vmem [shape: bf16[512,64], index: 3, kind: output, shape index: {}]
  %s4 = sld [smem:[#allocation0]]
  $region45: #{bottleneck_forward.4} parent=0
    _
  %s6 = ssub.s32 1, %s4
  %s7 = scalar_select 0, %s6, %s4
  loop: start=0, step=1, limit=4
  $region2: #{bottleneck_forward.4} parent=0 // loop_pre_header
    _
  $region3: #{bottleneck_forward.4} parent=0 // loop_header
    %s9 = sphi 0, %s13
    %p10 = scmp.ge.s32.totalorder %s9, 4
    %s19 = sphi 0, %s21
    %s22 = sphi 0, %s19
    %s23 = sphi 0, %s22
    %s39 = sphi 0, %s23
    %s43 = sphi 0, %s43
    %s45 = sphi 0, %s43
    %s46 = sphi 0, %s45
    %s60 = sphi 0, %s46
    %s64 = sphi 0, %s64
    %s66 = sphi 0, %s64
    %s67 = sphi 0, %s66
    %s81 = sphi 0, %s67
    %s87 = sphi 0, %s89
    %s90 = sphi 0, %s87
    %s91 = sphi 0, %s90
    %s107 = sphi 0, %s91
  $region4: #{bottleneck_forward.4} parent=0 // loop_header_branch
    %12 = sbr.rel (%p10) target = $region8
  $region5: #{bottleneck_forward.4} parent=0 // loop_body
    %s14 = ssub.s32 %s9, 1
    %s15 = ssub.s32 %s9, 2
    %s16 = sadd.s32 %s9, 1
    %s17 = ssub.s32 %s9, %s16
    %p18 = scmp.eq.s32.totalorder %s17, 0
    %s20 = sadd.s32 %s19, 1
    %s21 = scalar_select %p18, %s19, %s20
    %p24 = pneg %p18
    %p25 = scmp.eq.s32.totalorder %s9, 1
    %p26 = por %p24, %p25
    %p27 = scmp.ne.s32.totalorder %s19, %s22
    %p28 = scmp.eq.s32.totalorder %s9, 0
    %p29 = por %p27, %p28
    %p30 = scmp.ne.s32.totalorder %s19, %s22
    %p31 = scmp.eq.s32.totalorder %s14, 1
    %p32 = por %p30, %p31
    %p33 = scmp.ne.s32.totalorder %s22, %s23
    %p34 = scmp.eq.s32.totalorder %s14, 0
    %p35 = por %p33, %p34
    %p36 = scmp.ne.s32.totalorder %s22, %s23
    %p37 = scmp.eq.s32.totalorder %s15, 1
    %p38 = por %p36, %p37
    %p40 = scmp.ne.s32.totalorder %s23, %s39
    %p41 = scmp.eq.s32.totalorder %s15, 0
    %p42 = por %p40, %p41
    %s44 = sadd.s32 %s43, 1
    %p47 = scmp.eq.s32.totalorder %s9, 1
    %p48 = scmp.ne.s32.totalorder %s43, %s45
    %p49 = scmp.eq.s32.totalorder %s9, 0
    %p50 = por %p48, %p49
    %p51 = scmp.ne.s32.totalorder %s43, %s45
    %p52 = scmp.eq.s32.totalorder %s14, 1
    %p53 = por %p51, %p52
    %p54 = scmp.ne.s32.totalorder %s45, %s46
    %p55 = scmp.eq.s32.totalorder %s14, 0
    %p56 = por %p54, %p55
    %p57 = scmp.ne.s32.totalorder %s45, %s46
    %p58 = scmp.eq.s32.totalorder %s15, 1
    %p59 = por %p57, %p58
    %p61 = scmp.ne.s32.totalorder %s46, %s60
    %p62 = scmp.eq.s32.totalorder %s15, 0
    %p63 = por %p61, %p62
    %s65 = sadd.s32 %s64, 1
    %p68 = scmp.eq.s32.totalorder %s9, 1
    %p69 = scmp.ne.s32.totalorder %s64, %s66
    %p70 = scmp.eq.s32.totalorder %s9, 0
    %p71 = por %p69, %p70
    %p72 = scmp.ne.s32.totalorder %s64, %s66
    %p73 = scmp.eq.s32.totalorder %s14, 1
    %p74 = por %p72, %p73
    %p75 = scmp.ne.s32.totalorder %s66, %s67
    %p76 = scmp.eq.s32.totalorder %s14, 0
    %p77 = por %p75, %p76
    %p78 = scmp.ne.s32.totalorder %s66, %s67
    %p79 = scmp.eq.s32.totalorder %s15, 1
    %p80 = por %p78, %p79
    %p82 = scmp.ne.s32.totalorder %s67, %s81
    %p83 = scmp.eq.s32.totalorder %s15, 0
    %p84 = por %p82, %p83
    %s85 = ssub.s32 %s9, %s16
    %p86 = scmp.eq.s32.totalorder %s85, 0
    %s88 = sadd.s32 %s87, 1
    %s89 = scalar_select %p86, %s87, %s88
    %p92 = pneg %p86
    %p93 = scmp.eq.s32.totalorder %s9, 1
    %p94 = por %p92, %p93
    %p95 = scmp.ne.s32.totalorder %s87, %s90
    %p96 = scmp.eq.s32.totalorder %s9, 0
    %p97 = por %p95, %p96
    %p98 = scmp.ne.s32.totalorder %s87, %s90
    %p99 = scmp.eq.s32.totalorder %s14, 1
    %p100 = por %p98, %p99
    %p101 = scmp.ne.s32.totalorder %s90, %s91
    %p102 = scmp.eq.s32.totalorder %s14, 0
    %p103 = por %p101, %p102
    %p104 = scmp.ne.s32.totalorder %s90, %s91
    %p105 = scmp.eq.s32.totalorder %s15, 1
    %p106 = por %p104, %p105
    %p108 = scmp.ne.s32.totalorder %s91, %s107
    %p109 = scmp.eq.s32.totalorder %s15, 0
    %p110 = por %p108, %p109
    %p111 = scmp.le.s32.totalorder 1, %s9
    %p112 = scmp.lt.s32.totalorder %s9, 3
    %p113 = pnand %p111, %p112
    %p114 = pneg %p113
    // Predicated region
    $region9: #{bottleneck_forward.4} parent=5 // pred_check
      _
    $region10: #{bottleneck_forward.4} parent=5 // pred_check_branch
      %116 = sbr.rel (%p113) target = $region12
    $region11: #{bottleneck_forward.4} parent=5 // pred_region
      %s117 = ssub.s32 %s9, 1
      // Predicated region
      $region13: #{bottleneck_forward.4} parent=11 // pred_check
        %p118 = pneg %p56
      $region14: #{bottleneck_forward.4} parent=11 // pred_check_branch
        %120 = sbr.rel (%p118) target = $region16
      $region15: #{bottleneck_forward.4} parent=11 // pred_region
        _
      $region16: #{bottleneck_forward.4} parent=11 // pred_fallthru
        _
      // Predicated region
      $region17: #{bottleneck_forward.4} parent=11 // pred_check
        %p121 = pneg %p77
      $region18: #{bottleneck_forward.4} parent=11 // pred_check_branch
        %123 = sbr.rel (%p121) target = $region20
      $region19: #{bottleneck_forward.4} parent=11 // pred_region
        _
      $region20: #{bottleneck_forward.4} parent=11 // pred_fallthru
        _
    $region12: #{bottleneck_forward.4} parent=5 // pred_fallthru
      _
    %p124 = scmp.lt.s32.totalorder %s9, 2
    // Predicated region
    $region21: #{bottleneck_forward.4} parent=5 // pred_check
      %p125 = pneg %p124
    $region22: #{bottleneck_forward.4} parent=5 // pred_check_branch
      %127 = sbr.rel (%p125) target = $region24
    $region23: #{bottleneck_forward.4} parent=5 // pred_region
      // Predicated region
      $region25: #{bottleneck_forward.4} parent=23 // pred_check
        %p128 = pneg %p29
      $region26: #{bottleneck_forward.4} parent=23 // pred_check_branch
        %130 = sbr.rel (%p128) target = $region28
      $region27: #{bottleneck_forward.4} parent=23 // pred_region
        %s131 = smul.u32 32, %s9
        %p132 = scmp.lt.s32.totalorder %s131, 63
        %s133 = scalar_select %p132, %s131, 63
        %s134 = smul.addr %s133, 4
        %s135 = scalar_lea.vmem %s0, %s134
        %s136 = smul.u32 32, %s9
      $region28: #{bottleneck_forward.4} parent=23 // pred_fallthru
        _
    $region24: #{bottleneck_forward.4} parent=5 // pred_fallthru
      _
    %p137 = scmp.le.s32.totalorder 1, %s9
    %p138 = scmp.lt.s32.totalorder %s9, 3
    %p139 = pnand %p137, %p138
    %p140 = pneg %p139
    // Predicated region
    $region29: #{bottleneck_forward.4} parent=5 // pred_check
      _
    $region30: #{bottleneck_forward.4} parent=5 // pred_check_branch
      %142 = sbr.rel (%p139) target = $region32
    $region31: #{bottleneck_forward.4} parent=5 // pred_region
      %s143 = ssub.s32 %s9, 1
      %s144 = smul.u32 32, %s14
      %p145 = scmp.lt.s32.totalorder %s144, 63
      %s146 = scalar_select %p145, %s144, 63
      %s147 = smul.addr %s146, 4
      %s148 = scalar_lea.vmem %s0, %s147
      %p149 = pneg %p35
      %p150 = pneg %p32
      %p151 = pneg %p56
      %p152 = pneg %p53
      %p153 = pneg %p77
      %p154 = pneg %p74
      %p155 = pneg %p103
      %p156 = pneg %p100
      %s157 = smul.u32 32, %s14
      %p158 = scmp.lt.s32.totalorder %s157, 63
      %s159 = scalar_select %p158, %s157, 63
      %s160 = smul.addr %s159, 4
      %s161 = scalar_lea.vmem %s3, %s160
      %s162 = smul.u32 32, %s14
      %p163 = scmp.lt.s32.totalorder %s162, 63
      %s164 = scalar_select %p163, %s162, 63
      %s165 = smul.addr %s164, 4
      %s166 = scalar_lea.vmem %s0, %s165
      %s167 = smul.u32 32, %s14
      %s168 = smul.u32 32, %s14
      %p169 = scmp.lt.s32.totalorder %s168, 63
      %s170 = scalar_select %p169, %s168, 63
      %s171 = smul.addr %s170, 4
      %s172 = scalar_lea.vmem %s3, %s171
      %s173 = smul.u32 32, %s14
      %v175 = vld [vmem:[%s166] sm:$0xf]
      %v176 = vld [vmem:[%s166 + $0x4] sm:$0xf]
      %v177 = vld [vmem:[%s166 + $0x8] sm:$0xf]
      %v178 = vld [vmem:[%s166 + $0xc] sm:$0xf]
      %v179 = vld [vmem:[%s166 + $0x10] sm:$0xf]
      %v180 = vld [vmem:[%s166 + $0x14] sm:$0xf]
      %v181 = vld [vmem:[%s166 + $0x18] sm:$0xf]
      %v182 = vld [vmem:[%s166 + $0x1c] sm:$0xf]
      %v183 = vld [vmem:[%s166 + $0x20] sm:$0xf]
      %v184 = vld [vmem:[%s166 + $0x24] sm:$0xf]
      %v185 = vld [vmem:[%s166 + $0x28] sm:$0xf]
      %v186 = vld [vmem:[%s166 + $0x2c] sm:$0xf]
      %v187 = vld [vmem:[%s166 + $0x30] sm:$0xf]
      %v188 = vld [vmem:[%s166 + $0x34] sm:$0xf]
      %v189 = vld [vmem:[%s166 + $0x38] sm:$0xf]
      %v190 = vld [vmem:[%s166 + $0x3c] sm:$0xf]
      %v191 = vld [vmem:[%s166 + $0x40] sm:$0xf]
      %v192 = vld [vmem:[%s166 + $0x44] sm:$0xf]
      %v193 = vld [vmem:[%s166 + $0x48] sm:$0xf]
      %v194 = vld [vmem:[%s166 + $0x4c] sm:$0xf]
      %v195 = vld [vmem:[%s166 + $0x50] sm:$0xf]
      %v196 = vld [vmem:[%s166 + $0x54] sm:$0xf]
      %v197 = vld [vmem:[%s166 + $0x58] sm:$0xf]
      %v198 = vld [vmem:[%s166 + $0x5c] sm:$0xf]
      %v199 = vld [vmem:[%s166 + $0x60] sm:$0xf]
      %v200 = vld [vmem:[%s166 + $0x64] sm:$0xf]
      %v201 = vld [vmem:[%s166 + $0x68] sm:$0xf]
      %v202 = vld [vmem:[%s166 + $0x6c] sm:$0xf]
      %v203 = vld [vmem:[%s166 + $0x70] sm:$0xf]
      %v204 = vld [vmem:[%s166 + $0x74] sm:$0xf]
      %v205 = vld [vmem:[%s166 + $0x78] sm:$0xf]
      %v206 = vld [vmem:[%s166 + $0x7c] sm:$0xf]
      %v207 = vld [vmem:[%s1] sm:$0xf]
      %v208 = vld [vmem:[%s1 + $0x4] sm:$0xf]
      %v209 = vld [vmem:[%s1 + $0x8] sm:$0xf]
      %v210 = vld [vmem:[%s1 + $0xc] sm:$0xf]
      %v211 = vld [vmem:[%s1 + $0x10] sm:$0xf]
      %v212 = vld [vmem:[%s1 + $0x14] sm:$0xf]
      %v213 = vld [vmem:[%s1 + $0x18] sm:$0xf]
      %v214 = vld [vmem:[%s1 + $0x1c] sm:$0xf]
      %v215 = vld [vmem:[%s2] sm:$0x1]
      %v217 = vperm.slane %v215, 0
      %v251 = vunpack.c.l.b16 %v175
      %v252 = vunpack.c.l.b16 %v176
      %v253 = vunpack.c.l.b16 %v177
      %v254 = vunpack.c.l.b16 %v178
      %v255 = vunpack.c.l.b16 %v179
      %v256 = vunpack.c.l.b16 %v180
      %v257 = vunpack.c.l.b16 %v181
      %v258 = vunpack.c.l.b16 %v182
      %v259 = vunpack.c.l.b16 %v183
      %v260 = vunpack.c.l.b16 %v184
      %v261 = vunpack.c.l.b16 %v185
      %v262 = vunpack.c.l.b16 %v186
      %v263 = vunpack.c.l.b16 %v187
      %v264 = vunpack.c.l.b16 %v188
      %v265 = vunpack.c.l.b16 %v189
      %v266 = vunpack.c.l.b16 %v190
      %v267 = vunpack.c.l.b16 %v191
      %v268 = vunpack.c.l.b16 %v192
      %v269 = vunpack.c.l.b16 %v193
      %v270 = vunpack.c.l.b16 %v194
      %v271 = vunpack.c.l.b16 %v195
      %v272 = vunpack.c.l.b16 %v196
      %v273 = vunpack.c.l.b16 %v197
      %v274 = vunpack.c.l.b16 %v198
      %v275 = vunpack.c.l.b16 %v199
      %v276 = vunpack.c.l.b16 %v200
      %v277 = vunpack.c.l.b16 %v201
      %v278 = vunpack.c.l.b16 %v202
      %v279 = vunpack.c.l.b16 %v203
      %v280 = vunpack.c.l.b16 %v204
      %v281 = vunpack.c.l.b16 %v205
      %v282 = vunpack.c.l.b16 %v206
      %v283 = vpack.c.b16 %v252, %v251
      %v284 = vpack.c.b16 %v254, %v253
      %v285 = vpack.c.b16 %v256, %v255
      %v286 = vpack.c.b16 %v258, %v257
      %v287 = vpack.c.b16 %v260, %v259
      %v288 = vpack.c.b16 %v262, %v261
      %v289 = vpack.c.b16 %v264, %v263
      %v290 = vpack.c.b16 %v266, %v265
      %v291 = vpack.c.b16 %v268, %v267
      %v292 = vpack.c.b16 %v270, %v269
      %v293 = vpack.c.b16 %v272, %v271
      %v294 = vpack.c.b16 %v274, %v273
      %v295 = vpack.c.b16 %v276, %v275
      %v296 = vpack.c.b16 %v278, %v277
      %v297 = vpack.c.b16 %v280, %v279
      %v298 = vpack.c.b16 %v282, %v281
      %v307 = vunpack.c.l.b16 %v207
      %v308 = vunpack.c.l.b16 %v208
      %v309 = vunpack.c.l.b16 %v209
      %v310 = vunpack.c.l.b16 %v210
      %v311 = vunpack.c.l.b16 %v211
      %v312 = vunpack.c.l.b16 %v212
      %v313 = vunpack.c.l.b16 %v213
      %v314 = vunpack.c.l.b16 %v214
      %v315 = vpack.c.b16 %v308, %v307
      %v316 = vpack.c.b16 %v310, %v309
      %v317 = vpack.c.b16 %v312, %v311
      %v318 = vpack.c.b16 %v314, %v313
      %vm323 = vcmask 523264
      %v325 = vsel %vm323, %v283, 0
      %v328 = vsel %vm323, %v284, 0
      %v331 = vsel %vm323, %v285, 0
      %v334 = vsel %vm323, %v286, 0
      %v337 = vsel %vm323, %v287, 0
      %v340 = vsel %vm323, %v288, 0
      %v343 = vsel %vm323, %v289, 0
      %v346 = vsel %vm323, %v290, 0
      %v349 = vsel %vm323, %v291, 0
      %v352 = vsel %vm323, %v292, 0
      %v355 = vsel %vm323, %v293, 0
      %v358 = vsel %vm323, %v294, 0
      %v361 = vsel %vm323, %v295, 0
      %v364 = vsel %vm323, %v296, 0
      %v367 = vsel %vm323, %v297, 0
      %v370 = vsel %vm323, %v298, 0
      %372 = vmatpush.bf16.msra.mxu0 0
      %373 = vmatpush.bf16.msra.mxu0 0
      %374 = vmatpush.bf16.msra.mxu0 0
      %375 = vmatpush.bf16.msra.mxu0 0
      %376 = vmatpush.bf16.msra.mxu0 %v318
      %377 = vmatpush.bf16.msra.mxu0 %v317
      %378 = vmatpush.bf16.msra.mxu0 %v316
      %379 = vmatpush.bf16.msra.mxu0 %v315
      %380 = vmatmul.bf16.gmra.mxu0 %v325
      %v381 = vpop.f32.mrf.mxu0
      %v382 = vadd.f32 %v217, %v381
      %v383 = vpop.f32.mrf.mxu0
      %v384 = vadd.f32 %v217, %v383
      %385 = vmatmul.bf16.gmra.mxu0 %v328
      %v386 = vpop.f32.mrf.mxu0
      %v387 = vadd.f32 %v217, %v386
      %v388 = vpop.f32.mrf.mxu0
      %v389 = vadd.f32 %v217, %v388
      %390 = vmatmul.bf16.gmra.mxu0 %v331
      %v391 = vpop.f32.mrf.mxu0
      %v392 = vadd.f32 %v217, %v391
      %v393 = vpop.f32.mrf.mxu0
      %v394 = vadd.f32 %v217, %v393
      %395 = vmatmul.bf16.gmra.mxu0 %v334
      %v396 = vpop.f32.mrf.mxu0
      %v397 = vadd.f32 %v217, %v396
      %v398 = vpop.f32.mrf.mxu0
      %v399 = vadd.f32 %v217, %v398
      %400 = vmatmul.bf16.gmra.mxu0 %v337
      %v401 = vpop.f32.mrf.mxu0
      %v402 = vadd.f32 %v217, %v401
      %v403 = vpop.f32.mrf.mxu0
      %v404 = vadd.f32 %v217, %v403
      %405 = vmatmul.bf16.gmra.mxu0 %v340
      %v406 = vpop.f32.mrf.mxu0
      %v407 = vadd.f32 %v217, %v406
      %v408 = vpop.f32.mrf.mxu0
      %v409 = vadd.f32 %v217, %v408
      %410 = vmatmul.bf16.gmra.mxu0 %v343
      %v411 = vpop.f32.mrf.mxu0
      %v412 = vadd.f32 %v217, %v411
      %v413 = vpop.f32.mrf.mxu0
      %v414 = vadd.f32 %v217, %v413
      %415 = vmatmul.bf16.gmra.mxu0 %v346
      %v416 = vpop.f32.mrf.mxu0
      %v417 = vadd.f32 %v217, %v416
      %v418 = vpop.f32.mrf.mxu0
      %v419 = vadd.f32 %v217, %v418
      %420 = vmatmul.bf16.gmra.mxu0 %v349
      %v421 = vpop.f32.mrf.mxu0
      %v422 = vadd.f32 %v217, %v421
      %v423 = vpop.f32.mrf.mxu0
      %v424 = vadd.f32 %v217, %v423
      %425 = vmatmul.bf16.gmra.mxu0 %v352
      %v426 = vpop.f32.mrf.mxu0
      %v427 = vadd.f32 %v217, %v426
      %v428 = vpop.f32.mrf.mxu0
      %v429 = vadd.f32 %v217, %v428
      %430 = vmatmul.bf16.gmra.mxu0 %v355
      %v431 = vpop.f32.mrf.mxu0
      %v432 = vadd.f32 %v217, %v431
      %v433 = vpop.f32.mrf.mxu0
      %v434 = vadd.f32 %v217, %v433
      %435 = vmatmul.bf16.gmra.mxu0 %v358
      %v436 = vpop.f32.mrf.mxu0
      %v437 = vadd.f32 %v217, %v436
      %v438 = vpop.f32.mrf.mxu0
      %v439 = vadd.f32 %v217, %v438
      %440 = vmatmul.bf16.gmra.mxu0 %v361
      %v441 = vpop.f32.mrf.mxu0
      %v442 = vadd.f32 %v217, %v441
      %v443 = vpop.f32.mrf.mxu0
      %v444 = vadd.f32 %v217, %v443
      %445 = vmatmul.bf16.gmra.mxu0 %v364
      %v446 = vpop.f32.mrf.mxu0
      %v447 = vadd.f32 %v217, %v446
      %v448 = vpop.f32.mrf.mxu0
      %v449 = vadd.f32 %v217, %v448
      %450 = vmatmul.bf16.gmra.mxu0 %v367
      %v451 = vpop.f32.mrf.mxu0
      %v452 = vadd.f32 %v217, %v451
      %v453 = vpop.f32.mrf.mxu0
      %v454 = vadd.f32 %v217, %v453
      %455 = vmatmul.bf16.gmra.mxu0 %v370
      %v456 = vpop.f32.mrf.mxu0
      %v457 = vadd.f32 %v217, %v456
      %v458 = vpop.f32.mrf.mxu0
      %v459 = vadd.f32 %v217, %v458
      %460 = vdwg.mxu0
      %v461 = vmax.f32 %v382, 0.0
      %v462 = vmax.f32 %v384, 0.0
      %v463 = vmax.f32 %v387, 0.0
      %v464 = vmax.f32 %v389, 0.0
      %v465 = vmax.f32 %v392, 0.0
      %v466 = vmax.f32 %v394, 0.0
      %v467 = vmax.f32 %v397, 0.0
      %v468 = vmax.f32 %v399, 0.0
      %v469 = vmax.f32 %v402, 0.0
      %v470 = vmax.f32 %v404, 0.0
      %v471 = vmax.f32 %v407, 0.0
      %v472 = vmax.f32 %v409, 0.0
      %v473 = vmax.f32 %v412, 0.0
      %v474 = vmax.f32 %v414, 0.0
      %v475 = vmax.f32 %v417, 0.0
      %v476 = vmax.f32 %v419, 0.0
      %v477 = vmax.f32 %v422, 0.0
      %v478 = vmax.f32 %v424, 0.0
      %v479 = vmax.f32 %v427, 0.0
      %v480 = vmax.f32 %v429, 0.0
      %v481 = vmax.f32 %v432, 0.0
      %v482 = vmax.f32 %v434, 0.0
      %v483 = vmax.f32 %v437, 0.0
      %v484 = vmax.f32 %v439, 0.0
      %v485 = vmax.f32 %v442, 0.0
      %v486 = vmax.f32 %v444, 0.0
      %v487 = vmax.f32 %v447, 0.0
      %v488 = vmax.f32 %v449, 0.0
      %v489 = vmax.f32 %v452, 0.0
      %v490 = vmax.f32 %v454, 0.0
      %v491 = vmax.f32 %v457, 0.0
      %v492 = vmax.f32 %v459, 0.0
      %v493 = vpack.c.bf16 %v461, %v461
      %v494 = vpack.c.bf16 %v462, %v462
      %v495 = vpack.c.bf16 %v463, %v463
      %v496 = vpack.c.bf16 %v464, %v464
      %v497 = vpack.c.bf16 %v465, %v465
      %v498 = vpack.c.bf16 %v466, %v466
      %v499 = vpack.c.bf16 %v467, %v467
      %v500 = vpack.c.bf16 %v468, %v468
      %v501 = vpack.c.bf16 %v469, %v469
      %v502 = vpack.c.bf16 %v470, %v470
      %v503 = vpack.c.bf16 %v471, %v471
      %v504 = vpack.c.bf16 %v472, %v472
      %v505 = vpack.c.bf16 %v473, %v473
      %v506 = vpack.c.bf16 %v474, %v474
      %v507 = vpack.c.bf16 %v475, %v475
      %v508 = vpack.c.bf16 %v476, %v476
      %v509 = vpack.c.bf16 %v477, %v477
      %v510 = vpack.c.bf16 %v478, %v478
      %v511 = vpack.c.bf16 %v479, %v479
      %v512 = vpack.c.bf16 %v480, %v480
      %v513 = vpack.c.bf16 %v481, %v481
      %v514 = vpack.c.bf16 %v482, %v482
      %v515 = vpack.c.bf16 %v483, %v483
      %v516 = vpack.c.bf16 %v484, %v484
      %v517 = vpack.c.bf16 %v485, %v485
      %v518 = vpack.c.bf16 %v486, %v486
      %v519 = vpack.c.bf16 %v487, %v487
      %v520 = vpack.c.bf16 %v488, %v488
      %v521 = vpack.c.bf16 %v489, %v489
      %v522 = vpack.c.bf16 %v490, %v490
      %v523 = vpack.c.bf16 %v491, %v491
      %v524 = vpack.c.bf16 %v492, %v492
      %vm525 = vcmask 519168
      %526 = vst.msk [vmem:[%s172] sm:$0xf] %vm525, %v493
      %527 = vst.msk [vmem:[%s172 + $0x4] sm:$0xf] %vm525, %v494
      %528 = vst.msk [vmem:[%s172 + $0x8] sm:$0xf] %vm525, %v495
      %529 = vst.msk [vmem:[%s172 + $0xc] sm:$0xf] %vm525, %v496
      %530 = vst.msk [vmem:[%s172 + $0x10] sm:$0xf] %vm525, %v497
      %531 = vst.msk [vmem:[%s172 + $0x14] sm:$0xf] %vm525, %v498
      %532 = vst.msk [vmem:[%s172 + $0x18] sm:$0xf] %vm525, %v499
      %533 = vst.msk [vmem:[%s172 + $0x1c] sm:$0xf] %vm525, %v500
      %534 = vst.msk [vmem:[%s172 + $0x20] sm:$0xf] %vm525, %v501
      %535 = vst.msk [vmem:[%s172 + $0x24] sm:$0xf] %vm525, %v502
      %536 = vst.msk [vmem:[%s172 + $0x28] sm:$0xf] %vm525, %v503
      %537 = vst.msk [vmem:[%s172 + $0x2c] sm:$0xf] %vm525, %v504
      %538 = vst.msk [vmem:[%s172 + $0x30] sm:$0xf] %vm525, %v505
      %539 = vst.msk [vmem:[%s172 + $0x34] sm:$0xf] %vm525, %v506
      %540 = vst.msk [vmem:[%s172 + $0x38] sm:$0xf] %vm525, %v507
      %541 = vst.msk [vmem:[%s172 + $0x3c] sm:$0xf] %vm525, %v508
      %542 = vst.msk [vmem:[%s172 + $0x40] sm:$0xf] %vm525, %v509
      %543 = vst.msk [vmem:[%s172 + $0x44] sm:$0xf] %vm525, %v510
      %544 = vst.msk [vmem:[%s172 + $0x48] sm:$0xf] %vm525, %v511
      %545 = vst.msk [vmem:[%s172 + $0x4c] sm:$0xf] %vm525, %v512
      %546 = vst.msk [vmem:[%s172 + $0x50] sm:$0xf] %vm525, %v513
      %547 = vst.msk [vmem:[%s172 + $0x54] sm:$0xf] %vm525, %v514
      %548 = vst.msk [vmem:[%s172 + $0x58] sm:$0xf] %vm525, %v515
      %549 = vst.msk [vmem:[%s172 + $0x5c] sm:$0xf] %vm525, %v516
      %550 = vst.msk [vmem:[%s172 + $0x60] sm:$0xf] %vm525, %v517
      %551 = vst.msk [vmem:[%s172 + $0x64] sm:$0xf] %vm525, %v518
      %552 = vst.msk [vmem:[%s172 + $0x68] sm:$0xf] %vm525, %v519
      %553 = vst.msk [vmem:[%s172 + $0x6c] sm:$0xf] %vm525, %v520
      %554 = vst.msk [vmem:[%s172 + $0x70] sm:$0xf] %vm525, %v521
      %555 = vst.msk [vmem:[%s172 + $0x74] sm:$0xf] %vm525, %v522
      %556 = vst.msk [vmem:[%s172 + $0x78] sm:$0xf] %vm525, %v523
      %557 = vst.msk [vmem:[%s172 + $0x7c] sm:$0xf] %vm525, %v524
      %s558 = smul.u32 32, %s14
      %p559 = scmp.lt.s32.totalorder %s558, 63
      %s560 = scalar_select %p559, %s558, 63
      %s561 = smul.addr %s560, 4
      %s562 = scalar_lea.vmem %s3, %s561
      // Predicated region
      $region33: #{bottleneck_forward.4} parent=31 // pred_check
        %p563 = pneg %p100
      $region34: #{bottleneck_forward.4} parent=31 // pred_check_branch
        %565 = sbr.rel (%p563) target = $region36
      $region35: #{bottleneck_forward.4} parent=31 // pred_region
        %s566 = smul.u32 32, %s14
      $region36: #{bottleneck_forward.4} parent=31 // pred_fallthru
        _
    $region32: #{bottleneck_forward.4} parent=5 // pred_fallthru
      _
    %p567 = scmp.le.s32.totalorder 2, %s9
    // Predicated region
    $region37: #{bottleneck_forward.4} parent=5 // pred_check
      %p568 = pneg %p567
    $region38: #{bottleneck_forward.4} parent=5 // pred_check_branch
      %570 = sbr.rel (%p568) target = $region40
    $region39: #{bottleneck_forward.4} parent=5 // pred_region
      %s571 = ssub.s32 %s9, 2
      // Predicated region
      $region41: #{bottleneck_forward.4} parent=39 // pred_check
        %p572 = pneg %p106
      $region42: #{bottleneck_forward.4} parent=39 // pred_check_branch
        %574 = sbr.rel (%p572) target = $region44
      $region43: #{bottleneck_forward.4} parent=39 // pred_region
        %s575 = smul.u32 32, %s15
        %p576 = scmp.lt.s32.totalorder %s575, 63
        %s577 = scalar_select %p576, %s575, 63
        %s578 = smul.addr %s577, 4
        %s579 = scalar_lea.vmem %s3, %s578
      $region44: #{bottleneck_forward.4} parent=39 // pred_fallthru
        _
    $region40: #{bottleneck_forward.4} parent=5 // pred_fallthru
      _
  $region6: #{bottleneck_forward.4} parent=0 // loop_footer
    %s13 = sadd.s32 1, %s9
  $region7: #{bottleneck_forward.4} parent=0 // loop_footer_branch
    %8 = sbr.rel target = $region3
  $region8: #{bottleneck_forward.4} parent=0 // loop_exit
    _

// kernel: bottleneck_forward.6
$region0: #{bottleneck_forward.6}
  #allocation0 [shape = 'u32[]', space=smem, size = 0x4, offset = 0x4, fixed_abs, tag = 'smem constant byte address 0x4 - core index']
  #allocation1 [shape = 'u32[72,128]{1,0:T(1,128)}', space=vmem, size = 0x9000, scoped, tag = 'internal scratch']
  %s0 = inlined_call_operand.vmem [shape: bf16[512,64], index: 0, kind: input, shape index: {}]
  %s1 = inlined_call_operand.vmem [shape: bf16[64,256], index: 1, kind: input, shape index: {}]
  %s2 = inlined_call_operand.vmem [shape: f32[1,256], index: 2, kind: input, shape index: {}]
  %s3 = inlined_call_operand.vmem [shape: f32[512,256], index: 3, kind: output, shape index: {}]
  %s4 = sld [smem:[#allocation0]]
  $region45: #{bottleneck_forward.6} parent=0
    _
  %s6 = ssub.s32 1, %s4
  %s7 = scalar_select 0, %s6, %s4
  loop: start=0, step=1, limit=4
  $region2: #{bottleneck_forward.6} parent=0 // loop_pre_header
    _
  $region3: #{bottleneck_forward.6} parent=0 // loop_header
    %s9 = sphi 0, %s13
    %p10 = scmp.ge.s32.totalorder %s9, 4
    %s19 = sphi 0, %s21
    %s22 = sphi 0, %s19
    %s23 = sphi 0, %s22
    %s39 = sphi 0, %s23
    %s43 = sphi 0, %s43
    %s45 = sphi 0, %s43
    %s46 = sphi 0, %s45
    %s60 = sphi 0, %s46
    %s64 = sphi 0, %s64
    %s66 = sphi 0, %s64
    %s67 = sphi 0, %s66
    %s81 = sphi 0, %s67
    %s87 = sphi 0, %s89
    %s90 = sphi 0, %s87
    %s91 = sphi 0, %s90
    %s107 = sphi 0, %s91
  $region4: #{bottleneck_forward.6} parent=0 // loop_header_branch
    %12 = sbr.rel (%p10) target = $region8
  $region5: #{bottleneck_forward.6} parent=0 // loop_body
    %s14 = ssub.s32 %s9, 1
    %s15 = ssub.s32 %s9, 2
    %s16 = sadd.s32 %s9, 1
    %s17 = ssub.s32 %s9, %s16
    %p18 = scmp.eq.s32.totalorder %s17, 0
    %s20 = sadd.s32 %s19, 1
    %s21 = scalar_select %p18, %s19, %s20
    %p24 = pneg %p18
    %p25 = scmp.eq.s32.totalorder %s9, 1
    %p26 = por %p24, %p25
    %p27 = scmp.ne.s32.totalorder %s19, %s22
    %p28 = scmp.eq.s32.totalorder %s9, 0
    %p29 = por %p27, %p28
    %p30 = scmp.ne.s32.totalorder %s19, %s22
    %p31 = scmp.eq.s32.totalorder %s14, 1
    %p32 = por %p30, %p31
    %p33 = scmp.ne.s32.totalorder %s22, %s23
    %p34 = scmp.eq.s32.totalorder %s14, 0
    %p35 = por %p33, %p34
    %p36 = scmp.ne.s32.totalorder %s22, %s23
    %p37 = scmp.eq.s32.totalorder %s15, 1
    %p38 = por %p36, %p37
    %p40 = scmp.ne.s32.totalorder %s23, %s39
    %p41 = scmp.eq.s32.totalorder %s15, 0
    %p42 = por %p40, %p41
    %s44 = sadd.s32 %s43, 1
    %p47 = scmp.eq.s32.totalorder %s9, 1
    %p48 = scmp.ne.s32.totalorder %s43, %s45
    %p49 = scmp.eq.s32.totalorder %s9, 0
    %p50 = por %p48, %p49
    %p51 = scmp.ne.s32.totalorder %s43, %s45
    %p52 = scmp.eq.s32.totalorder %s14, 1
    %p53 = por %p51, %p52
    %p54 = scmp.ne.s32.totalorder %s45, %s46
    %p55 = scmp.eq.s32.totalorder %s14, 0
    %p56 = por %p54, %p55
    %p57 = scmp.ne.s32.totalorder %s45, %s46
    %p58 = scmp.eq.s32.totalorder %s15, 1
    %p59 = por %p57, %p58
    %p61 = scmp.ne.s32.totalorder %s46, %s60
    %p62 = scmp.eq.s32.totalorder %s15, 0
    %p63 = por %p61, %p62
    %s65 = sadd.s32 %s64, 1
    %p68 = scmp.eq.s32.totalorder %s9, 1
    %p69 = scmp.ne.s32.totalorder %s64, %s66
    %p70 = scmp.eq.s32.totalorder %s9, 0
    %p71 = por %p69, %p70
    %p72 = scmp.ne.s32.totalorder %s64, %s66
    %p73 = scmp.eq.s32.totalorder %s14, 1
    %p74 = por %p72, %p73
    %p75 = scmp.ne.s32.totalorder %s66, %s67
    %p76 = scmp.eq.s32.totalorder %s14, 0
    %p77 = por %p75, %p76
    %p78 = scmp.ne.s32.totalorder %s66, %s67
    %p79 = scmp.eq.s32.totalorder %s15, 1
    %p80 = por %p78, %p79
    %p82 = scmp.ne.s32.totalorder %s67, %s81
    %p83 = scmp.eq.s32.totalorder %s15, 0
    %p84 = por %p82, %p83
    %s85 = ssub.s32 %s9, %s16
    %p86 = scmp.eq.s32.totalorder %s85, 0
    %s88 = sadd.s32 %s87, 1
    %s89 = scalar_select %p86, %s87, %s88
    %p92 = pneg %p86
    %p93 = scmp.eq.s32.totalorder %s9, 1
    %p94 = por %p92, %p93
    %p95 = scmp.ne.s32.totalorder %s87, %s90
    %p96 = scmp.eq.s32.totalorder %s9, 0
    %p97 = por %p95, %p96
    %p98 = scmp.ne.s32.totalorder %s87, %s90
    %p99 = scmp.eq.s32.totalorder %s14, 1
    %p100 = por %p98, %p99
    %p101 = scmp.ne.s32.totalorder %s90, %s91
    %p102 = scmp.eq.s32.totalorder %s14, 0
    %p103 = por %p101, %p102
    %p104 = scmp.ne.s32.totalorder %s90, %s91
    %p105 = scmp.eq.s32.totalorder %s15, 1
    %p106 = por %p104, %p105
    %p108 = scmp.ne.s32.totalorder %s91, %s107
    %p109 = scmp.eq.s32.totalorder %s15, 0
    %p110 = por %p108, %p109
    %p111 = scmp.le.s32.totalorder 1, %s9
    %p112 = scmp.lt.s32.totalorder %s9, 3
    %p113 = pnand %p111, %p112
    %p114 = pneg %p113
    // Predicated region
    $region9: #{bottleneck_forward.6} parent=5 // pred_check
      _
    $region10: #{bottleneck_forward.6} parent=5 // pred_check_branch
      %116 = sbr.rel (%p113) target = $region12
    $region11: #{bottleneck_forward.6} parent=5 // pred_region
      %s117 = ssub.s32 %s9, 1
      // Predicated region
      $region13: #{bottleneck_forward.6} parent=11 // pred_check
        %p118 = pneg %p56
      $region14: #{bottleneck_forward.6} parent=11 // pred_check_branch
        %120 = sbr.rel (%p118) target = $region16
      $region15: #{bottleneck_forward.6} parent=11 // pred_region
        _
      $region16: #{bottleneck_forward.6} parent=11 // pred_fallthru
        _
      // Predicated region
      $region17: #{bottleneck_forward.6} parent=11 // pred_check
        %p121 = pneg %p77
      $region18: #{bottleneck_forward.6} parent=11 // pred_check_branch
        %123 = sbr.rel (%p121) target = $region20
      $region19: #{bottleneck_forward.6} parent=11 // pred_region
        _
      $region20: #{bottleneck_forward.6} parent=11 // pred_fallthru
        _
    $region12: #{bottleneck_forward.6} parent=5 // pred_fallthru
      _
    %p124 = scmp.lt.s32.totalorder %s9, 2
    // Predicated region
    $region21: #{bottleneck_forward.6} parent=5 // pred_check
      %p125 = pneg %p124
    $region22: #{bottleneck_forward.6} parent=5 // pred_check_branch
      %127 = sbr.rel (%p125) target = $region24
    $region23: #{bottleneck_forward.6} parent=5 // pred_region
      // Predicated region
      $region25: #{bottleneck_forward.6} parent=23 // pred_check
        %p128 = pneg %p29
      $region26: #{bottleneck_forward.6} parent=23 // pred_check_branch
        %130 = sbr.rel (%p128) target = $region28
      $region27: #{bottleneck_forward.6} parent=23 // pred_region
        %s131 = smul.u32 32, %s9
        %p132 = scmp.lt.s32.totalorder %s131, 63
        %s133 = scalar_select %p132, %s131, 63
        %s134 = smul.addr %s133, 4
        %s135 = scalar_lea.vmem %s0, %s134
        %s136 = smul.u32 32, %s9
      $region28: #{bottleneck_forward.6} parent=23 // pred_fallthru
        _
    $region24: #{bottleneck_forward.6} parent=5 // pred_fallthru
      _
    %p137 = scmp.le.s32.totalorder 1, %s9
    %p138 = scmp.lt.s32.totalorder %s9, 3
    %p139 = pnand %p137, %p138
    %p140 = pneg %p139
    // Predicated region
    $region29: #{bottleneck_forward.6} parent=5 // pred_check
      _
    $region30: #{bottleneck_forward.6} parent=5 // pred_check_branch
      %142 = sbr.rel (%p139) target = $region32
    $region31: #{bottleneck_forward.6} parent=5 // pred_region
      %s143 = ssub.s32 %s9, 1
      %s144 = smul.u32 32, %s14
      %p145 = scmp.lt.s32.totalorder %s144, 63
      %s146 = scalar_select %p145, %s144, 63
      %s147 = smul.addr %s146, 4
      %s148 = scalar_lea.vmem %s0, %s147
      %p149 = pneg %p35
      %p150 = pneg %p32
      %p151 = pneg %p56
      %p152 = pneg %p53
      %p153 = pneg %p77
      %p154 = pneg %p74
      %p155 = pneg %p103
      %p156 = pneg %p100
      %s157 = smul.u32 32, %s14
      %p158 = scmp.lt.s32.totalorder %s157, 63
      %s159 = scalar_select %p158, %s157, 63
      %s160 = smul.addr %s159, 2
      %s161 = smul.addr %s160, 8
      %s162 = scalar_lea.vmem %s3, %s161
      %s163 = smul.u32 32, %s14
      %p164 = scmp.lt.s32.totalorder %s163, 63
      %s165 = scalar_select %p164, %s163, 63
      %s166 = smul.addr %s165, 4
      %s167 = scalar_lea.vmem %s0, %s166
      %s168 = smul.u32 32, %s14
      %s169 = smul.u32 32, %s14
      %p170 = scmp.lt.s32.totalorder %s169, 63
      %s171 = scalar_select %p170, %s169, 63
      %s172 = smul.addr %s171, 2
      %s173 = smul.addr %s172, 8
      %s174 = scalar_lea.vmem %s3, %s173
      %s175 = smul.u32 32, %s14
      %v177 = vld [vmem:[%s167] sm:$0xf]
      %v178 = vld [vmem:[%s167 + $0x4] sm:$0xf]
      %v179 = vld [vmem:[%s167 + $0x8] sm:$0xf]
      %v180 = vld [vmem:[%s167 + $0xc] sm:$0xf]
      %v181 = vld [vmem:[%s167 + $0x10] sm:$0xf]
      %v182 = vld [vmem:[%s167 + $0x14] sm:$0xf]
      %v183 = vld [vmem:[%s167 + $0x18] sm:$0xf]
      %v184 = vld [vmem:[%s167 + $0x1c] sm:$0xf]
      %v185 = vld [vmem:[%s167 + $0x20] sm:$0xf]
      %v186 = vld [vmem:[%s167 + $0x24] sm:$0xf]
      %v187 = vld [vmem:[%s167 + $0x28] sm:$0xf]
      %v188 = vld [vmem:[%s167 + $0x2c] sm:$0xf]
      %v189 = vld [vmem:[%s167 + $0x30] sm:$0xf]
      %v190 = vld [vmem:[%s167 + $0x34] sm:$0xf]
      %v191 = vld [vmem:[%s167 + $0x38] sm:$0xf]
      %v192 = vld [vmem:[%s167 + $0x3c] sm:$0xf]
      %v193 = vld [vmem:[%s167 + $0x40] sm:$0xf]
      %v194 = vld [vmem:[%s167 + $0x44] sm:$0xf]
      %v195 = vld [vmem:[%s167 + $0x48] sm:$0xf]
      %v196 = vld [vmem:[%s167 + $0x4c] sm:$0xf]
      %v197 = vld [vmem:[%s167 + $0x50] sm:$0xf]
      %v198 = vld [vmem:[%s167 + $0x54] sm:$0xf]
      %v199 = vld [vmem:[%s167 + $0x58] sm:$0xf]
      %v200 = vld [vmem:[%s167 + $0x5c] sm:$0xf]
      %v201 = vld [vmem:[%s167 + $0x60] sm:$0xf]
      %v202 = vld [vmem:[%s167 + $0x64] sm:$0xf]
      %v203 = vld [vmem:[%s167 + $0x68] sm:$0xf]
      %v204 = vld [vmem:[%s167 + $0x6c] sm:$0xf]
      %v205 = vld [vmem:[%s167 + $0x70] sm:$0xf]
      %v206 = vld [vmem:[%s167 + $0x74] sm:$0xf]
      %v207 = vld [vmem:[%s167 + $0x78] sm:$0xf]
      %v208 = vld [vmem:[%s167 + $0x7c] sm:$0xf]
      %v209 = vld [vmem:[%s1] sm:$0xff]
      %v210 = vld [vmem:[%s1 + $0x8] sm:$0xff]
      %v211 = vld [vmem:[%s1 + $0x10] sm:$0xff]
      %v212 = vld [vmem:[%s1 + $0x18] sm:$0xff]
      %v213 = vld [vmem:[%s1 + $0x20] sm:$0xff]
      %v214 = vld [vmem:[%s1 + $0x28] sm:$0xff]
      %v215 = vld [vmem:[%s1 + $0x30] sm:$0xff]
      %v216 = vld [vmem:[%s1 + $0x38] sm:$0xff]
      %v217 = vld [vmem:[%s2] sm:$0x3]
      %v219 = vperm.slane %v217, 0
      %v220 = vperm.slane %v217, 1
      %v255 = vunpack.c.l.b16 %v177
      %v256 = vunpack.c.l.b16 %v178
      %v257 = vunpack.c.l.b16 %v179
      %v258 = vunpack.c.l.b16 %v180
      %v259 = vunpack.c.l.b16 %v181
      %v260 = vunpack.c.l.b16 %v182
      %v261 = vunpack.c.l.b16 %v183
      %v262 = vunpack.c.l.b16 %v184
      %v263 = vunpack.c.l.b16 %v185
      %v264 = vunpack.c.l.b16 %v186
      %v265 = vunpack.c.l.b16 %v187
      %v266 = vunpack.c.l.b16 %v188
      %v267 = vunpack.c.l.b16 %v189
      %v268 = vunpack.c.l.b16 %v190
      %v269 = vunpack.c.l.b16 %v191
      %v270 = vunpack.c.l.b16 %v192
      %v271 = vunpack.c.l.b16 %v193
      %v272 = vunpack.c.l.b16 %v194
      %v273 = vunpack.c.l.b16 %v195
      %v274 = vunpack.c.l.b16 %v196
      %v275 = vunpack.c.l.b16 %v197
      %v276 = vunpack.c.l.b16 %v198
      %v277 = vunpack.c.l.b16 %v199
      %v278 = vunpack.c.l.b16 %v200
      %v279 = vunpack.c.l.b16 %v201
      %v280 = vunpack.c.l.b16 %v202
      %v281 = vunpack.c.l.b16 %v203
      %v282 = vunpack.c.l.b16 %v204
      %v283 = vunpack.c.l.b16 %v205
      %v284 = vunpack.c.l.b16 %v206
      %v285 = vunpack.c.l.b16 %v207
      %v286 = vunpack.c.l.b16 %v208
      %v287 = vpack.c.b16 %v256, %v255
      %v288 = vpack.c.b16 %v258, %v257
      %v289 = vpack.c.b16 %v260, %v259
      %v290 = vpack.c.b16 %v262, %v261
      %v291 = vpack.c.b16 %v264, %v263
      %v292 = vpack.c.b16 %v266, %v265
      %v293 = vpack.c.b16 %v268, %v267
      %v294 = vpack.c.b16 %v270, %v269
      %v295 = vpack.c.b16 %v272, %v271
      %v296 = vpack.c.b16 %v274, %v273
      %v297 = vpack.c.b16 %v276, %v275
      %v298 = vpack.c.b16 %v278, %v277
      %v299 = vpack.c.b16 %v280, %v279
      %v300 = vpack.c.b16 %v282, %v281
      %v301 = vpack.c.b16 %v284, %v283
      %v302 = vpack.c.b16 %v286, %v285
      %v311 = vunpack.c.l.b16 %v209
      %v312 = vunpack.c.h.b16 %v209
      %v313 = vunpack.c.l.b16 %v210
      %v314 = vunpack.c.h.b16 %v210
      %v315 = vunpack.c.l.b16 %v211
      %v316 = vunpack.c.h.b16 %v211
      %v317 = vunpack.c.l.b16 %v212
      %v318 = vunpack.c.h.b16 %v212
      %v319 = vunpack.c.l.b16 %v213
      %v320 = vunpack.c.h.b16 %v213
      %v321 = vunpack.c.l.b16 %v214
      %v322 = vunpack.c.h.b16 %v214
      %v323 = vunpack.c.l.b16 %v215
      %v324 = vunpack.c.h.b16 %v215
      %v325 = vunpack.c.l.b16 %v216
      %v326 = vunpack.c.h.b16 %v216
      %v327 = vpack.c.b16 %v313, %v311
      %v328 = vpack.c.b16 %v314, %v312
      %v329 = vpack.c.b16 %v317, %v315
      %v330 = vpack.c.b16 %v318, %v316
      %v331 = vpack.c.b16 %v321, %v319
      %v332 = vpack.c.b16 %v322, %v320
      %v333 = vpack.c.b16 %v325, %v323
      %v334 = vpack.c.b16 %v326, %v324
      %vm343 = vcmask 523264
      %v345 = vsel %vm343, %v287, 0
      %v348 = vsel %vm343, %v288, 0
      %v351 = vsel %vm343, %v289, 0
      %v354 = vsel %vm343, %v290, 0
      %v357 = vsel %vm343, %v291, 0
      %v360 = vsel %vm343, %v292, 0
      %v363 = vsel %vm343, %v293, 0
      %v366 = vsel %vm343, %v294, 0
      %v369 = vsel %vm343, %v295, 0
      %v372 = vsel %vm343, %v296, 0
      %v375 = vsel %vm343, %v297, 0
      %v378 = vsel %vm343, %v298, 0
      %v381 = vsel %vm343, %v299, 0
      %v384 = vsel %vm343, %v300, 0
      %v387 = vsel %vm343, %v301, 0
      %v390 = vsel %vm343, %v302, 0
      %392 = vmatpush.bf16.msra.mxu0 0
      %393 = vmatpush.bf16.msra.mxu0 0
      %394 = vmatpush.bf16.msra.mxu0 0
      %395 = vmatpush.bf16.msra.mxu0 0
      %396 = vmatpush.bf16.msra.mxu0 %v333
      %397 = vmatpush.bf16.msra.mxu0 %v331
      %398 = vmatpush.bf16.msra.mxu0 %v329
      %399 = vmatpush.bf16.msra.mxu0 %v327
      %400 = vmatmul.bf16.gmra.mxu0 %v345
      %v401 = vpop.f32.mrf.mxu0
      %v402 = vadd.f32 %v219, %v401
      %v403 = vpop.f32.mrf.mxu0
      %v404 = vadd.f32 %v219, %v403
      %405 = vmatmul.bf16.gmra.mxu0 %v348
      %v406 = vpop.f32.mrf.mxu0
      %v407 = vadd.f32 %v219, %v406
      %v408 = vpop.f32.mrf.mxu0
      %v409 = vadd.f32 %v219, %v408
      %410 = vmatmul.bf16.gmra.mxu0 %v351
      %v411 = vpop.f32.mrf.mxu0
      %v412 = vadd.f32 %v219, %v411
      %v413 = vpop.f32.mrf.mxu0
      %v414 = vadd.f32 %v219, %v413
      %415 = vmatmul.bf16.gmra.mxu0 %v354
      %v416 = vpop.f32.mrf.mxu0
      %v417 = vadd.f32 %v219, %v416
      %v418 = vpop.f32.mrf.mxu0
      %v419 = vadd.f32 %v219, %v418
      %420 = vmatmul.bf16.gmra.mxu0 %v357
      %v421 = vpop.f32.mrf.mxu0
      %v422 = vadd.f32 %v219, %v421
      %v423 = vpop.f32.mrf.mxu0
      %v424 = vadd.f32 %v219, %v423
      %425 = vmatmul.bf16.gmra.mxu0 %v360
      %v426 = vpop.f32.mrf.mxu0
      %v427 = vadd.f32 %v219, %v426
      %v428 = vpop.f32.mrf.mxu0
      %v429 = vadd.f32 %v219, %v428
      %430 = vmatmul.bf16.gmra.mxu0 %v363
      %v431 = vpop.f32.mrf.mxu0
      %v432 = vadd.f32 %v219, %v431
      %v433 = vpop.f32.mrf.mxu0
      %v434 = vadd.f32 %v219, %v433
      %435 = vmatmul.bf16.gmra.mxu0 %v366
      %v436 = vpop.f32.mrf.mxu0
      %v437 = vadd.f32 %v219, %v436
      %v438 = vpop.f32.mrf.mxu0
      %v439 = vadd.f32 %v219, %v438
      %440 = vmatmul.bf16.gmra.mxu0 %v369
      %v441 = vpop.f32.mrf.mxu0
      %v442 = vadd.f32 %v219, %v441
      %v443 = vpop.f32.mrf.mxu0
      %v444 = vadd.f32 %v219, %v443
      %445 = vmatmul.bf16.gmra.mxu0 %v372
      %v446 = vpop.f32.mrf.mxu0
      %v447 = vadd.f32 %v219, %v446
      %v448 = vpop.f32.mrf.mxu0
      %v449 = vadd.f32 %v219, %v448
      %450 = vmatmul.bf16.gmra.mxu0 %v375
      %v451 = vpop.f32.mrf.mxu0
      %v452 = vadd.f32 %v219, %v451
      %v453 = vpop.f32.mrf.mxu0
      %v454 = vadd.f32 %v219, %v453
      %455 = vmatmul.bf16.gmra.mxu0 %v378
      %v456 = vpop.f32.mrf.mxu0
      %v457 = vadd.f32 %v219, %v456
      %v458 = vpop.f32.mrf.mxu0
      %v459 = vadd.f32 %v219, %v458
      %460 = vmatmul.bf16.gmra.mxu0 %v381
      %v461 = vpop.f32.mrf.mxu0
      %v462 = vadd.f32 %v219, %v461
      %v463 = vpop.f32.mrf.mxu0
      %v464 = vadd.f32 %v219, %v463
      %465 = vmatmul.bf16.gmra.mxu0 %v384
      %v466 = vpop.f32.mrf.mxu0
      %v467 = vadd.f32 %v219, %v466
      %v468 = vpop.f32.mrf.mxu0
      %v469 = vadd.f32 %v219, %v468
      %470 = vmatmul.bf16.gmra.mxu0 %v387
      %v471 = vpop.f32.mrf.mxu0
      %v472 = vadd.f32 %v219, %v471
      %v473 = vpop.f32.mrf.mxu0
      %v474 = vadd.f32 %v219, %v473
      %475 = vmatmul.bf16.gmra.mxu0 %v390
      %v476 = vpop.f32.mrf.mxu0
      %v477 = vadd.f32 %v219, %v476
      %v478 = vpop.f32.mrf.mxu0
      %v479 = vadd.f32 %v219, %v478
      %480 = vdwg.mxu0
      %481 = vmatpush.bf16.msra.mxu0 0
      %482 = vmatpush.bf16.msra.mxu0 0
      %483 = vmatpush.bf16.msra.mxu0 0
      %484 = vmatpush.bf16.msra.mxu0 0
      %485 = vmatpush.bf16.msra.mxu0 %v334
      %486 = vmatpush.bf16.msra.mxu0 %v332
      %487 = vmatpush.bf16.msra.mxu0 %v330
      %488 = vmatpush.bf16.msra.mxu0 %v328
      %489 = vmatmul.bf16.gmra.mxu0 %v345
      %v490 = vpop.f32.mrf.mxu0
      %v491 = vadd.f32 %v220, %v490
      %v492 = vpop.f32.mrf.mxu0
      %v493 = vadd.f32 %v220, %v492
      %494 = vmatmul.bf16.gmra.mxu0 %v348
      %v495 = vpop.f32.mrf.mxu0
      %v496 = vadd.f32 %v220, %v495
      %v497 = vpop.f32.mrf.mxu0
      %v498 = vadd.f32 %v220, %v497
      %499 = vmatmul.bf16.gmra.mxu0 %v351
      %v500 = vpop.f32.mrf.mxu0
      %v501 = vadd.f32 %v220, %v500
      %v502 = vpop.f32.mrf.mxu0
      %v503 = vadd.f32 %v220, %v502
      %504 = vmatmul.bf16.gmra.mxu0 %v354
      %v505 = vpop.f32.mrf.mxu0
      %v506 = vadd.f32 %v220, %v505
      %v507 = vpop.f32.mrf.mxu0
      %v508 = vadd.f32 %v220, %v507
      %509 = vmatmul.bf16.gmra.mxu0 %v357
      %v510 = vpop.f32.mrf.mxu0
      %v511 = vadd.f32 %v220, %v510
      %v512 = vpop.f32.mrf.mxu0
      %v513 = vadd.f32 %v220, %v512
      %514 = vmatmul.bf16.gmra.mxu0 %v360
      %v515 = vpop.f32.mrf.mxu0
      %v516 = vadd.f32 %v220, %v515
      %v517 = vpop.f32.mrf.mxu0
      %v518 = vadd.f32 %v220, %v517
      %519 = vmatmul.bf16.gmra.mxu0 %v363
      %v520 = vpop.f32.mrf.mxu0
      %v521 = vadd.f32 %v220, %v520
      %v522 = vpop.f32.mrf.mxu0
      %v523 = vadd.f32 %v220, %v522
      %524 = vmatmul.bf16.gmra.mxu0 %v366
      %v525 = vpop.f32.mrf.mxu0
      %v526 = vadd.f32 %v220, %v525
      %v527 = vpop.f32.mrf.mxu0
      %v528 = vadd.f32 %v220, %v527
      %529 = vmatmul.bf16.gmra.mxu0 %v369
      %v530 = vpop.f32.mrf.mxu0
      %v531 = vadd.f32 %v220, %v530
      %v532 = vpop.f32.mrf.mxu0
      %v533 = vadd.f32 %v220, %v532
      %534 = vmatmul.bf16.gmra.mxu0 %v372
      %v535 = vpop.f32.mrf.mxu0
      %v536 = vadd.f32 %v220, %v535
      %v537 = vpop.f32.mrf.mxu0
      %v538 = vadd.f32 %v220, %v537
      %539 = vmatmul.bf16.gmra.mxu0 %v375
      %v540 = vpop.f32.mrf.mxu0
      %v541 = vadd.f32 %v220, %v540
      %v542 = vpop.f32.mrf.mxu0
      %v543 = vadd.f32 %v220, %v542
      %544 = vmatmul.bf16.gmra.mxu0 %v378
      %v545 = vpop.f32.mrf.mxu0
      %v546 = vadd.f32 %v220, %v545
      %v547 = vpop.f32.mrf.mxu0
      %v548 = vadd.f32 %v220, %v547
      %549 = vmatmul.bf16.gmra.mxu0 %v381
      %v550 = vpop.f32.mrf.mxu0
      %v551 = vadd.f32 %v220, %v550
      %v552 = vpop.f32.mrf.mxu0
      %v553 = vadd.f32 %v220, %v552
      %554 = vmatmul.bf16.gmra.mxu0 %v384
      %v555 = vpop.f32.mrf.mxu0
      %v556 = vadd.f32 %v220, %v555
      %v557 = vpop.f32.mrf.mxu0
      %v558 = vadd.f32 %v220, %v557
      %559 = vmatmul.bf16.gmra.mxu0 %v387
      %v560 = vpop.f32.mrf.mxu0
      %v561 = vadd.f32 %v220, %v560
      %v562 = vpop.f32.mrf.mxu0
      %v563 = vadd.f32 %v220, %v562
      %564 = vmatmul.bf16.gmra.mxu0 %v390
      %v565 = vpop.f32.mrf.mxu0
      %v566 = vadd.f32 %v220, %v565
      %v567 = vpop.f32.mrf.mxu0
      %v568 = vadd.f32 %v220, %v567
      %569 = vdwg.mxu0
      %570 = vst [vmem:[%s174] sm:$0xff] %v402
      %571 = vst [vmem:[%s174 + $0x8] sm:$0xff] %v491
      %572 = vst [vmem:[%s174 + $0x10] sm:$0xff] %v404
      %573 = vst [vmem:[%s174 + $0x18] sm:$0xff] %v493
      %574 = vst [vmem:[%s174 + $0x20] sm:$0xff] %v407
      %575 = vst [vmem:[%s174 + $0x28] sm:$0xff] %v496
      %576 = vst [vmem:[%s174 + $0x30] sm:$0xff] %v409
      %577 = vst [vmem:[%s174 + $0x38] sm:$0xff] %v498
      %578 = vst [vmem:[%s174 + $0x40] sm:$0xff] %v412
      %579 = vst [vmem:[%s174 + $0x48] sm:$0xff] %v501
      %580 = vst [vmem:[%s174 + $0x50] sm:$0xff] %v414
      %581 = vst [vmem:[%s174 + $0x58] sm:$0xff] %v503
      %582 = vst [vmem:[%s174 + $0x60] sm:$0xff] %v417
      %583 = vst [vmem:[%s174 + $0x68] sm:$0xff] %v506
      %584 = vst [vmem:[%s174 + $0x70] sm:$0xff] %v419
      %585 = vst [vmem:[%s174 + $0x78] sm:$0xff] %v508
      %586 = vst [vmem:[%s174 + $0x80] sm:$0xff] %v422
      %587 = vst [vmem:[%s174 + $0x88] sm:$0xff] %v511
      %588 = vst [vmem:[%s174 + $0x90] sm:$0xff] %v424
      %589 = vst [vmem:[%s174 + $0x98] sm:$0xff] %v513
      %590 = vst [vmem:[%s174 + $0xa0] sm:$0xff] %v427
      %591 = vst [vmem:[%s174 + $0xa8] sm:$0xff] %v516
      %592 = vst [vmem:[%s174 + $0xb0] sm:$0xff] %v429
      %593 = vst [vmem:[%s174 + $0xb8] sm:$0xff] %v518
      %594 = vst [vmem:[%s174 + $0xc0] sm:$0xff] %v432
      %595 = vst [vmem:[%s174 + $0xc8] sm:$0xff] %v521
      %596 = vst [vmem:[%s174 + $0xd0] sm:$0xff] %v434
      %597 = vst [vmem:[%s174 + $0xd8] sm:$0xff] %v523
      %598 = vst [vmem:[%s174 + $0xe0] sm:$0xff] %v437
      %599 = vst [vmem:[%s174 + $0xe8] sm:$0xff] %v526
      %600 = vst [vmem:[%s174 + $0xf0] sm:$0xff] %v439
      %601 = vst [vmem:[%s174 + $0xf8] sm:$0xff] %v528
      %602 = vst [vmem:[%s174 + $0x100] sm:$0xff] %v442
      %603 = vst [vmem:[%s174 + $0x108] sm:$0xff] %v531
      %604 = vst [vmem:[%s174 + $0x110] sm:$0xff] %v444
      %605 = vst [vmem:[%s174 + $0x118] sm:$0xff] %v533
      %606 = vst [vmem:[%s174 + $0x120] sm:$0xff] %v447
      %607 = vst [vmem:[%s174 + $0x128] sm:$0xff] %v536
      %608 = vst [vmem:[%s174 + $0x130] sm:$0xff] %v449
      %609 = vst [vmem:[%s174 + $0x138] sm:$0xff] %v538
      %610 = vst [vmem:[%s174 + $0x140] sm:$0xff] %v452
      %611 = vst [vmem:[%s174 + $0x148] sm:$0xff] %v541
      %612 = vst [vmem:[%s174 + $0x150] sm:$0xff] %v454
      %613 = vst [vmem:[%s174 + $0x158] sm:$0xff] %v543
      %614 = vst [vmem:[%s174 + $0x160] sm:$0xff] %v457
      %615 = vst [vmem:[%s174 + $0x168] sm:$0xff] %v546
      %616 = vst [vmem:[%s174 + $0x170] sm:$0xff] %v459
      %617 = vst [vmem:[%s174 + $0x178] sm:$0xff] %v548
      %618 = vst [vmem:[%s174 + $0x180] sm:$0xff] %v462
      %619 = vst [vmem:[%s174 + $0x188] sm:$0xff] %v551
      %620 = vst [vmem:[%s174 + $0x190] sm:$0xff] %v464
      %621 = vst [vmem:[%s174 + $0x198] sm:$0xff] %v553
      %622 = vst [vmem:[%s174 + $0x1a0] sm:$0xff] %v467
      %623 = vst [vmem:[%s174 + $0x1a8] sm:$0xff] %v556
      %624 = vst [vmem:[%s174 + $0x1b0] sm:$0xff] %v469
      %625 = vst [vmem:[%s174 + $0x1b8] sm:$0xff] %v558
      %626 = vst [vmem:[%s174 + $0x1c0] sm:$0xff] %v472
      %627 = vst [vmem:[%s174 + $0x1c8] sm:$0xff] %v561
      %628 = vst [vmem:[%s174 + $0x1d0] sm:$0xff] %v474
      %629 = vst [vmem:[%s174 + $0x1d8] sm:$0xff] %v563
      %630 = vst [vmem:[%s174 + $0x1e0] sm:$0xff] %v477
      %631 = vst [vmem:[%s174 + $0x1e8] sm:$0xff] %v566
      %632 = vst [vmem:[%s174 + $0x1f0] sm:$0xff] %v479
      %633 = vst [vmem:[%s174 + $0x1f8] sm:$0xff] %v568
      %s634 = smul.u32 32, %s14
      %p635 = scmp.lt.s32.totalorder %s634, 63
      %s636 = scalar_select %p635, %s634, 63
      %s637 = smul.addr %s636, 2
      %s638 = smul.addr %s637, 8
      %s639 = scalar_lea.vmem %s3, %s638
      // Predicated region
      $region33: #{bottleneck_forward.6} parent=31 // pred_check
        %p640 = pneg %p100
      $region34: #{bottleneck_forward.6} parent=31 // pred_check_branch
        %642 = sbr.rel (%p640) target = $region36
      $region35: #{bottleneck_forward.6} parent=31 // pred_region
        %s643 = smul.u32 32, %s14
      $region36: #{bottleneck_forward.6} parent=31 // pred_fallthru
        _
    $region32: #{bottleneck_forward.6} parent=5 // pred_fallthru
      _
    %p644 = scmp.le.s32.totalorder 2, %s9
    // Predicated region
    $region37: #{bottleneck_forward.6} parent=5 // pred_check
      %p645 = pneg %p644
    $region38: #{bottleneck_forward.6} parent=5 // pred_check_branch
      %647 = sbr.rel (%p645) target = $region40
    $region39: #{bottleneck_forward.6} parent=5 // pred_region
      %s648 = ssub.s32 %s9, 2
      // Predicated region
      $region41: #{bottleneck_forward.6} parent=39 // pred_check
        %p649 = pneg %p106
      $region42: #{bottleneck_forward.6} parent=39 // pred_check_branch
        %651 = sbr.rel (%p649) target = $region44
      $region43: #{bottleneck_forward.6} parent=39 // pred_region
        %s652 = smul.u32 32, %s15
        %p653 = scmp.lt.s32.totalorder %s652, 63
        %s654 = scalar_select %p653, %s652, 63
        %s655 = smul.addr %s654, 2
        %s656 = smul.addr %s655, 8
        %s657 = scalar_lea.vmem %s3, %s656
      $region44: #{bottleneck_forward.6} parent=39 // pred_fallthru
        _
    $region40: #{bottleneck_forward.6} parent=5 // pred_fallthru
      _
  $region6: #{bottleneck_forward.6} parent=0 // loop_footer
    %s13 = sadd.s32 1, %s9
  $region7: #{bottleneck_forward.6} parent=0 // loop_footer_branch
    %8 = sbr.rel target = $region3
  $region8: #{bottleneck_forward.6} parent=0 // loop_exit
    _

// kernel: bottleneck_forward.7
$region0: #{bottleneck_forward.7}
  #allocation0 [shape = 'u32[]', space=smem, size = 0x4, offset = 0x4, fixed_abs, tag = 'smem constant byte address 0x4 - core index']
  #allocation1 [shape = 'u32[72,128]{1,0:T(1,128)}', space=vmem, size = 0x9000, scoped, tag = 'internal scratch']
  %s0 = inlined_call_operand.vmem [shape: bf16[512,64], index: 0, kind: input, shape index: {}]
  %s1 = inlined_call_operand.vmem [shape: bf16[64,256], index: 1, kind: input, shape index: {}]
  %s2 = inlined_call_operand.vmem [shape: f32[1,256], index: 2, kind: input, shape index: {}]
  %s3 = inlined_call_operand.vmem [shape: f32[512,256], index: 3, kind: input, shape index: {}]
  %s4 = inlined_call_operand.hbm [shape: f32[512,256], index: 4, kind: output, shape index: {}]
  %s5 = sld [smem:[#allocation0]]
  $region49: #{bottleneck_forward.7} parent=0
    _
  %s7 = ssub.s32 1, %s5
  %s8 = scalar_select 0, %s7, %s5
  $region1: #{bottleneck_forward.7} parent=0
    #allocation2 [shape = 'u8[524288]{0}', space=vmem, size = 0x80000, scoped, tag = 'output window, operand 0']
    #allocation3 [shape = 's32[2]{0}', space=sflag, size = 0x8, scoped, tag = 'scoped memory for bottleneck_forward.7']
    %9 = vsyncpa [#allocation3], 0
    %s10 = scalar_lea.sflag [#allocation3], 1
    %11 = vsyncpa %s10, 0
    loop: start=0, step=1, limit=4
    $region2: #{bottleneck_forward.7} parent=1 // loop_pre_header
      _
    $region3: #{bottleneck_forward.7} parent=1 // loop_header
      %s13 = sphi 0, %s17
      %p14 = scmp.ge.s32.totalorder %s13, 4
      %s23 = sphi 0, %s25
      %s26 = sphi 0, %s23
      %s27 = sphi 0, %s26
      %s43 = sphi 0, %s27
      %s47 = sphi 0, %s47
      %s49 = sphi 0, %s47
      %s50 = sphi 0, %s49
      %s64 = sphi 0, %s50
      %s68 = sphi 0, %s68
      %s70 = sphi 0, %s68
      %s71 = sphi 0, %s70
      %s85 = sphi 0, %s71
      %s91 = sphi 0, %s93
      %s94 = sphi 0, %s91
      %s95 = sphi 0, %s94
      %s111 = sphi 0, %s95
      %s117 = sphi 0, %s119
      %s120 = sphi 0, %s117
      %s121 = sphi 0, %s120
      %s137 = sphi 0, %s121
    $region4: #{bottleneck_forward.7} parent=1 // loop_header_branch
      %16 = sbr.rel (%p14) target = $region8
    $region5: #{bottleneck_forward.7} parent=1 // loop_body
      %s18 = ssub.s32 %s13, 1
      %s19 = ssub.s32 %s13, 2
      %s20 = sadd.s32 %s13, 1
      %s21 = ssub.s32 %s13, %s20
      %p22 = scmp.eq.s32.totalorder %s21, 0
      %s24 = sadd.s32 %s23, 1
      %s25 = scalar_select %p22, %s23, %s24
      %p28 = pneg %p22
      %p29 = scmp.eq.s32.totalorder %s13, 1
      %p30 = por %p28, %p29
      %p31 = scmp.ne.s32.totalorder %s23, %s26
      %p32 = scmp.eq.s32.totalorder %s13, 0
      %p33 = por %p31, %p32
      %p34 = scmp.ne.s32.totalorder %s23, %s26
      %p35 = scmp.eq.s32.totalorder %s18, 1
      %p36 = por %p34, %p35
      %p37 = scmp.ne.s32.totalorder %s26, %s27
      %p38 = scmp.eq.s32.totalorder %s18, 0
      %p39 = por %p37, %p38
      %p40 = scmp.ne.s32.totalorder %s26, %s27
      %p41 = scmp.eq.s32.totalorder %s19, 1
      %p42 = por %p40, %p41
      %p44 = scmp.ne.s32.totalorder %s27, %s43
      %p45 = scmp.eq.s32.totalorder %s19, 0
      %p46 = por %p44, %p45
      %s48 = sadd.s32 %s47, 1
      %p51 = scmp.eq.s32.totalorder %s13, 1
      %p52 = scmp.ne.s32.totalorder %s47, %s49
      %p53 = scmp.eq.s32.totalorder %s13, 0
      %p54 = por %p52, %p53
      %p55 = scmp.ne.s32.totalorder %s47, %s49
      %p56 = scmp.eq.s32.totalorder %s18, 1
      %p57 = por %p55, %p56
      %p58 = scmp.ne.s32.totalorder %s49, %s50
      %p59 = scmp.eq.s32.totalorder %s18, 0
      %p60 = por %p58, %p59
      %p61 = scmp.ne.s32.totalorder %s49, %s50
      %p62 = scmp.eq.s32.totalorder %s19, 1
      %p63 = por %p61, %p62
      %p65 = scmp.ne.s32.totalorder %s50, %s64
      %p66 = scmp.eq.s32.totalorder %s19, 0
      %p67 = por %p65, %p66
      %s69 = sadd.s32 %s68, 1
      %p72 = scmp.eq.s32.totalorder %s13, 1
      %p73 = scmp.ne.s32.totalorder %s68, %s70
      %p74 = scmp.eq.s32.totalorder %s13, 0
      %p75 = por %p73, %p74
      %p76 = scmp.ne.s32.totalorder %s68, %s70
      %p77 = scmp.eq.s32.totalorder %s18, 1
      %p78 = por %p76, %p77
      %p79 = scmp.ne.s32.totalorder %s70, %s71
      %p80 = scmp.eq.s32.totalorder %s18, 0
      %p81 = por %p79, %p80
      %p82 = scmp.ne.s32.totalorder %s70, %s71
      %p83 = scmp.eq.s32.totalorder %s19, 1
      %p84 = por %p82, %p83
      %p86 = scmp.ne.s32.totalorder %s71, %s85
      %p87 = scmp.eq.s32.totalorder %s19, 0
      %p88 = por %p86, %p87
      %s89 = ssub.s32 %s13, %s20
      %p90 = scmp.eq.s32.totalorder %s89, 0
      %s92 = sadd.s32 %s91, 1
      %s93 = scalar_select %p90, %s91, %s92
      %p96 = pneg %p90
      %p97 = scmp.eq.s32.totalorder %s13, 1
      %p98 = por %p96, %p97
      %p99 = scmp.ne.s32.totalorder %s91, %s94
      %p100 = scmp.eq.s32.totalorder %s13, 0
      %p101 = por %p99, %p100
      %p102 = scmp.ne.s32.totalorder %s91, %s94
      %p103 = scmp.eq.s32.totalorder %s18, 1
      %p104 = por %p102, %p103
      %p105 = scmp.ne.s32.totalorder %s94, %s95
      %p106 = scmp.eq.s32.totalorder %s18, 0
      %p107 = por %p105, %p106
      %p108 = scmp.ne.s32.totalorder %s94, %s95
      %p109 = scmp.eq.s32.totalorder %s19, 1
      %p110 = por %p108, %p109
      %p112 = scmp.ne.s32.totalorder %s95, %s111
      %p113 = scmp.eq.s32.totalorder %s19, 0
      %p114 = por %p112, %p113
      %s115 = ssub.s32 %s13, %s20
      %p116 = scmp.eq.s32.totalorder %s115, 0
      %s118 = sadd.s32 %s117, 1
      %s119 = scalar_select %p116, %s117, %s118
      %p122 = pneg %p116
      %p123 = scmp.eq.s32.totalorder %s13, 1
      %p124 = por %p122, %p123
      %p125 = scmp.ne.s32.totalorder %s117, %s120
      %p126 = scmp.eq.s32.totalorder %s13, 0
      %p127 = por %p125, %p126
      %p128 = scmp.ne.s32.totalorder %s117, %s120
      %p129 = scmp.eq.s32.totalorder %s18, 1
      %p130 = por %p128, %p129
      %p131 = scmp.ne.s32.totalorder %s120, %s121
      %p132 = scmp.eq.s32.totalorder %s18, 0
      %p133 = por %p131, %p132
      %p134 = scmp.ne.s32.totalorder %s120, %s121
      %p135 = scmp.eq.s32.totalorder %s19, 1
      %p136 = por %p134, %p135
      %p138 = scmp.ne.s32.totalorder %s121, %s137
      %p139 = scmp.eq.s32.totalorder %s19, 0
      %p140 = por %p138, %p139
      %p141 = scmp.le.s32.totalorder 1, %s13
      %p142 = scmp.lt.s32.totalorder %s13, 3
      %p143 = pnand %p141, %p142
      %p144 = pneg %p143
      // Predicated region
      $region9: #{bottleneck_forward.7} parent=5 // pred_check
        _
      $region10: #{bottleneck_forward.7} parent=5 // pred_check_branch
        %146 = sbr.rel (%p143) target = $region12
      $region11: #{bottleneck_forward.7} parent=5 // pred_region
        %s147 = ssub.s32 %s13, 1
        // Predicated region
        $region13: #{bottleneck_forward.7} parent=11 // pred_check
          %p148 = pneg %p60
        $region14: #{bottleneck_forward.7} parent=11 // pred_check_branch
          %150 = sbr.rel (%p148) target = $region16
        $region15: #{bottleneck_forward.7} parent=11 // pred_region
          _
        $region16: #{bottleneck_forward.7} parent=11 // pred_fallthru
          _
        // Predicated region
        $region17: #{bottleneck_forward.7} parent=11 // pred_check
          %p151 = pneg %p81
        $region18: #{bottleneck_forward.7} parent=11 // pred_check_branch
          %153 = sbr.rel (%p151) target = $region20
        $region19: #{bottleneck_forward.7} parent=11 // pred_region
          _
        $region20: #{bottleneck_forward.7} parent=11 // pred_fallthru
          _
      $region12: #{bottleneck_forward.7} parent=5 // pred_fallthru
        _
      %p154 = scmp.lt.s32.totalorder %s13, 2
      // Predicated region
      $region21: #{bottleneck_forward.7} parent=5 // pred_check
        %p155 = pneg %p154
      $region22: #{bottleneck_forward.7} parent=5 // pred_check_branch
        %157 = sbr.rel (%p155) target = $region24
      $region23: #{bottleneck_forward.7} parent=5 // pred_region
        // Predicated region
        $region25: #{bottleneck_forward.7} parent=23 // pred_check
          %p158 = pneg %p33
        $region26: #{bottleneck_forward.7} parent=23 // pred_check_branch
          %160 = sbr.rel (%p158) target = $region28
        $region27: #{bottleneck_forward.7} parent=23 // pred_region
          %s161 = smul.u32 32, %s13
          %p162 = scmp.lt.s32.totalorder %s161, 63
          %s163 = scalar_select %p162, %s161, 63
          %s164 = smul.addr %s163, 4
          %s165 = scalar_lea.vmem %s0, %s164
          %s166 = smul.u32 32, %s13
        $region28: #{bottleneck_forward.7} parent=23 // pred_fallthru
          _
        // Predicated region
        $region29: #{bottleneck_forward.7} parent=23 // pred_check
          %p167 = pneg %p101
        $region30: #{bottleneck_forward.7} parent=23 // pred_check_branch
          %169 = sbr.rel (%p167) target = $region32
        $region31: #{bottleneck_forward.7} parent=23 // pred_region
          %s170 = smul.u32 32, %s13
          %p171 = scmp.lt.s32.totalorder %s170, 63
          %s172 = scalar_select %p171, %s170, 63
          %s173 = smul.addr %s172, 2
          %s174 = smul.addr %s173, 8
          %s175 = scalar_lea.vmem %s3, %s174
          %s176 = smul.u32 32, %s13
        $region32: #{bottleneck_forward.7} parent=23 // pred_fallthru
          _
      $region24: #{bottleneck_forward.7} parent=5 // pred_fallthru
        _
      %p177 = scmp.le.s32.totalorder 1, %s13
      %p178 = scmp.lt.s32.totalorder %s13, 3
      %p179 = pnand %p177, %p178
      %p180 = pneg %p179
      // Predicated region
      $region33: #{bottleneck_forward.7} parent=5 // pred_check
        _
      $region34: #{bottleneck_forward.7} parent=5 // pred_check_branch
        %182 = sbr.rel (%p179) target = $region36
      $region35: #{bottleneck_forward.7} parent=5 // pred_region
        %s183 = ssub.s32 %s13, 1
        %s184 = smul.u32 32, %s18
        %p185 = scmp.lt.s32.totalorder %s184, 63
        %s186 = scalar_select %p185, %s184, 63
        %s187 = smul.addr %s186, 4
        %s188 = scalar_lea.vmem %s0, %s187
        %p189 = pneg %p39
        %p190 = pneg %p36
        %p191 = pneg %p60
        %p192 = pneg %p57
        %p193 = pneg %p81
        %p194 = pneg %p78
        %s195 = smul.u32 32, %s18
        %p196 = scmp.lt.s32.totalorder %s195, 63
        %s197 = scalar_select %p196, %s195, 63
        %s198 = smul.addr %s197, 2
        %s199 = smul.addr %s198, 8
        %s200 = scalar_lea.vmem %s3, %s199
        %p201 = pneg %p107
        %p202 = pneg %p104
        %p203 = pneg %p133
        %p204 = pneg %p130
        %s205 = sand.u32 %s120, 1
        %s206 = scalar_lea.sflag [#allocation3], %s205
        %s207 = sand.u32 %s120, 1
        %s208 = smul.addr %s207, 512
        %s209 = scalar_lea.vmem [#allocation2], %s208
        %s210 = smul.u32 32, %s18
        %p211 = scmp.lt.s32.totalorder %s210, 63
        %s212 = scalar_select %p211, %s210, 63
        %s213 = smul.addr %s212, 4
        %s214 = scalar_lea.vmem %s0, %s213
        %s215 = smul.u32 32, %s18
        %s216 = smul.u32 32, %s18
        %p217 = scmp.lt.s32.totalorder %s216, 63
        %s218 = scalar_select %p217, %s216, 63
        %s219 = smul.addr %s218, 2
        %s220 = smul.addr %s219, 8
        %s221 = scalar_lea.vmem %s3, %s220
        %s222 = smul.u32 32, %s18
        %s223 = smul.u32 32, %s18
        %v225 = vld [vmem:[%s214] sm:$0xf]
        %v226 = vld [vmem:[%s214 + $0x4] sm:$0xf]
        %v227 = vld [vmem:[%s214 + $0x8] sm:$0xf]
        %v228 = vld [vmem:[%s214 + $0xc] sm:$0xf]
        %v229 = vld [vmem:[%s214 + $0x10] sm:$0xf]
        %v230 = vld [vmem:[%s214 + $0x14] sm:$0xf]
        %v231 = vld [vmem:[%s214 + $0x18] sm:$0xf]
        %v232 = vld [vmem:[%s214 + $0x1c] sm:$0xf]
        %v233 = vld [vmem:[%s214 + $0x20] sm:$0xf]
        %v234 = vld [vmem:[%s214 + $0x24] sm:$0xf]
        %v235 = vld [vmem:[%s214 + $0x28] sm:$0xf]
        %v236 = vld [vmem:[%s214 + $0x2c] sm:$0xf]
        %v237 = vld [vmem:[%s214 + $0x30] sm:$0xf]
        %v238 = vld [vmem:[%s214 + $0x34] sm:$0xf]
        %v239 = vld [vmem:[%s214 + $0x38] sm:$0xf]
        %v240 = vld [vmem:[%s214 + $0x3c] sm:$0xf]
        %v241 = vld [vmem:[%s214 + $0x40] sm:$0xf]
        %v242 = vld [vmem:[%s214 + $0x44] sm:$0xf]
        %v243 = vld [vmem:[%s214 + $0x48] sm:$0xf]
        %v244 = vld [vmem:[%s214 + $0x4c] sm:$0xf]
        %v245 = vld [vmem:[%s214 + $0x50] sm:$0xf]
        %v246 = vld [vmem:[%s214 + $0x54] sm:$0xf]
        %v247 = vld [vmem:[%s214 + $0x58] sm:$0xf]
        %v248 = vld [vmem:[%s214 + $0x5c] sm:$0xf]
        %v249 = vld [vmem:[%s214 + $0x60] sm:$0xf]
        %v250 = vld [vmem:[%s214 + $0x64] sm:$0xf]
        %v251 = vld [vmem:[%s214 + $0x68] sm:$0xf]
        %v252 = vld [vmem:[%s214 + $0x6c] sm:$0xf]
        %v253 = vld [vmem:[%s214 + $0x70] sm:$0xf]
        %v254 = vld [vmem:[%s214 + $0x74] sm:$0xf]
        %v255 = vld [vmem:[%s214 + $0x78] sm:$0xf]
        %v256 = vld [vmem:[%s214 + $0x7c] sm:$0xf]
        %v257 = vld [vmem:[%s1] sm:$0xff]
        %v258 = vld [vmem:[%s1 + $0x8] sm:$0xff]
        %v259 = vld [vmem:[%s1 + $0x10] sm:$0xff]
        %v260 = vld [vmem:[%s1 + $0x18] sm:$0xff]
        %v261 = vld [vmem:[%s1 + $0x20] sm:$0xff]
        %v262 = vld [vmem:[%s1 + $0x28] sm:$0xff]
        %v263 = vld [vmem:[%s1 + $0x30] sm:$0xff]
        %v264 = vld [vmem:[%s1 + $0x38] sm:$0xff]
        %v265 = vld [vmem:[%s2] sm:$0x3]
        %v267 = vperm.slane %v265, 0
        %v268 = vperm.slane %v265, 1
        %v303 = vunpack.c.l.b16 %v225
        %v304 = vunpack.c.l.b16 %v226
        %v305 = vunpack.c.l.b16 %v227
        %v306 = vunpack.c.l.b16 %v228
        %v307 = vunpack.c.l.b16 %v229
        %v308 = vunpack.c.l.b16 %v230
        %v309 = vunpack.c.l.b16 %v231
        %v310 = vunpack.c.l.b16 %v232
        %v311 = vunpack.c.l.b16 %v233
        %v312 = vunpack.c.l.b16 %v234
        %v313 = vunpack.c.l.b16 %v235
        %v314 = vunpack.c.l.b16 %v236
        %v315 = vunpack.c.l.b16 %v237
        %v316 = vunpack.c.l.b16 %v238
        %v317 = vunpack.c.l.b16 %v239
        %v318 = vunpack.c.l.b16 %v240
        %v319 = vunpack.c.l.b16 %v241
        %v320 = vunpack.c.l.b16 %v242
        %v321 = vunpack.c.l.b16 %v243
        %v322 = vunpack.c.l.b16 %v244
        %v323 = vunpack.c.l.b16 %v245
        %v324 = vunpack.c.l.b16 %v246
        %v325 = vunpack.c.l.b16 %v247
        %v326 = vunpack.c.l.b16 %v248
        %v327 = vunpack.c.l.b16 %v249
        %v328 = vunpack.c.l.b16 %v250
        %v329 = vunpack.c.l.b16 %v251
        %v330 = vunpack.c.l.b16 %v252
        %v331 = vunpack.c.l.b16 %v253
        %v332 = vunpack.c.l.b16 %v254
        %v333 = vunpack.c.l.b16 %v255
        %v334 = vunpack.c.l.b16 %v256
        %v335 = vpack.c.b16 %v304, %v303
        %v336 = vpack.c.b16 %v306, %v305
        %v337 = vpack.c.b16 %v308, %v307
        %v338 = vpack.c.b16 %v310, %v309
        %v339 = vpack.c.b16 %v312, %v311
        %v340 = vpack.c.b16 %v314, %v313
        %v341 = vpack.c.b16 %v316, %v315
        %v342 = vpack.c.b16 %v318, %v317
        %v343 = vpack.c.b16 %v320, %v319
        %v344 = vpack.c.b16 %v322, %v321
        %v345 = vpack.c.b16 %v324, %v323
        %v346 = vpack.c.b16 %v326, %v325
        %v347 = vpack.c.b16 %v328, %v327
        %v348 = vpack.c.b16 %v330, %v329
        %v349 = vpack.c.b16 %v332, %v331
        %v350 = vpack.c.b16 %v334, %v333
        %v359 = vunpack.c.l.b16 %v257
        %v360 = vunpack.c.h.b16 %v257
        %v361 = vunpack.c.l.b16 %v258
        %v362 = vunpack.c.h.b16 %v258
        %v363 = vunpack.c.l.b16 %v259
        %v364 = vunpack.c.h.b16 %v259
        %v365 = vunpack.c.l.b16 %v260
        %v366 = vunpack.c.h.b16 %v260
        %v367 = vunpack.c.l.b16 %v261
        %v368 = vunpack.c.h.b16 %v261
        %v369 = vunpack.c.l.b16 %v262
        %v370 = vunpack.c.h.b16 %v262
        %v371 = vunpack.c.l.b16 %v263
        %v372 = vunpack.c.h.b16 %v263
        %v373 = vunpack.c.l.b16 %v264
        %v374 = vunpack.c.h.b16 %v264
        %v375 = vpack.c.b16 %v361, %v359
        %v376 = vpack.c.b16 %v362, %v360
        %v377 = vpack.c.b16 %v365, %v363
        %v378 = vpack.c.b16 %v366, %v364
        %v379 = vpack.c.b16 %v369, %v367
        %v380 = vpack.c.b16 %v370, %v368
        %v381 = vpack.c.b16 %v373, %v371
        %v382 = vpack.c.b16 %v374, %v372
        %vm391 = vcmask 523264
        %v393 = vsel %vm391, %v335, 0
        %v396 = vsel %vm391, %v336, 0
        %v399 = vsel %vm391, %v337, 0
        %v402 = vsel %vm391, %v338, 0
        %v405 = vsel %vm391, %v339, 0
        %v408 = vsel %vm391, %v340, 0
        %v411 = vsel %vm391, %v341, 0
        %v414 = vsel %vm391, %v342, 0
        %v417 = vsel %vm391, %v343, 0
        %v420 = vsel %vm391, %v344, 0
        %v423 = vsel %vm391, %v345, 0
        %v426 = vsel %vm391, %v346, 0
        %v429 = vsel %vm391, %v347, 0
        %v432 = vsel %vm391, %v348, 0
        %v435 = vsel %vm391, %v349, 0
        %v438 = vsel %vm391, %v350, 0
        %440 = vmatpush.bf16.msra.mxu0 0
        %441 = vmatpush.bf16.msra.mxu0 0
        %442 = vmatpush.bf16.msra.mxu0 0
        %443 = vmatpush.bf16.msra.mxu0 0
        %444 = vmatpush.bf16.msra.mxu0 %v381
        %445 = vmatpush.bf16.msra.mxu0 %v379
        %446 = vmatpush.bf16.msra.mxu0 %v377
        %447 = vmatpush.bf16.msra.mxu0 %v375
        %448 = vmatmul.bf16.gmra.mxu0 %v393
        %v449 = vpop.f32.mrf.mxu0
        %v450 = vadd.f32 %v267, %v449
        %v451 = vpop.f32.mrf.mxu0
        %v452 = vadd.f32 %v267, %v451
        %453 = vmatmul.bf16.gmra.mxu0 %v396
        %v454 = vpop.f32.mrf.mxu0
        %v455 = vadd.f32 %v267, %v454
        %v456 = vpop.f32.mrf.mxu0
        %v457 = vadd.f32 %v267, %v456
        %458 = vmatmul.bf16.gmra.mxu0 %v399
        %v459 = vpop.f32.mrf.mxu0
        %v460 = vadd.f32 %v267, %v459
        %v461 = vpop.f32.mrf.mxu0
        %v462 = vadd.f32 %v267, %v461
        %463 = vmatmul.bf16.gmra.mxu0 %v402
        %v464 = vpop.f32.mrf.mxu0
        %v465 = vadd.f32 %v267, %v464
        %v466 = vpop.f32.mrf.mxu0
        %v467 = vadd.f32 %v267, %v466
        %468 = vmatmul.bf16.gmra.mxu0 %v405
        %v469 = vpop.f32.mrf.mxu0
        %v470 = vadd.f32 %v267, %v469
        %v471 = vpop.f32.mrf.mxu0
        %v472 = vadd.f32 %v267, %v471
        %473 = vmatmul.bf16.gmra.mxu0 %v408
        %v474 = vpop.f32.mrf.mxu0
        %v475 = vadd.f32 %v267, %v474
        %v476 = vpop.f32.mrf.mxu0
        %v477 = vadd.f32 %v267, %v476
        %478 = vmatmul.bf16.gmra.mxu0 %v411
        %v479 = vpop.f32.mrf.mxu0
        %v480 = vadd.f32 %v267, %v479
        %v481 = vpop.f32.mrf.mxu0
        %v482 = vadd.f32 %v267, %v481
        %483 = vmatmul.bf16.gmra.mxu0 %v414
        %v484 = vpop.f32.mrf.mxu0
        %v485 = vadd.f32 %v267, %v484
        %v486 = vpop.f32.mrf.mxu0
        %v487 = vadd.f32 %v267, %v486
        %488 = vmatmul.bf16.gmra.mxu0 %v417
        %v489 = vpop.f32.mrf.mxu0
        %v490 = vadd.f32 %v267, %v489
        %v491 = vpop.f32.mrf.mxu0
        %v492 = vadd.f32 %v267, %v491
        %493 = vmatmul.bf16.gmra.mxu0 %v420
        %v494 = vpop.f32.mrf.mxu0
        %v495 = vadd.f32 %v267, %v494
        %v496 = vpop.f32.mrf.mxu0
        %v497 = vadd.f32 %v267, %v496
        %498 = vmatmul.bf16.gmra.mxu0 %v423
        %v499 = vpop.f32.mrf.mxu0
        %v500 = vadd.f32 %v267, %v499
        %v501 = vpop.f32.mrf.mxu0
        %v502 = vadd.f32 %v267, %v501
        %503 = vmatmul.bf16.gmra.mxu0 %v426
        %v504 = vpop.f32.mrf.mxu0
        %v505 = vadd.f32 %v267, %v504
        %v506 = vpop.f32.mrf.mxu0
        %v507 = vadd.f32 %v267, %v506
        %508 = vmatmul.bf16.gmra.mxu0 %v429
        %v509 = vpop.f32.mrf.mxu0
        %v510 = vadd.f32 %v267, %v509
        %v511 = vpop.f32.mrf.mxu0
        %v512 = vadd.f32 %v267, %v511
        %513 = vmatmul.bf16.gmra.mxu0 %v432
        %v514 = vpop.f32.mrf.mxu0
        %v515 = vadd.f32 %v267, %v514
        %v516 = vpop.f32.mrf.mxu0
        %v517 = vadd.f32 %v267, %v516
        %518 = vmatmul.bf16.gmra.mxu0 %v435
        %v519 = vpop.f32.mrf.mxu0
        %v520 = vadd.f32 %v267, %v519
        %v521 = vpop.f32.mrf.mxu0
        %v522 = vadd.f32 %v267, %v521
        %523 = vmatmul.bf16.gmra.mxu0 %v438
        %v524 = vpop.f32.mrf.mxu0
        %v525 = vadd.f32 %v267, %v524
        %v526 = vpop.f32.mrf.mxu0
        %v527 = vadd.f32 %v267, %v526
        %528 = vdwg.mxu0
        %529 = vmatpush.bf16.msra.mxu0 0
        %530 = vmatpush.bf16.msra.mxu0 0
        %531 = vmatpush.bf16.msra.mxu0 0
        %532 = vmatpush.bf16.msra.mxu0 0
        %533 = vmatpush.bf16.msra.mxu0 %v382
        %534 = vmatpush.bf16.msra.mxu0 %v380
        %535 = vmatpush.bf16.msra.mxu0 %v378
        %536 = vmatpush.bf16.msra.mxu0 %v376
        %537 = vmatmul.bf16.gmra.mxu0 %v393
        %v538 = vpop.f32.mrf.mxu0
        %v539 = vadd.f32 %v268, %v538
        %v540 = vpop.f32.mrf.mxu0
        %v541 = vadd.f32 %v268, %v540
        %542 = vmatmul.bf16.gmra.mxu0 %v396
        %v543 = vpop.f32.mrf.mxu0
        %v544 = vadd.f32 %v268, %v543
        %v545 = vpop.f32.mrf.mxu0
        %v546 = vadd.f32 %v268, %v545
        %547 = vmatmul.bf16.gmra.mxu0 %v399
        %v548 = vpop.f32.mrf.mxu0
        %v549 = vadd.f32 %v268, %v548
        %v550 = vpop.f32.mrf.mxu0
        %v551 = vadd.f32 %v268, %v550
        %552 = vmatmul.bf16.gmra.mxu0 %v402
        %v553 = vpop.f32.mrf.mxu0
        %v554 = vadd.f32 %v268, %v553
        %v555 = vpop.f32.mrf.mxu0
        %v556 = vadd.f32 %v268, %v555
        %557 = vmatmul.bf16.gmra.mxu0 %v405
        %v558 = vpop.f32.mrf.mxu0
        %v559 = vadd.f32 %v268, %v558
        %v560 = vpop.f32.mrf.mxu0
        %v561 = vadd.f32 %v268, %v560
        %562 = vmatmul.bf16.gmra.mxu0 %v408
        %v563 = vpop.f32.mrf.mxu0
        %v564 = vadd.f32 %v268, %v563
        %v565 = vpop.f32.mrf.mxu0
        %v566 = vadd.f32 %v268, %v565
        %567 = vmatmul.bf16.gmra.mxu0 %v411
        %v568 = vpop.f32.mrf.mxu0
        %v569 = vadd.f32 %v268, %v568
        %v570 = vpop.f32.mrf.mxu0
        %v571 = vadd.f32 %v268, %v570
        %572 = vmatmul.bf16.gmra.mxu0 %v414
        %v573 = vpop.f32.mrf.mxu0
        %v574 = vadd.f32 %v268, %v573
        %v575 = vpop.f32.mrf.mxu0
        %v576 = vadd.f32 %v268, %v575
        %577 = vmatmul.bf16.gmra.mxu0 %v417
        %v578 = vpop.f32.mrf.mxu0
        %v579 = vadd.f32 %v268, %v578
        %v580 = vpop.f32.mrf.mxu0
        %v581 = vadd.f32 %v268, %v580
        %582 = vmatmul.bf16.gmra.mxu0 %v420
        %v583 = vpop.f32.mrf.mxu0
        %v584 = vadd.f32 %v268, %v583
        %v585 = vpop.f32.mrf.mxu0
        %v586 = vadd.f32 %v268, %v585
        %587 = vmatmul.bf16.gmra.mxu0 %v423
        %v588 = vpop.f32.mrf.mxu0
        %v589 = vadd.f32 %v268, %v588
        %v590 = vpop.f32.mrf.mxu0
        %v591 = vadd.f32 %v268, %v590
        %592 = vmatmul.bf16.gmra.mxu0 %v426
        %v593 = vpop.f32.mrf.mxu0
        %v594 = vadd.f32 %v268, %v593
        %v595 = vpop.f32.mrf.mxu0
        %v596 = vadd.f32 %v268, %v595
        %597 = vmatmul.bf16.gmra.mxu0 %v429
        %v598 = vpop.f32.mrf.mxu0
        %v599 = vadd.f32 %v268, %v598
        %v600 = vpop.f32.mrf.mxu0
        %v601 = vadd.f32 %v268, %v600
        %602 = vmatmul.bf16.gmra.mxu0 %v432
        %v603 = vpop.f32.mrf.mxu0
        %v604 = vadd.f32 %v268, %v603
        %v605 = vpop.f32.mrf.mxu0
        %v606 = vadd.f32 %v268, %v605
        %607 = vmatmul.bf16.gmra.mxu0 %v435
        %v608 = vpop.f32.mrf.mxu0
        %v609 = vadd.f32 %v268, %v608
        %v610 = vpop.f32.mrf.mxu0
        %v611 = vadd.f32 %v268, %v610
        %612 = vmatmul.bf16.gmra.mxu0 %v438
        %v613 = vpop.f32.mrf.mxu0
        %v614 = vadd.f32 %v268, %v613
        %v615 = vpop.f32.mrf.mxu0
        %v616 = vadd.f32 %v268, %v615
        %617 = vdwg.mxu0
        %v618 = vld [vmem:[%s221] sm:$0xff]
        %v619 = vld [vmem:[%s221 + $0x8] sm:$0xff]
        %v620 = vld [vmem:[%s221 + $0x10] sm:$0xff]
        %v621 = vld [vmem:[%s221 + $0x18] sm:$0xff]
        %v622 = vld [vmem:[%s221 + $0x20] sm:$0xff]
        %v623 = vld [vmem:[%s221 + $0x28] sm:$0xff]
        %v624 = vld [vmem:[%s221 + $0x30] sm:$0xff]
        %v625 = vld [vmem:[%s221 + $0x38] sm:$0xff]
        %v626 = vld [vmem:[%s221 + $0x40] sm:$0xff]
        %v627 = vld [vmem:[%s221 + $0x48] sm:$0xff]
        %v628 = vld [vmem:[%s221 + $0x50] sm:$0xff]
        %v629 = vld [vmem:[%s221 + $0x58] sm:$0xff]
        %v630 = vld [vmem:[%s221 + $0x60] sm:$0xff]
        %v631 = vld [vmem:[%s221 + $0x68] sm:$0xff]
        %v632 = vld [vmem:[%s221 + $0x70] sm:$0xff]
        %v633 = vld [vmem:[%s221 + $0x78] sm:$0xff]
        %v634 = vld [vmem:[%s221 + $0x80] sm:$0xff]
        %v635 = vld [vmem:[%s221 + $0x88] sm:$0xff]
        %v636 = vld [vmem:[%s221 + $0x90] sm:$0xff]
        %v637 = vld [vmem:[%s221 + $0x98] sm:$0xff]
        %v638 = vld [vmem:[%s221 + $0xa0] sm:$0xff]
        %v639 = vld [vmem:[%s221 + $0xa8] sm:$0xff]
        %v640 = vld [vmem:[%s221 + $0xb0] sm:$0xff]
        %v641 = vld [vmem:[%s221 + $0xb8] sm:$0xff]
        %v642 = vld [vmem:[%s221 + $0xc0] sm:$0xff]
        %v643 = vld [vmem:[%s221 + $0xc8] sm:$0xff]
        %v644 = vld [vmem:[%s221 + $0xd0] sm:$0xff]
        %v645 = vld [vmem:[%s221 + $0xd8] sm:$0xff]
        %v646 = vld [vmem:[%s221 + $0xe0] sm:$0xff]
        %v647 = vld [vmem:[%s221 + $0xe8] sm:$0xff]
        %v648 = vld [vmem:[%s221 + $0xf0] sm:$0xff]
        %v649 = vld [vmem:[%s221 + $0xf8] sm:$0xff]
        %v650 = vld [vmem:[%s221 + $0x100] sm:$0xff]
        %v651 = vld [vmem:[%s221 + $0x108] sm:$0xff]
        %v652 = vld [vmem:[%s221 + $0x110] sm:$0xff]
        %v653 = vld [vmem:[%s221 + $0x118] sm:$0xff]
        %v654 = vld [vmem:[%s221 + $0x120] sm:$0xff]
        %v655 = vld [vmem:[%s221 + $0x128] sm:$0xff]
        %v656 = vld [vmem:[%s221 + $0x130] sm:$0xff]
        %v657 = vld [vmem:[%s221 + $0x138] sm:$0xff]
        %v658 = vld [vmem:[%s221 + $0x140] sm:$0xff]
        %v659 = vld [vmem:[%s221 + $0x148] sm:$0xff]
        %v660 = vld [vmem:[%s221 + $0x150] sm:$0xff]
        %v661 = vld [vmem:[%s221 + $0x158] sm:$0xff]
        %v662 = vld [vmem:[%s221 + $0x160] sm:$0xff]
        %v663 = vld [vmem:[%s221 + $0x168] sm:$0xff]
        %v664 = vld [vmem:[%s221 + $0x170] sm:$0xff]
        %v665 = vld [vmem:[%s221 + $0x178] sm:$0xff]
        %v666 = vld [vmem:[%s221 + $0x180] sm:$0xff]
        %v667 = vld [vmem:[%s221 + $0x188] sm:$0xff]
        %v668 = vld [vmem:[%s221 + $0x190] sm:$0xff]
        %v669 = vld [vmem:[%s221 + $0x198] sm:$0xff]
        %v670 = vld [vmem:[%s221 + $0x1a0] sm:$0xff]
        %v671 = vld [vmem:[%s221 + $0x1a8] sm:$0xff]
        %v672 = vld [vmem:[%s221 + $0x1b0] sm:$0xff]
        %v673 = vld [vmem:[%s221 + $0x1b8] sm:$0xff]
        %v674 = vld [vmem:[%s221 + $0x1c0] sm:$0xff]
        %v675 = vld [vmem:[%s221 + $0x1c8] sm:$0xff]
        %v676 = vld [vmem:[%s221 + $0x1d0] sm:$0xff]
        %v677 = vld [vmem:[%s221 + $0x1d8] sm:$0xff]
        %v678 = vld [vmem:[%s221 + $0x1e0] sm:$0xff]
        %v679 = vld [vmem:[%s221 + $0x1e8] sm:$0xff]
        %v680 = vld [vmem:[%s221 + $0x1f0] sm:$0xff]
        %v681 = vld [vmem:[%s221 + $0x1f8] sm:$0xff]
        %v682 = vadd.f32 %v450, %v618
        %v683 = vadd.f32 %v539, %v619
        %v684 = vadd.f32 %v452, %v620
        %v685 = vadd.f32 %v541, %v621
        %v686 = vadd.f32 %v455, %v622
        %v687 = vadd.f32 %v544, %v623
        %v688 = vadd.f32 %v457, %v624
        %v689 = vadd.f32 %v546, %v625
        %v690 = vadd.f32 %v460, %v626
        %v691 = vadd.f32 %v549, %v627
        %v692 = vadd.f32 %v462, %v628
        %v693 = vadd.f32 %v551, %v629
        %v694 = vadd.f32 %v465, %v630
        %v695 = vadd.f32 %v554, %v631
        %v696 = vadd.f32 %v467, %v632
        %v697 = vadd.f32 %v556, %v633
        %v698 = vadd.f32 %v470, %v634
        %v699 = vadd.f32 %v559, %v635
        %v700 = vadd.f32 %v472, %v636
        %v701 = vadd.f32 %v561, %v637
        %v702 = vadd.f32 %v475, %v638
        %v703 = vadd.f32 %v564, %v639
        %v704 = vadd.f32 %v477, %v640
        %v705 = vadd.f32 %v566, %v641
        %v706 = vadd.f32 %v480, %v642
        %v707 = vadd.f32 %v569, %v643
        %v708 = vadd.f32 %v482, %v644
        %v709 = vadd.f32 %v571, %v645
        %v710 = vadd.f32 %v485, %v646
        %v711 = vadd.f32 %v574, %v647
        %v712 = vadd.f32 %v487, %v648
        %v713 = vadd.f32 %v576, %v649
        %v714 = vadd.f32 %v490, %v650
        %v715 = vadd.f32 %v579, %v651
        %v716 = vadd.f32 %v492, %v652
        %v717 = vadd.f32 %v581, %v653
        %v718 = vadd.f32 %v495, %v654
        %v719 = vadd.f32 %v584, %v655
        %v720 = vadd.f32 %v497, %v656
        %v721 = vadd.f32 %v586, %v657
        %v722 = vadd.f32 %v500, %v658
        %v723 = vadd.f32 %v589, %v659
        %v724 = vadd.f32 %v502, %v660
        %v725 = vadd.f32 %v591, %v661
        %v726 = vadd.f32 %v505, %v662
        %v727 = vadd.f32 %v594, %v663
        %v728 = vadd.f32 %v507, %v664
        %v729 = vadd.f32 %v596, %v665
        %v730 = vadd.f32 %v510, %v666
        %v731 = vadd.f32 %v599, %v667
        %v732 = vadd.f32 %v512, %v668
        %v733 = vadd.f32 %v601, %v669
        %v734 = vadd.f32 %v515, %v670
        %v735 = vadd.f32 %v604, %v671
        %v736 = vadd.f32 %v517, %v672
        %v737 = vadd.f32 %v606, %v673
        %v738 = vadd.f32 %v520, %v674
        %v739 = vadd.f32 %v609, %v675
        %v740 = vadd.f32 %v522, %v676
        %v741 = vadd.f32 %v611, %v677
        %v742 = vadd.f32 %v525, %v678
        %v743 = vadd.f32 %v614, %v679
        %v744 = vadd.f32 %v527, %v680
        %v745 = vadd.f32 %v616, %v681
        %v746 = vmax.f32 %v682, 0.0
        %v747 = vmax.f32 %v683, 0.0
        %v748 = vmax.f32 %v684, 0.0
        %v749 = vmax.f32 %v685, 0.0
        %v750 = vmax.f32 %v686, 0.0
        %v751 = vmax.f32 %v687, 0.0
        %v752 = vmax.f32 %v688, 0.0
        %v753 = vmax.f32 %v689, 0.0
        %v754 = vmax.f32 %v690, 0.0
        %v755 = vmax.f32 %v691, 0.0
        %v756 = vmax.f32 %v692, 0.0
        %v757 = vmax.f32 %v693, 0.0
        %v758 = vmax.f32 %v694, 0.0
        %v759 = vmax.f32 %v695, 0.0
        %v760 = vmax.f32 %v696, 0.0
        %v761 = vmax.f32 %v697, 0.0
        %v762 = vmax.f32 %v698, 0.0
        %v763 = vmax.f32 %v699, 0.0
        %v764 = vmax.f32 %v700, 0.0
        %v765 = vmax.f32 %v701, 0.0
        %v766 = vmax.f32 %v702, 0.0
        %v767 = vmax.f32 %v703, 0.0
        %v768 = vmax.f32 %v704, 0.0
        %v769 = vmax.f32 %v705, 0.0
        %v770 = vmax.f32 %v706, 0.0
        %v771 = vmax.f32 %v707, 0.0
        %v772 = vmax.f32 %v708, 0.0
        %v773 = vmax.f32 %v709, 0.0
        %v774 = vmax.f32 %v710, 0.0
        %v775 = vmax.f32 %v711, 0.0
        %v776 = vmax.f32 %v712, 0.0
        %v777 = vmax.f32 %v713, 0.0
        %v778 = vmax.f32 %v714, 0.0
        %v779 = vmax.f32 %v715, 0.0
        %v780 = vmax.f32 %v716, 0.0
        %v781 = vmax.f32 %v717, 0.0
        %v782 = vmax.f32 %v718, 0.0
        %v783 = vmax.f32 %v719, 0.0
        %v784 = vmax.f32 %v720, 0.0
        %v785 = vmax.f32 %v721, 0.0
        %v786 = vmax.f32 %v722, 0.0
        %v787 = vmax.f32 %v723, 0.0
        %v788 = vmax.f32 %v724, 0.0
        %v789 = vmax.f32 %v725, 0.0
        %v790 = vmax.f32 %v726, 0.0
        %v791 = vmax.f32 %v727, 0.0
        %v792 = vmax.f32 %v728, 0.0
        %v793 = vmax.f32 %v729, 0.0
        %v794 = vmax.f32 %v730, 0.0
        %v795 = vmax.f32 %v731, 0.0
        %v796 = vmax.f32 %v732, 0.0
        %v797 = vmax.f32 %v733, 0.0
        %v798 = vmax.f32 %v734, 0.0
        %v799 = vmax.f32 %v735, 0.0
        %v800 = vmax.f32 %v736, 0.0
        %v801 = vmax.f32 %v737, 0.0
        %v802 = vmax.f32 %v738, 0.0
        %v803 = vmax.f32 %v739, 0.0
        %v804 = vmax.f32 %v740, 0.0
        %v805 = vmax.f32 %v741, 0.0
        %v806 = vmax.f32 %v742, 0.0
        %v807 = vmax.f32 %v743, 0.0
        %v808 = vmax.f32 %v744, 0.0
        %v809 = vmax.f32 %v745, 0.0
        %810 = vst [vmem:[%s209] sm:$0xff] %v746
        %811 = vst [vmem:[%s209 + $0x8] sm:$0xff] %v747
        %812 = vst [vmem:[%s209 + $0x10] sm:$0xff] %v748
        %813 = vst [vmem:[%s209 + $0x18] sm:$0xff] %v749
        %814 = vst [vmem:[%s209 + $0x20] sm:$0xff] %v750
        %815 = vst [vmem:[%s209 + $0x28] sm:$0xff] %v751
        %816 = vst [vmem:[%s209 + $0x30] sm:$0xff] %v752
        %817 = vst [vmem:[%s209 + $0x38] sm:$0xff] %v753
        %818 = vst [vmem:[%s209 + $0x40] sm:$0xff] %v754
        %819 = vst [vmem:[%s209 + $0x48] sm:$0xff] %v755
        %820 = vst [vmem:[%s209 + $0x50] sm:$0xff] %v756
        %821 = vst [vmem:[%s209 + $0x58] sm:$0xff] %v757
        %822 = vst [vmem:[%s209 + $0x60] sm:$0xff] %v758
        %823 = vst [vmem:[%s209 + $0x68] sm:$0xff] %v759
        %824 = vst [vmem:[%s209 + $0x70] sm:$0xff] %v760
        %825 = vst [vmem:[%s209 + $0x78] sm:$0xff] %v761
        %826 = vst [vmem:[%s209 + $0x80] sm:$0xff] %v762
        %827 = vst [vmem:[%s209 + $0x88] sm:$0xff] %v763
        %828 = vst [vmem:[%s209 + $0x90] sm:$0xff] %v764
        %829 = vst [vmem:[%s209 + $0x98] sm:$0xff] %v765
        %830 = vst [vmem:[%s209 + $0xa0] sm:$0xff] %v766
        %831 = vst [vmem:[%s209 + $0xa8] sm:$0xff] %v767
        %832 = vst [vmem:[%s209 + $0xb0] sm:$0xff] %v768
        %833 = vst [vmem:[%s209 + $0xb8] sm:$0xff] %v769
        %834 = vst [vmem:[%s209 + $0xc0] sm:$0xff] %v770
        %835 = vst [vmem:[%s209 + $0xc8] sm:$0xff] %v771
        %836 = vst [vmem:[%s209 + $0xd0] sm:$0xff] %v772
        %837 = vst [vmem:[%s209 + $0xd8] sm:$0xff] %v773
        %838 = vst [vmem:[%s209 + $0xe0] sm:$0xff] %v774
        %839 = vst [vmem:[%s209 + $0xe8] sm:$0xff] %v775
        %840 = vst [vmem:[%s209 + $0xf0] sm:$0xff] %v776
        %841 = vst [vmem:[%s209 + $0xf8] sm:$0xff] %v777
        %842 = vst [vmem:[%s209 + $0x100] sm:$0xff] %v778
        %843 = vst [vmem:[%s209 + $0x108] sm:$0xff] %v779
        %844 = vst [vmem:[%s209 + $0x110] sm:$0xff] %v780
        %845 = vst [vmem:[%s209 + $0x118] sm:$0xff] %v781
        %846 = vst [vmem:[%s209 + $0x120] sm:$0xff] %v782
        %847 = vst [vmem:[%s209 + $0x128] sm:$0xff] %v783
        %848 = vst [vmem:[%s209 + $0x130] sm:$0xff] %v784
        %849 = vst [vmem:[%s209 + $0x138] sm:$0xff] %v785
        %850 = vst [vmem:[%s209 + $0x140] sm:$0xff] %v786
        %851 = vst [vmem:[%s209 + $0x148] sm:$0xff] %v787
        %852 = vst [vmem:[%s209 + $0x150] sm:$0xff] %v788
        %853 = vst [vmem:[%s209 + $0x158] sm:$0xff] %v789
        %854 = vst [vmem:[%s209 + $0x160] sm:$0xff] %v790
        %855 = vst [vmem:[%s209 + $0x168] sm:$0xff] %v791
        %856 = vst [vmem:[%s209 + $0x170] sm:$0xff] %v792
        %857 = vst [vmem:[%s209 + $0x178] sm:$0xff] %v793
        %858 = vst [vmem:[%s209 + $0x180] sm:$0xff] %v794
        %859 = vst [vmem:[%s209 + $0x188] sm:$0xff] %v795
        %860 = vst [vmem:[%s209 + $0x190] sm:$0xff] %v796
        %861 = vst [vmem:[%s209 + $0x198] sm:$0xff] %v797
        %862 = vst [vmem:[%s209 + $0x1a0] sm:$0xff] %v798
        %863 = vst [vmem:[%s209 + $0x1a8] sm:$0xff] %v799
        %864 = vst [vmem:[%s209 + $0x1b0] sm:$0xff] %v800
        %865 = vst [vmem:[%s209 + $0x1b8] sm:$0xff] %v801
        %866 = vst [vmem:[%s209 + $0x1c0] sm:$0xff] %v802
        %867 = vst [vmem:[%s209 + $0x1c8] sm:$0xff] %v803
        %868 = vst [vmem:[%s209 + $0x1d0] sm:$0xff] %v804
        %869 = vst [vmem:[%s209 + $0x1d8] sm:$0xff] %v805
        %870 = vst [vmem:[%s209 + $0x1e0] sm:$0xff] %v806
        %871 = vst [vmem:[%s209 + $0x1e8] sm:$0xff] %v807
        %872 = vst [vmem:[%s209 + $0x1f0] sm:$0xff] %v808
        %873 = vst [vmem:[%s209 + $0x1f8] sm:$0xff] %v809
        %s874 = sand.u32 %s120, 1
        %s875 = scalar_lea.sflag [#allocation3], %s874
        %s876 = sand.u32 %s120, 1
        %s877 = smul.addr %s876, 512
        %s878 = scalar_lea.vmem [#allocation2], %s877
        // Predicated region
        $region37: #{bottleneck_forward.7} parent=35 // pred_check
          %p879 = pneg %p130
        $region38: #{bottleneck_forward.7} parent=35 // pred_check_branch
          %881 = sbr.rel (%p879) target = $region40
        $region39: #{bottleneck_forward.7} parent=35 // pred_region
          %s882 = smul.u32 32, %s18
          %884 = vsyncadd %s875, 0
          %s885 = smul.addr %s882, 2
          %s886 = smul.addr %s885, 8
          %s887 = scalar_lea.hbm %s4, %s886
          %s888 = sshll.u32 %s878, 4
          %s889 = int_to_ptr.vmem [resolvable:$true] %s888
          %s890 = sshll.u32 %s887, 4
          %s891 = int_to_ptr.hbm [resolvable:$true] %s890
          %896 = dma.vmem_to_hbm [thread:$0]  %s889, 8192, %s891, %s875, 256, 256, 16
        $region40: #{bottleneck_forward.7} parent=35 // pred_fallthru
          _
      $region36: #{bottleneck_forward.7} parent=5 // pred_fallthru
        _
      %p897 = scmp.le.s32.totalorder 2, %s13
      // Predicated region
      $region41: #{bottleneck_forward.7} parent=5 // pred_check
        %p898 = pneg %p897
      $region42: #{bottleneck_forward.7} parent=5 // pred_check_branch
        %900 = sbr.rel (%p898) target = $region44
      $region43: #{bottleneck_forward.7} parent=5 // pred_region
        %s901 = ssub.s32 %s13, 2
        // Predicated region
        $region45: #{bottleneck_forward.7} parent=43 // pred_check
          %p902 = pneg %p136
        $region46: #{bottleneck_forward.7} parent=43 // pred_check_branch
          %904 = sbr.rel (%p902) target = $region48
        $region47: #{bottleneck_forward.7} parent=43 // pred_region
          %s905 = sand.u32 %s121, 1
          %s906 = scalar_lea.sflag [#allocation3], %s905
          %s907 = sand.u32 %s121, 1
          %s908 = smul.addr %s907, 512
          %s909 = scalar_lea.vmem [#allocation2], %s908
          %911 = dma.done %s906, 8192
        $region48: #{bottleneck_forward.7} parent=43 // pred_fallthru
          _
      $region44: #{bottleneck_forward.7} parent=5 // pred_fallthru
        _
    $region6: #{bottleneck_forward.7} parent=1 // loop_footer
      %s17 = sadd.s32 1, %s13
    $region7: #{bottleneck_forward.7} parent=1 // loop_footer_branch
      %12 = sbr.rel target = $region3
    $region8: #{bottleneck_forward.7} parent=1 // loop_exit
      _
    %912 = vsyncpa [#allocation3], 1
    %s913 = scalar_lea.sflag [#allocation3], 1
    %914 = vsyncpa %s913, 1

// kernel: bottleneck_forward.5
$region0: #{bottleneck_forward.5}
  #allocation0 [shape = 'u32[]', space=smem, size = 0x4, offset = 0x4, fixed_abs, tag = 'smem constant byte address 0x4 - core index']
  #allocation1 [shape = 'u32[72,128]{1,0:T(1,128)}', space=vmem, size = 0x9000, scoped, tag = 'internal scratch']
  %s0 = inlined_call_operand.vmem [shape: bf16[2,3,288,64], index: 0, kind: input, shape index: {}]
  %s1 = inlined_call_operand.vmem [shape: bf16[9,64,64], index: 1, kind: input, shape index: {}]
  %s2 = inlined_call_operand.vmem [shape: f32[1,64], index: 2, kind: input, shape index: {}]
  %s3 = inlined_call_operand.vmem [shape: bf16[512,64], index: 3, kind: output, shape index: {}]
  %s4 = sld [smem:[#allocation0]]
  $region45: #{bottleneck_forward.5} parent=0
    _
  %s6 = ssub.s32 1, %s4
  %s7 = scalar_select 0, %s6, %s4
  loop: start=0, step=1, limit=4
  $region2: #{bottleneck_forward.5} parent=0 // loop_pre_header
    _
  $region3: #{bottleneck_forward.5} parent=0 // loop_header
    %s9 = sphi 0, %s13
    %p10 = scmp.ge.s32.totalorder %s9, 4
    %s19 = sphi 0, %s21
    %s22 = sphi 0, %s19
    %s23 = sphi 0, %s22
    %s39 = sphi 0, %s23
    %s43 = sphi 0, %s43
    %s45 = sphi 0, %s43
    %s46 = sphi 0, %s45
    %s60 = sphi 0, %s46
    %s64 = sphi 0, %s64
    %s66 = sphi 0, %s64
    %s67 = sphi 0, %s66
    %s81 = sphi 0, %s67
    %s87 = sphi 0, %s89
    %s90 = sphi 0, %s87
    %s91 = sphi 0, %s90
    %s107 = sphi 0, %s91
  $region4: #{bottleneck_forward.5} parent=0 // loop_header_branch
    %12 = sbr.rel (%p10) target = $region8
  $region5: #{bottleneck_forward.5} parent=0 // loop_body
    %s14 = ssub.s32 %s9, 1
    %s15 = ssub.s32 %s9, 2
    %s16 = sadd.s32 %s9, 1
    %s17 = ssub.s32 %s9, %s16
    %p18 = scmp.eq.s32.totalorder %s17, 0
    %s20 = sadd.s32 %s19, 1
    %s21 = scalar_select %p18, %s19, %s20
    %p24 = pneg %p18
    %p25 = scmp.eq.s32.totalorder %s9, 1
    %p26 = por %p24, %p25
    %p27 = scmp.ne.s32.totalorder %s19, %s22
    %p28 = scmp.eq.s32.totalorder %s9, 0
    %p29 = por %p27, %p28
    %p30 = scmp.ne.s32.totalorder %s19, %s22
    %p31 = scmp.eq.s32.totalorder %s14, 1
    %p32 = por %p30, %p31
    %p33 = scmp.ne.s32.totalorder %s22, %s23
    %p34 = scmp.eq.s32.totalorder %s14, 0
    %p35 = por %p33, %p34
    %p36 = scmp.ne.s32.totalorder %s22, %s23
    %p37 = scmp.eq.s32.totalorder %s15, 1
    %p38 = por %p36, %p37
    %p40 = scmp.ne.s32.totalorder %s23, %s39
    %p41 = scmp.eq.s32.totalorder %s15, 0
    %p42 = por %p40, %p41
    %s44 = sadd.s32 %s43, 1
    %p47 = scmp.eq.s32.totalorder %s9, 1
    %p48 = scmp.ne.s32.totalorder %s43, %s45
    %p49 = scmp.eq.s32.totalorder %s9, 0
    %p50 = por %p48, %p49
    %p51 = scmp.ne.s32.totalorder %s43, %s45
    %p52 = scmp.eq.s32.totalorder %s14, 1
    %p53 = por %p51, %p52
    %p54 = scmp.ne.s32.totalorder %s45, %s46
    %p55 = scmp.eq.s32.totalorder %s14, 0
    %p56 = por %p54, %p55
    %p57 = scmp.ne.s32.totalorder %s45, %s46
    %p58 = scmp.eq.s32.totalorder %s15, 1
    %p59 = por %p57, %p58
    %p61 = scmp.ne.s32.totalorder %s46, %s60
    %p62 = scmp.eq.s32.totalorder %s15, 0
    %p63 = por %p61, %p62
    %s65 = sadd.s32 %s64, 1
    %p68 = scmp.eq.s32.totalorder %s9, 1
    %p69 = scmp.ne.s32.totalorder %s64, %s66
    %p70 = scmp.eq.s32.totalorder %s9, 0
    %p71 = por %p69, %p70
    %p72 = scmp.ne.s32.totalorder %s64, %s66
    %p73 = scmp.eq.s32.totalorder %s14, 1
    %p74 = por %p72, %p73
    %p75 = scmp.ne.s32.totalorder %s66, %s67
    %p76 = scmp.eq.s32.totalorder %s14, 0
    %p77 = por %p75, %p76
    %p78 = scmp.ne.s32.totalorder %s66, %s67
    %p79 = scmp.eq.s32.totalorder %s15, 1
    %p80 = por %p78, %p79
    %p82 = scmp.ne.s32.totalorder %s67, %s81
    %p83 = scmp.eq.s32.totalorder %s15, 0
    %p84 = por %p82, %p83
    %s85 = ssub.s32 %s9, %s16
    %p86 = scmp.eq.s32.totalorder %s85, 0
    %s88 = sadd.s32 %s87, 1
    %s89 = scalar_select %p86, %s87, %s88
    %p92 = pneg %p86
    %p93 = scmp.eq.s32.totalorder %s9, 1
    %p94 = por %p92, %p93
    %p95 = scmp.ne.s32.totalorder %s87, %s90
    %p96 = scmp.eq.s32.totalorder %s9, 0
    %p97 = por %p95, %p96
    %p98 = scmp.ne.s32.totalorder %s87, %s90
    %p99 = scmp.eq.s32.totalorder %s14, 1
    %p100 = por %p98, %p99
    %p101 = scmp.ne.s32.totalorder %s90, %s91
    %p102 = scmp.eq.s32.totalorder %s14, 0
    %p103 = por %p101, %p102
    %p104 = scmp.ne.s32.totalorder %s90, %s91
    %p105 = scmp.eq.s32.totalorder %s15, 1
    %p106 = por %p104, %p105
    %p108 = scmp.ne.s32.totalorder %s91, %s107
    %p109 = scmp.eq.s32.totalorder %s15, 0
    %p110 = por %p108, %p109
    %p111 = scmp.le.s32.totalorder 1, %s9
    %p112 = scmp.lt.s32.totalorder %s9, 3
    %p113 = pnand %p111, %p112
    %p114 = pneg %p113
    // Predicated region
    $region9: #{bottleneck_forward.5} parent=5 // pred_check
      _
    $region10: #{bottleneck_forward.5} parent=5 // pred_check_branch
      %116 = sbr.rel (%p113) target = $region12
    $region11: #{bottleneck_forward.5} parent=5 // pred_region
      %s117 = ssub.s32 %s9, 1
      // Predicated region
      $region13: #{bottleneck_forward.5} parent=11 // pred_check
        %p118 = pneg %p56
      $region14: #{bottleneck_forward.5} parent=11 // pred_check_branch
        %120 = sbr.rel (%p118) target = $region16
      $region15: #{bottleneck_forward.5} parent=11 // pred_region
        _
      $region16: #{bottleneck_forward.5} parent=11 // pred_fallthru
        _
      // Predicated region
      $region17: #{bottleneck_forward.5} parent=11 // pred_check
        %p121 = pneg %p77
      $region18: #{bottleneck_forward.5} parent=11 // pred_check_branch
        %123 = sbr.rel (%p121) target = $region20
      $region19: #{bottleneck_forward.5} parent=11 // pred_region
        _
      $region20: #{bottleneck_forward.5} parent=11 // pred_fallthru
        _
    $region12: #{bottleneck_forward.5} parent=5 // pred_fallthru
      _
    %p124 = scmp.lt.s32.totalorder %s9, 2
    // Predicated region
    $region21: #{bottleneck_forward.5} parent=5 // pred_check
      %p125 = pneg %p124
    $region22: #{bottleneck_forward.5} parent=5 // pred_check_branch
      %127 = sbr.rel (%p125) target = $region24
    $region23: #{bottleneck_forward.5} parent=5 // pred_region
      // Predicated region
      $region25: #{bottleneck_forward.5} parent=23 // pred_check
        %p128 = pneg %p29
      $region26: #{bottleneck_forward.5} parent=23 // pred_check_branch
        %130 = sbr.rel (%p128) target = $region28
      $region27: #{bottleneck_forward.5} parent=23 // pred_region
        %p131 = scmp.lt.s32.totalorder %s9, 1
        %s132 = scalar_select %p131, %s9, 1
        %s133 = smul.addr %s132, 108
        %s134 = smul.addr %s133, 4
        %s135 = scalar_lea.vmem %s0, %s134
      $region28: #{bottleneck_forward.5} parent=23 // pred_fallthru
        _
    $region24: #{bottleneck_forward.5} parent=5 // pred_fallthru
      _
    %p136 = scmp.le.s32.totalorder 1, %s9
    %p137 = scmp.lt.s32.totalorder %s9, 3
    %p138 = pnand %p136, %p137
    %p139 = pneg %p138
    // Predicated region
    $region29: #{bottleneck_forward.5} parent=5 // pred_check
      _
    $region30: #{bottleneck_forward.5} parent=5 // pred_check_branch
      %141 = sbr.rel (%p138) target = $region32
    $region31: #{bottleneck_forward.5} parent=5 // pred_region
      %s142 = ssub.s32 %s9, 1
      %p143 = scmp.lt.s32.totalorder %s14, 1
      %s144 = scalar_select %p143, %s14, 1
      %s145 = smul.addr %s144, 108
      %s146 = smul.addr %s145, 4
      %s147 = scalar_lea.vmem %s0, %s146
      %p148 = pneg %p35
      %p149 = pneg %p32
      %p150 = pneg %p56
      %p151 = pneg %p53
      %p152 = pneg %p77
      %p153 = pneg %p74
      %p154 = pneg %p103
      %p155 = pneg %p100
      %s156 = smul.u32 32, %s14
      %p157 = scmp.lt.s32.totalorder %s156, 63
      %s158 = scalar_select %p157, %s156, 63
      %s159 = smul.addr %s158, 4
      %s160 = scalar_lea.vmem %s3, %s159
      %p161 = scmp.lt.s32.totalorder %s14, 1
      %s162 = scalar_select %p161, %s14, 1
      %s163 = smul.addr %s162, 108
      %s164 = smul.addr %s163, 4
      %s165 = scalar_lea.vmem %s0, %s164
      %s166 = smul.u32 32, %s14
      %p167 = scmp.lt.s32.totalorder %s166, 63
      %s168 = scalar_select %p167, %s166, 63
      %s169 = smul.addr %s168, 4
      %s170 = scalar_lea.vmem %s3, %s169
      %s171 = smul.u32 32, %s14
      %v173 = vld [vmem:[%s165] sm:$0xf]
      %v174 = vld [vmem:[%s165 + $0x4] sm:$0xf]
      %v175 = vld [vmem:[%s165 + $0x8] sm:$0xf]
      %v176 = vld [vmem:[%s165 + $0xc] sm:$0xf]
      %v177 = vld [vmem:[%s165 + $0x10] sm:$0xf]
      %v178 = vld [vmem:[%s165 + $0x14] sm:$0xf]
      %v179 = vld [vmem:[%s165 + $0x18] sm:$0xf]
      %v180 = vld [vmem:[%s165 + $0x1c] sm:$0xf]
      %v181 = vld [vmem:[%s165 + $0x20] sm:$0xf]
      %v182 = vld [vmem:[%s165 + $0x24] sm:$0xf]
      %v183 = vld [vmem:[%s165 + $0x28] sm:$0xf]
      %v184 = vld [vmem:[%s165 + $0x2c] sm:$0xf]
      %v185 = vld [vmem:[%s165 + $0x30] sm:$0xf]
      %v186 = vld [vmem:[%s165 + $0x34] sm:$0xf]
      %v187 = vld [vmem:[%s165 + $0x38] sm:$0xf]
      %v188 = vld [vmem:[%s165 + $0x3c] sm:$0xf]
      %v189 = vld [vmem:[%s165 + $0x40] sm:$0xf]
      %v190 = vld [vmem:[%s165 + $0x44] sm:$0xf]
      %v191 = vld [vmem:[%s165 + $0x48] sm:$0xf]
      %v192 = vld [vmem:[%s165 + $0x4c] sm:$0xf]
      %v193 = vld [vmem:[%s165 + $0x50] sm:$0xf]
      %v194 = vld [vmem:[%s165 + $0x54] sm:$0xf]
      %v195 = vld [vmem:[%s165 + $0x58] sm:$0xf]
      %v196 = vld [vmem:[%s165 + $0x5c] sm:$0xf]
      %v197 = vld [vmem:[%s165 + $0x60] sm:$0xf]
      %v198 = vld [vmem:[%s165 + $0x64] sm:$0xf]
      %v199 = vld [vmem:[%s165 + $0x68] sm:$0xf]
      %v200 = vld [vmem:[%s165 + $0x6c] sm:$0xf]
      %v201 = vld [vmem:[%s165 + $0x70] sm:$0xf]
      %v202 = vld [vmem:[%s165 + $0x74] sm:$0xf]
      %v203 = vld [vmem:[%s165 + $0x78] sm:$0xf]
      %v204 = vld [vmem:[%s165 + $0x7c] sm:$0xf]
      %v205 = vld [vmem:[%s1] sm:$0xf]
      %v206 = vld [vmem:[%s1 + $0x4] sm:$0xf]
      %v207 = vld [vmem:[%s1 + $0x8] sm:$0xf]
      %v208 = vld [vmem:[%s1 + $0xc] sm:$0xf]
      %v209 = vld [vmem:[%s1 + $0x10] sm:$0xf]
      %v210 = vld [vmem:[%s1 + $0x14] sm:$0xf]
      %v211 = vld [vmem:[%s1 + $0x18] sm:$0xf]
      %v212 = vld [vmem:[%s1 + $0x1c] sm:$0xf]
      %s213 = scalar_lea.vmem %s165, 144
      %v214 = vld [vmem:[%s213] sm:$0xf]
      %v215 = vld [vmem:[%s213 + $0x4] sm:$0xf]
      %v216 = vld [vmem:[%s213 + $0x8] sm:$0xf]
      %v217 = vld [vmem:[%s213 + $0xc] sm:$0xf]
      %v218 = vld [vmem:[%s213 + $0x10] sm:$0xf]
      %v219 = vld [vmem:[%s213 + $0x14] sm:$0xf]
      %v220 = vld [vmem:[%s213 + $0x18] sm:$0xf]
      %v221 = vld [vmem:[%s213 + $0x1c] sm:$0xf]
      %v222 = vld [vmem:[%s213 + $0x20] sm:$0xf]
      %v223 = vld [vmem:[%s213 + $0x24] sm:$0xf]
      %v224 = vld [vmem:[%s213 + $0x28] sm:$0xf]
      %v225 = vld [vmem:[%s213 + $0x2c] sm:$0xf]
      %v226 = vld [vmem:[%s213 + $0x30] sm:$0xf]
      %v227 = vld [vmem:[%s213 + $0x34] sm:$0xf]
      %v228 = vld [vmem:[%s213 + $0x38] sm:$0xf]
      %v229 = vld [vmem:[%s213 + $0x3c] sm:$0xf]
      %v230 = vld [vmem:[%s213 + $0x40] sm:$0xf]
      %v231 = vld [vmem:[%s213 + $0x44] sm:$0xf]
      %v232 = vld [vmem:[%s213 + $0x48] sm:$0xf]
      %v233 = vld [vmem:[%s213 + $0x4c] sm:$0xf]
      %v234 = vld [vmem:[%s213 + $0x50] sm:$0xf]
      %v235 = vld [vmem:[%s213 + $0x54] sm:$0xf]
      %v236 = vld [vmem:[%s213 + $0x58] sm:$0xf]
      %v237 = vld [vmem:[%s213 + $0x5c] sm:$0xf]
      %v238 = vld [vmem:[%s213 + $0x60] sm:$0xf]
      %v239 = vld [vmem:[%s213 + $0x64] sm:$0xf]
      %v240 = vld [vmem:[%s213 + $0x68] sm:$0xf]
      %v241 = vld [vmem:[%s213 + $0x6c] sm:$0xf]
      %v242 = vld [vmem:[%s213 + $0x70] sm:$0xf]
      %v243 = vld [vmem:[%s213 + $0x74] sm:$0xf]
      %v244 = vld [vmem:[%s213 + $0x78] sm:$0xf]
      %v245 = vld [vmem:[%s213 + $0x7c] sm:$0xf]
      %s246 = scalar_lea.vmem %s1, 32
      %v247 = vld [vmem:[%s246] sm:$0xf]
      %v248 = vld [vmem:[%s246 + $0x4] sm:$0xf]
      %v249 = vld [vmem:[%s246 + $0x8] sm:$0xf]
      %v250 = vld [vmem:[%s246 + $0xc] sm:$0xf]
      %v251 = vld [vmem:[%s246 + $0x10] sm:$0xf]
      %v252 = vld [vmem:[%s246 + $0x14] sm:$0xf]
      %v253 = vld [vmem:[%s246 + $0x18] sm:$0xf]
      %v254 = vld [vmem:[%s246 + $0x1c] sm:$0xf]
      %v287 = vunpack.c.l.b16 %v214
      %v288 = vunpack.c.l.b16 %v215
      %v289 = vunpack.c.l.b16 %v216
      %v290 = vunpack.c.l.b16 %v217
      %v291 = vunpack.c.l.b16 %v218
      %v292 = vunpack.c.l.b16 %v219
      %v293 = vunpack.c.l.b16 %v220
      %v294 = vunpack.c.l.b16 %v221
      %v295 = vunpack.c.l.b16 %v222
      %v296 = vunpack.c.l.b16 %v223
      %v297 = vunpack.c.l.b16 %v224
      %v298 = vunpack.c.l.b16 %v225
      %v299 = vunpack.c.l.b16 %v226
      %v300 = vunpack.c.l.b16 %v227
      %v301 = vunpack.c.l.b16 %v228
      %v302 = vunpack.c.l.b16 %v229
      %v303 = vunpack.c.l.b16 %v230
      %v304 = vunpack.c.l.b16 %v231
      %v305 = vunpack.c.l.b16 %v232
      %v306 = vunpack.c.l.b16 %v233
      %v307 = vunpack.c.l.b16 %v234
      %v308 = vunpack.c.l.b16 %v235
      %v309 = vunpack.c.l.b16 %v236
      %v310 = vunpack.c.l.b16 %v237
      %v311 = vunpack.c.l.b16 %v238
      %v312 = vunpack.c.l.b16 %v239
      %v313 = vunpack.c.l.b16 %v240
      %v314 = vunpack.c.l.b16 %v241
      %v315 = vunpack.c.l.b16 %v242
      %v316 = vunpack.c.l.b16 %v243
      %v317 = vunpack.c.l.b16 %v244
      %v318 = vunpack.c.l.b16 %v245
      %v319 = vpack.c.b16 %v288, %v287
      %v320 = vpack.c.b16 %v290, %v289
      %v321 = vpack.c.b16 %v292, %v291
      %v322 = vpack.c.b16 %v294, %v293
      %v323 = vpack.c.b16 %v296, %v295
      %v324 = vpack.c.b16 %v298, %v297
      %v325 = vpack.c.b16 %v300, %v299
      %v326 = vpack.c.b16 %v302, %v301
      %v327 = vpack.c.b16 %v304, %v303
      %v328 = vpack.c.b16 %v306, %v305
      %v329 = vpack.c.b16 %v308, %v307
      %v330 = vpack.c.b16 %v310, %v309
      %v331 = vpack.c.b16 %v312, %v311
      %v332 = vpack.c.b16 %v314, %v313
      %v333 = vpack.c.b16 %v316, %v315
      %v334 = vpack.c.b16 %v318, %v317
      %v343 = vunpack.c.l.b16 %v247
      %v344 = vunpack.c.l.b16 %v248
      %v345 = vunpack.c.l.b16 %v249
      %v346 = vunpack.c.l.b16 %v250
      %v347 = vunpack.c.l.b16 %v251
      %v348 = vunpack.c.l.b16 %v252
      %v349 = vunpack.c.l.b16 %v253
      %v350 = vunpack.c.l.b16 %v254
      %v351 = vpack.c.b16 %v344, %v343
      %v352 = vpack.c.b16 %v346, %v345
      %v353 = vpack.c.b16 %v348, %v347
      %v354 = vpack.c.b16 %v350, %v349
      %vm359 = vcmask 523264
      %v361 = vsel %vm359, %v319, 0
      %v364 = vsel %vm359, %v320, 0
      %v367 = vsel %vm359, %v321, 0
      %v370 = vsel %vm359, %v322, 0
      %v373 = vsel %vm359, %v323, 0
      %v376 = vsel %vm359, %v324, 0
      %v379 = vsel %vm359, %v325, 0
      %v382 = vsel %vm359, %v326, 0
      %v385 = vsel %vm359, %v327, 0
      %v388 = vsel %vm359, %v328, 0
      %v391 = vsel %vm359, %v329, 0
      %v394 = vsel %vm359, %v330, 0
      %v397 = vsel %vm359, %v331, 0
      %v400 = vsel %vm359, %v332, 0
      %v403 = vsel %vm359, %v333, 0
      %v406 = vsel %vm359, %v334, 0
      %408 = vmatpush.bf16.msra.mxu0 0
      %409 = vmatpush.bf16.msra.mxu0 0
      %410 = vmatpush.bf16.msra.mxu0 0
      %411 = vmatpush.bf16.msra.mxu0 0
      %412 = vmatpush.bf16.msra.mxu0 %v354
      %413 = vmatpush.bf16.msra.mxu0 %v353
      %414 = vmatpush.bf16.msra.mxu0 %v352
      %415 = vmatpush.bf16.msra.mxu0 %v351
      %416 = vmatmul.bf16.gmra.mxu0 %v361
      %v417 = vpop.f32.mrf.mxu0
      %v418 = vadd.f32 0.0, %v417
      %v419 = vpop.f32.mrf.mxu0
      %v420 = vadd.f32 0.0, %v419
      %421 = vmatmul.bf16.gmra.mxu0 %v364
      %v422 = vpop.f32.mrf.mxu0
      %v423 = vadd.f32 0.0, %v422
      %v424 = vpop.f32.mrf.mxu0
      %v425 = vadd.f32 0.0, %v424
      %426 = vmatmul.bf16.gmra.mxu0 %v367
      %v427 = vpop.f32.mrf.mxu0
      %v428 = vadd.f32 0.0, %v427
      %v429 = vpop.f32.mrf.mxu0
      %v430 = vadd.f32 0.0, %v429
      %431 = vmatmul.bf16.gmra.mxu0 %v370
      %v432 = vpop.f32.mrf.mxu0
      %v433 = vadd.f32 0.0, %v432
      %v434 = vpop.f32.mrf.mxu0
      %v435 = vadd.f32 0.0, %v434
      %436 = vmatmul.bf16.gmra.mxu0 %v373
      %v437 = vpop.f32.mrf.mxu0
      %v438 = vadd.f32 0.0, %v437
      %v439 = vpop.f32.mrf.mxu0
      %v440 = vadd.f32 0.0, %v439
      %441 = vmatmul.bf16.gmra.mxu0 %v376
      %v442 = vpop.f32.mrf.mxu0
      %v443 = vadd.f32 0.0, %v442
      %v444 = vpop.f32.mrf.mxu0
      %v445 = vadd.f32 0.0, %v444
      %446 = vmatmul.bf16.gmra.mxu0 %v379
      %v447 = vpop.f32.mrf.mxu0
      %v448 = vadd.f32 0.0, %v447
      %v449 = vpop.f32.mrf.mxu0
      %v450 = vadd.f32 0.0, %v449
      %451 = vmatmul.bf16.gmra.mxu0 %v382
      %v452 = vpop.f32.mrf.mxu0
      %v453 = vadd.f32 0.0, %v452
      %v454 = vpop.f32.mrf.mxu0
      %v455 = vadd.f32 0.0, %v454
      %456 = vmatmul.bf16.gmra.mxu0 %v385
      %v457 = vpop.f32.mrf.mxu0
      %v458 = vadd.f32 0.0, %v457
      %v459 = vpop.f32.mrf.mxu0
      %v460 = vadd.f32 0.0, %v459
      %461 = vmatmul.bf16.gmra.mxu0 %v388
      %v462 = vpop.f32.mrf.mxu0
      %v463 = vadd.f32 0.0, %v462
      %v464 = vpop.f32.mrf.mxu0
      %v465 = vadd.f32 0.0, %v464
      %466 = vmatmul.bf16.gmra.mxu0 %v391
      %v467 = vpop.f32.mrf.mxu0
      %v468 = vadd.f32 0.0, %v467
      %v469 = vpop.f32.mrf.mxu0
      %v470 = vadd.f32 0.0, %v469
      %471 = vmatmul.bf16.gmra.mxu0 %v394
      %v472 = vpop.f32.mrf.mxu0
      %v473 = vadd.f32 0.0, %v472
      %v474 = vpop.f32.mrf.mxu0
      %v475 = vadd.f32 0.0, %v474
      %476 = vmatmul.bf16.gmra.mxu0 %v397
      %v477 = vpop.f32.mrf.mxu0
      %v478 = vadd.f32 0.0, %v477
      %v479 = vpop.f32.mrf.mxu0
      %v480 = vadd.f32 0.0, %v479
      %481 = vmatmul.bf16.gmra.mxu0 %v400
      %v482 = vpop.f32.mrf.mxu0
      %v483 = vadd.f32 0.0, %v482
      %v484 = vpop.f32.mrf.mxu0
      %v485 = vadd.f32 0.0, %v484
      %486 = vmatmul.bf16.gmra.mxu0 %v403
      %v487 = vpop.f32.mrf.mxu0
      %v488 = vadd.f32 0.0, %v487
      %v489 = vpop.f32.mrf.mxu0
      %v490 = vadd.f32 0.0, %v489
      %491 = vmatmul.bf16.gmra.mxu0 %v406
      %v492 = vpop.f32.mrf.mxu0
      %v493 = vadd.f32 0.0, %v492
      %v494 = vpop.f32.mrf.mxu0
      %v495 = vadd.f32 0.0, %v494
      %496 = vdwg.mxu0
      %v529 = vunpack.c.l.b16 %v173
      %v530 = vunpack.c.l.b16 %v174
      %v531 = vunpack.c.l.b16 %v175
      %v532 = vunpack.c.l.b16 %v176
      %v533 = vunpack.c.l.b16 %v177
      %v534 = vunpack.c.l.b16 %v178
      %v535 = vunpack.c.l.b16 %v179
      %v536 = vunpack.c.l.b16 %v180
      %v537 = vunpack.c.l.b16 %v181
      %v538 = vunpack.c.l.b16 %v182
      %v539 = vunpack.c.l.b16 %v183
      %v540 = vunpack.c.l.b16 %v184
      %v541 = vunpack.c.l.b16 %v185
      %v542 = vunpack.c.l.b16 %v186
      %v543 = vunpack.c.l.b16 %v187
      %v544 = vunpack.c.l.b16 %v188
      %v545 = vunpack.c.l.b16 %v189
      %v546 = vunpack.c.l.b16 %v190
      %v547 = vunpack.c.l.b16 %v191
      %v548 = vunpack.c.l.b16 %v192
      %v549 = vunpack.c.l.b16 %v193
      %v550 = vunpack.c.l.b16 %v194
      %v551 = vunpack.c.l.b16 %v195
      %v552 = vunpack.c.l.b16 %v196
      %v553 = vunpack.c.l.b16 %v197
      %v554 = vunpack.c.l.b16 %v198
      %v555 = vunpack.c.l.b16 %v199
      %v556 = vunpack.c.l.b16 %v200
      %v557 = vunpack.c.l.b16 %v201
      %v558 = vunpack.c.l.b16 %v202
      %v559 = vunpack.c.l.b16 %v203
      %v560 = vunpack.c.l.b16 %v204
      %v561 = vpack.c.b16 %v530, %v529
      %v562 = vpack.c.b16 %v532, %v531
      %v563 = vpack.c.b16 %v534, %v533
      %v564 = vpack.c.b16 %v536, %v535
      %v565 = vpack.c.b16 %v538, %v537
      %v566 = vpack.c.b16 %v540, %v539
      %v567 = vpack.c.b16 %v542, %v541
      %v568 = vpack.c.b16 %v544, %v543
      %v569 = vpack.c.b16 %v546, %v545
      %v570 = vpack.c.b16 %v548, %v547
      %v571 = vpack.c.b16 %v550, %v549
      %v572 = vpack.c.b16 %v552, %v551
      %v573 = vpack.c.b16 %v554, %v553
      %v574 = vpack.c.b16 %v556, %v555
      %v575 = vpack.c.b16 %v558, %v557
      %v576 = vpack.c.b16 %v560, %v559
      %v585 = vunpack.c.l.b16 %v205
      %v586 = vunpack.c.l.b16 %v206
      %v587 = vunpack.c.l.b16 %v207
      %v588 = vunpack.c.l.b16 %v208
      %v589 = vunpack.c.l.b16 %v209
      %v590 = vunpack.c.l.b16 %v210
      %v591 = vunpack.c.l.b16 %v211
      %v592 = vunpack.c.l.b16 %v212
      %v593 = vpack.c.b16 %v586, %v585
      %v594 = vpack.c.b16 %v588, %v587
      %v595 = vpack.c.b16 %v590, %v589
      %v596 = vpack.c.b16 %v592, %v591
      %v602 = vsel %vm359, %v561, 0
      %v605 = vsel %vm359, %v562, 0
      %v608 = vsel %vm359, %v563, 0
      %v611 = vsel %vm359, %v564, 0
      %v614 = vsel %vm359, %v565, 0
      %v617 = vsel %vm359, %v566, 0
      %v620 = vsel %vm359, %v567, 0
      %v623 = vsel %vm359, %v568, 0
      %v626 = vsel %vm359, %v569, 0
      %v629 = vsel %vm359, %v570, 0
      %v632 = vsel %vm359, %v571, 0
      %v635 = vsel %vm359, %v572, 0
      %v638 = vsel %vm359, %v573, 0
      %v641 = vsel %vm359, %v574, 0
      %v644 = vsel %vm359, %v575, 0
      %v647 = vsel %vm359, %v576, 0
      %649 = vmatpush.bf16.msra.mxu0 0
      %650 = vmatpush.bf16.msra.mxu0 0
      %651 = vmatpush.bf16.msra.mxu0 0
      %652 = vmatpush.bf16.msra.mxu0 0
      %653 = vmatpush.bf16.msra.mxu0 %v596
      %654 = vmatpush.bf16.msra.mxu0 %v595
      %655 = vmatpush.bf16.msra.mxu0 %v594
      %656 = vmatpush.bf16.msra.mxu0 %v593
      %657 = vmatmul.bf16.gmra.mxu0 %v602
      %v658 = vpop.f32.mrf.mxu0
      %v659 = vadd.f32 %v418, %v658
      %v660 = vpop.f32.mrf.mxu0
      %v661 = vadd.f32 %v420, %v660
      %662 = vmatmul.bf16.gmra.mxu0 %v605
      %v663 = vpop.f32.mrf.mxu0
      %v664 = vadd.f32 %v423, %v663
      %v665 = vpop.f32.mrf.mxu0
      %v666 = vadd.f32 %v425, %v665
      %667 = vmatmul.bf16.gmra.mxu0 %v608
      %v668 = vpop.f32.mrf.mxu0
      %v669 = vadd.f32 %v428, %v668
      %v670 = vpop.f32.mrf.mxu0
      %v671 = vadd.f32 %v430, %v670
      %672 = vmatmul.bf16.gmra.mxu0 %v611
      %v673 = vpop.f32.mrf.mxu0
      %v674 = vadd.f32 %v433, %v673
      %v675 = vpop.f32.mrf.mxu0
      %v676 = vadd.f32 %v435, %v675
      %677 = vmatmul.bf16.gmra.mxu0 %v614
      %v678 = vpop.f32.mrf.mxu0
      %v679 = vadd.f32 %v438, %v678
      %v680 = vpop.f32.mrf.mxu0
      %v681 = vadd.f32 %v440, %v680
      %682 = vmatmul.bf16.gmra.mxu0 %v617
      %v683 = vpop.f32.mrf.mxu0
      %v684 = vadd.f32 %v443, %v683
      %v685 = vpop.f32.mrf.mxu0
      %v686 = vadd.f32 %v445, %v685
      %687 = vmatmul.bf16.gmra.mxu0 %v620
      %v688 = vpop.f32.mrf.mxu0
      %v689 = vadd.f32 %v448, %v688
      %v690 = vpop.f32.mrf.mxu0
      %v691 = vadd.f32 %v450, %v690
      %692 = vmatmul.bf16.gmra.mxu0 %v623
      %v693 = vpop.f32.mrf.mxu0
      %v694 = vadd.f32 %v453, %v693
      %v695 = vpop.f32.mrf.mxu0
      %v696 = vadd.f32 %v455, %v695
      %697 = vmatmul.bf16.gmra.mxu0 %v626
      %v698 = vpop.f32.mrf.mxu0
      %v699 = vadd.f32 %v458, %v698
      %v700 = vpop.f32.mrf.mxu0
      %v701 = vadd.f32 %v460, %v700
      %702 = vmatmul.bf16.gmra.mxu0 %v629
      %v703 = vpop.f32.mrf.mxu0
      %v704 = vadd.f32 %v463, %v703
      %v705 = vpop.f32.mrf.mxu0
      %v706 = vadd.f32 %v465, %v705
      %707 = vmatmul.bf16.gmra.mxu0 %v632
      %v708 = vpop.f32.mrf.mxu0
      %v709 = vadd.f32 %v468, %v708
      %v710 = vpop.f32.mrf.mxu0
      %v711 = vadd.f32 %v470, %v710
      %712 = vmatmul.bf16.gmra.mxu0 %v635
      %v713 = vpop.f32.mrf.mxu0
      %v714 = vadd.f32 %v473, %v713
      %v715 = vpop.f32.mrf.mxu0
      %v716 = vadd.f32 %v475, %v715
      %717 = vmatmul.bf16.gmra.mxu0 %v638
      %v718 = vpop.f32.mrf.mxu0
      %v719 = vadd.f32 %v478, %v718
      %v720 = vpop.f32.mrf.mxu0
      %v721 = vadd.f32 %v480, %v720
      %722 = vmatmul.bf16.gmra.mxu0 %v641
      %v723 = vpop.f32.mrf.mxu0
      %v724 = vadd.f32 %v483, %v723
      %v725 = vpop.f32.mrf.mxu0
      %v726 = vadd.f32 %v485, %v725
      %727 = vmatmul.bf16.gmra.mxu0 %v644
      %v728 = vpop.f32.mrf.mxu0
      %v729 = vadd.f32 %v488, %v728
      %v730 = vpop.f32.mrf.mxu0
      %v731 = vadd.f32 %v490, %v730
      %732 = vmatmul.bf16.gmra.mxu0 %v647
      %v733 = vpop.f32.mrf.mxu0
      %v734 = vadd.f32 %v493, %v733
      %v735 = vpop.f32.mrf.mxu0
      %v736 = vadd.f32 %v495, %v735
      %737 = vdwg.mxu0
      %s738 = scalar_lea.vmem %s165, 288
      %v739 = vld [vmem:[%s738] sm:$0xf]
      %v740 = vld [vmem:[%s738 + $0x4] sm:$0xf]
      %v741 = vld [vmem:[%s738 + $0x8] sm:$0xf]
      %v742 = vld [vmem:[%s738 + $0xc] sm:$0xf]
      %v743 = vld [vmem:[%s738 + $0x10] sm:$0xf]
      %v744 = vld [vmem:[%s738 + $0x14] sm:$0xf]
      %v745 = vld [vmem:[%s738 + $0x18] sm:$0xf]
      %v746 = vld [vmem:[%s738 + $0x1c] sm:$0xf]
      %v747 = vld [vmem:[%s738 + $0x20] sm:$0xf]
      %v748 = vld [vmem:[%s738 + $0x24] sm:$0xf]
      %v749 = vld [vmem:[%s738 + $0x28] sm:$0xf]
      %v750 = vld [vmem:[%s738 + $0x2c] sm:$0xf]
      %v751 = vld [vmem:[%s738 + $0x30] sm:$0xf]
      %v752 = vld [vmem:[%s738 + $0x34] sm:$0xf]
      %v753 = vld [vmem:[%s738 + $0x38] sm:$0xf]
      %v754 = vld [vmem:[%s738 + $0x3c] sm:$0xf]
      %v755 = vld [vmem:[%s738 + $0x40] sm:$0xf]
      %v756 = vld [vmem:[%s738 + $0x44] sm:$0xf]
      %v757 = vld [vmem:[%s738 + $0x48] sm:$0xf]
      %v758 = vld [vmem:[%s738 + $0x4c] sm:$0xf]
      %v759 = vld [vmem:[%s738 + $0x50] sm:$0xf]
      %v760 = vld [vmem:[%s738 + $0x54] sm:$0xf]
      %v761 = vld [vmem:[%s738 + $0x58] sm:$0xf]
      %v762 = vld [vmem:[%s738 + $0x5c] sm:$0xf]
      %v763 = vld [vmem:[%s738 + $0x60] sm:$0xf]
      %v764 = vld [vmem:[%s738 + $0x64] sm:$0xf]
      %v765 = vld [vmem:[%s738 + $0x68] sm:$0xf]
      %v766 = vld [vmem:[%s738 + $0x6c] sm:$0xf]
      %v767 = vld [vmem:[%s738 + $0x70] sm:$0xf]
      %v768 = vld [vmem:[%s738 + $0x74] sm:$0xf]
      %v769 = vld [vmem:[%s738 + $0x78] sm:$0xf]
      %v770 = vld [vmem:[%s738 + $0x7c] sm:$0xf]
      %s771 = scalar_lea.vmem %s1, 64
      %v772 = vld [vmem:[%s771] sm:$0xf]
      %v773 = vld [vmem:[%s771 + $0x4] sm:$0xf]
      %v774 = vld [vmem:[%s771 + $0x8] sm:$0xf]
      %v775 = vld [vmem:[%s771 + $0xc] sm:$0xf]
      %v776 = vld [vmem:[%s771 + $0x10] sm:$0xf]
      %v777 = vld [vmem:[%s771 + $0x14] sm:$0xf]
      %v778 = vld [vmem:[%s771 + $0x18] sm:$0xf]
      %v779 = vld [vmem:[%s771 + $0x1c] sm:$0xf]
      %v812 = vunpack.c.l.b16 %v739
      %v813 = vunpack.c.l.b16 %v740
      %v814 = vunpack.c.l.b16 %v741
      %v815 = vunpack.c.l.b16 %v742
      %v816 = vunpack.c.l.b16 %v743
      %v817 = vunpack.c.l.b16 %v744
      %v818 = vunpack.c.l.b16 %v745
      %v819 = vunpack.c.l.b16 %v746
      %v820 = vunpack.c.l.b16 %v747
      %v821 = vunpack.c.l.b16 %v748
      %v822 = vunpack.c.l.b16 %v749
      %v823 = vunpack.c.l.b16 %v750
      %v824 = vunpack.c.l.b16 %v751
      %v825 = vunpack.c.l.b16 %v752
      %v826 = vunpack.c.l.b16 %v753
      %v827 = vunpack.c.l.b16 %v754
      %v828 = vunpack.c.l.b16 %v755
      %v829 = vunpack.c.l.b16 %v756
      %v830 = vunpack.c.l.b16 %v757
      %v831 = vunpack.c.l.b16 %v758
      %v832 = vunpack.c.l.b16 %v759
      %v833 = vunpack.c.l.b16 %v760
      %v834 = vunpack.c.l.b16 %v761
      %v835 = vunpack.c.l.b16 %v762
      %v836 = vunpack.c.l.b16 %v763
      %v837 = vunpack.c.l.b16 %v764
      %v838 = vunpack.c.l.b16 %v765
      %v839 = vunpack.c.l.b16 %v766
      %v840 = vunpack.c.l.b16 %v767
      %v841 = vunpack.c.l.b16 %v768
      %v842 = vunpack.c.l.b16 %v769
      %v843 = vunpack.c.l.b16 %v770
      %v844 = vpack.c.b16 %v813, %v812
      %v845 = vpack.c.b16 %v815, %v814
      %v846 = vpack.c.b16 %v817, %v816
      %v847 = vpack.c.b16 %v819, %v818
      %v848 = vpack.c.b16 %v821, %v820
      %v849 = vpack.c.b16 %v823, %v822
      %v850 = vpack.c.b16 %v825, %v824
      %v851 = vpack.c.b16 %v827, %v826
      %v852 = vpack.c.b16 %v829, %v828
      %v853 = vpack.c.b16 %v831, %v830
      %v854 = vpack.c.b16 %v833, %v832
      %v855 = vpack.c.b16 %v835, %v834
      %v856 = vpack.c.b16 %v837, %v836
      %v857 = vpack.c.b16 %v839, %v838
      %v858 = vpack.c.b16 %v841, %v840
      %v859 = vpack.c.b16 %v843, %v842
      %v868 = vunpack.c.l.b16 %v772
      %v869 = vunpack.c.l.b16 %v773
      %v870 = vunpack.c.l.b16 %v774
      %v871 = vunpack.c.l.b16 %v775
      %v872 = vunpack.c.l.b16 %v776
      %v873 = vunpack.c.l.b16 %v777
      %v874 = vunpack.c.l.b16 %v778
      %v875 = vunpack.c.l.b16 %v779
      %v876 = vpack.c.b16 %v869, %v868
      %v877 = vpack.c.b16 %v871, %v870
      %v878 = vpack.c.b16 %v873, %v872
      %v879 = vpack.c.b16 %v875, %v874
      %v885 = vsel %vm359, %v844, 0
      %v888 = vsel %vm359, %v845, 0
      %v891 = vsel %vm359, %v846, 0
      %v894 = vsel %vm359, %v847, 0
      %v897 = vsel %vm359, %v848, 0
      %v900 = vsel %vm359, %v849, 0
      %v903 = vsel %vm359, %v850, 0
      %v906 = vsel %vm359, %v851, 0
      %v909 = vsel %vm359, %v852, 0
      %v912 = vsel %vm359, %v853, 0
      %v915 = vsel %vm359, %v854, 0
      %v918 = vsel %vm359, %v855, 0
      %v921 = vsel %vm359, %v856, 0
      %v924 = vsel %vm359, %v857, 0
      %v927 = vsel %vm359, %v858, 0
      %v930 = vsel %vm359, %v859, 0
      %932 = vmatpush.bf16.msra.mxu0 0
      %933 = vmatpush.bf16.msra.mxu0 0
      %934 = vmatpush.bf16.msra.mxu0 0
      %935 = vmatpush.bf16.msra.mxu0 0
      %936 = vmatpush.bf16.msra.mxu0 %v879
      %937 = vmatpush.bf16.msra.mxu0 %v878
      %938 = vmatpush.bf16.msra.mxu0 %v877
      %939 = vmatpush.bf16.msra.mxu0 %v876
      %940 = vmatmul.bf16.gmra.mxu0 %v885
      %v941 = vpop.f32.mrf.mxu0
      %v942 = vadd.f32 0.0, %v941
      %v943 = vpop.f32.mrf.mxu0
      %v944 = vadd.f32 0.0, %v943
      %945 = vmatmul.bf16.gmra.mxu0 %v888
      %v946 = vpop.f32.mrf.mxu0
      %v947 = vadd.f32 0.0, %v946
      %v948 = vpop.f32.mrf.mxu0
      %v949 = vadd.f32 0.0, %v948
      %950 = vmatmul.bf16.gmra.mxu0 %v891
      %v951 = vpop.f32.mrf.mxu0
      %v952 = vadd.f32 0.0, %v951
      %v953 = vpop.f32.mrf.mxu0
      %v954 = vadd.f32 0.0, %v953
      %955 = vmatmul.bf16.gmra.mxu0 %v894
      %v956 = vpop.f32.mrf.mxu0
      %v957 = vadd.f32 0.0, %v956
      %v958 = vpop.f32.mrf.mxu0
      %v959 = vadd.f32 0.0, %v958
      %960 = vmatmul.bf16.gmra.mxu0 %v897
      %v961 = vpop.f32.mrf.mxu0
      %v962 = vadd.f32 0.0, %v961
      %v963 = vpop.f32.mrf.mxu0
      %v964 = vadd.f32 0.0, %v963
      %965 = vmatmul.bf16.gmra.mxu0 %v900
      %v966 = vpop.f32.mrf.mxu0
      %v967 = vadd.f32 0.0, %v966
      %v968 = vpop.f32.mrf.mxu0
      %v969 = vadd.f32 0.0, %v968
      %970 = vmatmul.bf16.gmra.mxu0 %v903
      %v971 = vpop.f32.mrf.mxu0
      %v972 = vadd.f32 0.0, %v971
      %v973 = vpop.f32.mrf.mxu0
      %v974 = vadd.f32 0.0, %v973
      %975 = vmatmul.bf16.gmra.mxu0 %v906
      %v976 = vpop.f32.mrf.mxu0
      %v977 = vadd.f32 0.0, %v976
      %v978 = vpop.f32.mrf.mxu0
      %v979 = vadd.f32 0.0, %v978
      %980 = vmatmul.bf16.gmra.mxu0 %v909
      %v981 = vpop.f32.mrf.mxu0
      %v982 = vadd.f32 0.0, %v981
      %v983 = vpop.f32.mrf.mxu0
      %v984 = vadd.f32 0.0, %v983
      %985 = vmatmul.bf16.gmra.mxu0 %v912
      %v986 = vpop.f32.mrf.mxu0
      %v987 = vadd.f32 0.0, %v986
      %v988 = vpop.f32.mrf.mxu0
      %v989 = vadd.f32 0.0, %v988
      %990 = vmatmul.bf16.gmra.mxu0 %v915
      %v991 = vpop.f32.mrf.mxu0
      %v992 = vadd.f32 0.0, %v991
      %v993 = vpop.f32.mrf.mxu0
      %v994 = vadd.f32 0.0, %v993
      %995 = vmatmul.bf16.gmra.mxu0 %v918
      %v996 = vpop.f32.mrf.mxu0
      %v997 = vadd.f32 0.0, %v996
      %v998 = vpop.f32.mrf.mxu0
      %v999 = vadd.f32 0.0, %v998
      %1000 = vmatmul.bf16.gmra.mxu0 %v921
      %v1001 = vpop.f32.mrf.mxu0
      %v1002 = vadd.f32 0.0, %v1001
      %v1003 = vpop.f32.mrf.mxu0
      %v1004 = vadd.f32 0.0, %v1003
      %1005 = vmatmul.bf16.gmra.mxu0 %v924
      %v1006 = vpop.f32.mrf.mxu0
      %v1007 = vadd.f32 0.0, %v1006
      %v1008 = vpop.f32.mrf.mxu0
      %v1009 = vadd.f32 0.0, %v1008
      %1010 = vmatmul.bf16.gmra.mxu0 %v927
      %v1011 = vpop.f32.mrf.mxu0
      %v1012 = vadd.f32 0.0, %v1011
      %v1013 = vpop.f32.mrf.mxu0
      %v1014 = vadd.f32 0.0, %v1013
      %1015 = vmatmul.bf16.gmra.mxu0 %v930
      %v1016 = vpop.f32.mrf.mxu0
      %v1017 = vadd.f32 0.0, %v1016
      %v1018 = vpop.f32.mrf.mxu0
      %v1019 = vadd.f32 0.0, %v1018
      %1020 = vdwg.mxu0
      %v1021 = vadd.f32 %v659, %v942
      %v1022 = vadd.f32 %v661, %v944
      %v1023 = vadd.f32 %v664, %v947
      %v1024 = vadd.f32 %v666, %v949
      %v1025 = vadd.f32 %v669, %v952
      %v1026 = vadd.f32 %v671, %v954
      %v1027 = vadd.f32 %v674, %v957
      %v1028 = vadd.f32 %v676, %v959
      %v1029 = vadd.f32 %v679, %v962
      %v1030 = vadd.f32 %v681, %v964
      %v1031 = vadd.f32 %v684, %v967
      %v1032 = vadd.f32 %v686, %v969
      %v1033 = vadd.f32 %v689, %v972
      %v1034 = vadd.f32 %v691, %v974
      %v1035 = vadd.f32 %v694, %v977
      %v1036 = vadd.f32 %v696, %v979
      %v1037 = vadd.f32 %v699, %v982
      %v1038 = vadd.f32 %v701, %v984
      %v1039 = vadd.f32 %v704, %v987
      %v1040 = vadd.f32 %v706, %v989
      %v1041 = vadd.f32 %v709, %v992
      %v1042 = vadd.f32 %v711, %v994
      %v1043 = vadd.f32 %v714, %v997
      %v1044 = vadd.f32 %v716, %v999
      %v1045 = vadd.f32 %v719, %v1002
      %v1046 = vadd.f32 %v721, %v1004
      %v1047 = vadd.f32 %v724, %v1007
      %v1048 = vadd.f32 %v726, %v1009
      %v1049 = vadd.f32 %v729, %v1012
      %v1050 = vadd.f32 %v731, %v1014
      %v1051 = vadd.f32 %v734, %v1017
      %v1052 = vadd.f32 %v736, %v1019
      %v1053 = vld [vmem:[%s165 + $0x8] sm:$0xf]
      %v1054 = vld [vmem:[%s165 + $0xc] sm:$0xf]
      %v1055 = vld [vmem:[%s165 + $0x10] sm:$0xf]
      %v1056 = vld [vmem:[%s165 + $0x14] sm:$0xf]
      %v1057 = vld [vmem:[%s165 + $0x18] sm:$0xf]
      %v1058 = vld [vmem:[%s165 + $0x1c] sm:$0xf]
      %v1059 = vld [vmem:[%s165 + $0x20] sm:$0xf]
      %v1060 = vld [vmem:[%s165 + $0x24] sm:$0xf]
      %v1061 = vld [vmem:[%s165 + $0x28] sm:$0xf]
      %v1062 = vld [vmem:[%s165 + $0x2c] sm:$0xf]
      %v1063 = vld [vmem:[%s165 + $0x30] sm:$0xf]
      %v1064 = vld [vmem:[%s165 + $0x34] sm:$0xf]
      %v1065 = vld [vmem:[%s165 + $0x38] sm:$0xf]
      %v1066 = vld [vmem:[%s165 + $0x3c] sm:$0xf]
      %v1067 = vld [vmem:[%s165 + $0x40] sm:$0xf]
      %v1068 = vld [vmem:[%s165 + $0x44] sm:$0xf]
      %v1069 = vld [vmem:[%s165 + $0x48] sm:$0xf]
      %v1070 = vld [vmem:[%s165 + $0x4c] sm:$0xf]
      %v1071 = vld [vmem:[%s165 + $0x50] sm:$0xf]
      %v1072 = vld [vmem:[%s165 + $0x54] sm:$0xf]
      %v1073 = vld [vmem:[%s165 + $0x58] sm:$0xf]
      %v1074 = vld [vmem:[%s165 + $0x5c] sm:$0xf]
      %v1075 = vld [vmem:[%s165 + $0x60] sm:$0xf]
      %v1076 = vld [vmem:[%s165 + $0x64] sm:$0xf]
      %v1077 = vld [vmem:[%s165 + $0x68] sm:$0xf]
      %v1078 = vld [vmem:[%s165 + $0x6c] sm:$0xf]
      %v1079 = vld [vmem:[%s165 + $0x70] sm:$0xf]
      %v1080 = vld [vmem:[%s165 + $0x74] sm:$0xf]
      %v1081 = vld [vmem:[%s165 + $0x78] sm:$0xf]
      %v1082 = vld [vmem:[%s165 + $0x7c] sm:$0xf]
      %v1083 = vld [vmem:[%s165 + $0x80] sm:$0xf]
      %v1084 = vld [vmem:[%s165 + $0x84] sm:$0xf]
      %s1085 = scalar_lea.vmem %s1, 96
      %v1086 = vld [vmem:[%s1085] sm:$0xf]
      %v1087 = vld [vmem:[%s1085 + $0x4] sm:$0xf]
      %v1088 = vld [vmem:[%s1085 + $0x8] sm:$0xf]
      %v1089 = vld [vmem:[%s1085 + $0xc] sm:$0xf]
      %v1090 = vld [vmem:[%s1085 + $0x10] sm:$0xf]
      %v1091 = vld [vmem:[%s1085 + $0x14] sm:$0xf]
      %v1092 = vld [vmem:[%s1085 + $0x18] sm:$0xf]
      %v1093 = vld [vmem:[%s1085 + $0x1c] sm:$0xf]
      %v1126 = vunpack.c.l.b16 %v1053
      %v1127 = vunpack.c.l.b16 %v1054
      %v1128 = vunpack.c.l.b16 %v1055
      %v1129 = vunpack.c.l.b16 %v1056
      %v1130 = vunpack.c.l.b16 %v1057
      %v1131 = vunpack.c.l.b16 %v1058
      %v1132 = vunpack.c.l.b16 %v1059
      %v1133 = vunpack.c.l.b16 %v1060
      %v1134 = vunpack.c.l.b16 %v1061
      %v1135 = vunpack.c.l.b16 %v1062
      %v1136 = vunpack.c.l.b16 %v1063
      %v1137 = vunpack.c.l.b16 %v1064
      %v1138 = vunpack.c.l.b16 %v1065
      %v1139 = vunpack.c.l.b16 %v1066
      %v1140 = vunpack.c.l.b16 %v1067
      %v1141 = vunpack.c.l.b16 %v1068
      %v1142 = vunpack.c.l.b16 %v1069
      %v1143 = vunpack.c.l.b16 %v1070
      %v1144 = vunpack.c.l.b16 %v1071
      %v1145 = vunpack.c.l.b16 %v1072
      %v1146 = vunpack.c.l.b16 %v1073
      %v1147 = vunpack.c.l.b16 %v1074
      %v1148 = vunpack.c.l.b16 %v1075
      %v1149 = vunpack.c.l.b16 %v1076
      %v1150 = vunpack.c.l.b16 %v1077
      %v1151 = vunpack.c.l.b16 %v1078
      %v1152 = vunpack.c.l.b16 %v1079
      %v1153 = vunpack.c.l.b16 %v1080
      %v1154 = vunpack.c.l.b16 %v1081
      %v1155 = vunpack.c.l.b16 %v1082
      %v1156 = vunpack.c.l.b16 %v1083
      %v1157 = vunpack.c.l.b16 %v1084
      %v1158 = vpack.c.b16 %v1127, %v1126
      %v1159 = vpack.c.b16 %v1129, %v1128
      %v1160 = vpack.c.b16 %v1131, %v1130
      %v1161 = vpack.c.b16 %v1133, %v1132
      %v1162 = vpack.c.b16 %v1135, %v1134
      %v1163 = vpack.c.b16 %v1137, %v1136
      %v1164 = vpack.c.b16 %v1139, %v1138
      %v1165 = vpack.c.b16 %v1141, %v1140
      %v1166 = vpack.c.b16 %v1143, %v1142
      %v1167 = vpack.c.b16 %v1145, %v1144
      %v1168 = vpack.c.b16 %v1147, %v1146
      %v1169 = vpack.c.b16 %v1149, %v1148
      %v1170 = vpack.c.b16 %v1151, %v1150
      %v1171 = vpack.c.b16 %v1153, %v1152
      %v1172 = vpack.c.b16 %v1155, %v1154
      %v1173 = vpack.c.b16 %v1157, %v1156
      %v1182 = vunpack.c.l.b16 %v1086
      %v1183 = vunpack.c.l.b16 %v1087
      %v1184 = vunpack.c.l.b16 %v1088
      %v1185 = vunpack.c.l.b16 %v1089
      %v1186 = vunpack.c.l.b16 %v1090
      %v1187 = vunpack.c.l.b16 %v1091
      %v1188 = vunpack.c.l.b16 %v1092
      %v1189 = vunpack.c.l.b16 %v1093
      %v1190 = vpack.c.b16 %v1183, %v1182
      %v1191 = vpack.c.b16 %v1185, %v1184
      %v1192 = vpack.c.b16 %v1187, %v1186
      %v1193 = vpack.c.b16 %v1189, %v1188
      %v1199 = vsel %vm359, %v1158, 0
      %v1202 = vsel %vm359, %v1159, 0
      %v1205 = vsel %vm359, %v1160, 0
      %v1208 = vsel %vm359, %v1161, 0
      %v1211 = vsel %vm359, %v1162, 0
      %v1214 = vsel %vm359, %v1163, 0
      %v1217 = vsel %vm359, %v1164, 0
      %v1220 = vsel %vm359, %v1165, 0
      %v1223 = vsel %vm359, %v1166, 0
      %v1226 = vsel %vm359, %v1167, 0
      %v1229 = vsel %vm359, %v1168, 0
      %v1232 = vsel %vm359, %v1169, 0
      %v1235 = vsel %vm359, %v1170, 0
      %v1238 = vsel %vm359, %v1171, 0
      %v1241 = vsel %vm359, %v1172, 0
      %v1244 = vsel %vm359, %v1173, 0
      %1246 = vmatpush.bf16.msra.mxu0 0
      %1247 = vmatpush.bf16.msra.mxu0 0
      %1248 = vmatpush.bf16.msra.mxu0 0
      %1249 = vmatpush.bf16.msra.mxu0 0
      %1250 = vmatpush.bf16.msra.mxu0 %v1193
      %1251 = vmatpush.bf16.msra.mxu0 %v1192
      %1252 = vmatpush.bf16.msra.mxu0 %v1191
      %1253 = vmatpush.bf16.msra.mxu0 %v1190
      %1254 = vmatmul.bf16.gmra.mxu0 %v1199
      %v1255 = vpop.f32.mrf.mxu0
      %v1256 = vadd.f32 0.0, %v1255
      %v1257 = vpop.f32.mrf.mxu0
      %v1258 = vadd.f32 0.0, %v1257
      %1259 = vmatmul.bf16.gmra.mxu0 %v1202
      %v1260 = vpop.f32.mrf.mxu0
      %v1261 = vadd.f32 0.0, %v1260
      %v1262 = vpop.f32.mrf.mxu0
      %v1263 = vadd.f32 0.0, %v1262
      %1264 = vmatmul.bf16.gmra.mxu0 %v1205
      %v1265 = vpop.f32.mrf.mxu0
      %v1266 = vadd.f32 0.0, %v1265
      %v1267 = vpop.f32.mrf.mxu0
      %v1268 = vadd.f32 0.0, %v1267
      %1269 = vmatmul.bf16.gmra.mxu0 %v1208
      %v1270 = vpop.f32.mrf.mxu0
      %v1271 = vadd.f32 0.0, %v1270
      %v1272 = vpop.f32.mrf.mxu0
      %v1273 = vadd.f32 0.0, %v1272
      %1274 = vmatmul.bf16.gmra.mxu0 %v1211
      %v1275 = vpop.f32.mrf.mxu0
      %v1276 = vadd.f32 0.0, %v1275
      %v1277 = vpop.f32.mrf.mxu0
      %v1278 = vadd.f32 0.0, %v1277
      %1279 = vmatmul.bf16.gmra.mxu0 %v1214
      %v1280 = vpop.f32.mrf.mxu0
      %v1281 = vadd.f32 0.0, %v1280
      %v1282 = vpop.f32.mrf.mxu0
      %v1283 = vadd.f32 0.0, %v1282
      %1284 = vmatmul.bf16.gmra.mxu0 %v1217
      %v1285 = vpop.f32.mrf.mxu0
      %v1286 = vadd.f32 0.0, %v1285
      %v1287 = vpop.f32.mrf.mxu0
      %v1288 = vadd.f32 0.0, %v1287
      %1289 = vmatmul.bf16.gmra.mxu0 %v1220
      %v1290 = vpop.f32.mrf.mxu0
      %v1291 = vadd.f32 0.0, %v1290
      %v1292 = vpop.f32.mrf.mxu0
      %v1293 = vadd.f32 0.0, %v1292
      %1294 = vmatmul.bf16.gmra.mxu0 %v1223
      %v1295 = vpop.f32.mrf.mxu0
      %v1296 = vadd.f32 0.0, %v1295
      %v1297 = vpop.f32.mrf.mxu0
      %v1298 = vadd.f32 0.0, %v1297
      %1299 = vmatmul.bf16.gmra.mxu0 %v1226
      %v1300 = vpop.f32.mrf.mxu0
      %v1301 = vadd.f32 0.0, %v1300
      %v1302 = vpop.f32.mrf.mxu0
      %v1303 = vadd.f32 0.0, %v1302
      %1304 = vmatmul.bf16.gmra.mxu0 %v1229
      %v1305 = vpop.f32.mrf.mxu0
      %v1306 = vadd.f32 0.0, %v1305
      %v1307 = vpop.f32.mrf.mxu0
      %v1308 = vadd.f32 0.0, %v1307
      %1309 = vmatmul.bf16.gmra.mxu0 %v1232
      %v1310 = vpop.f32.mrf.mxu0
      %v1311 = vadd.f32 0.0, %v1310
      %v1312 = vpop.f32.mrf.mxu0
      %v1313 = vadd.f32 0.0, %v1312
      %1314 = vmatmul.bf16.gmra.mxu0 %v1235
      %v1315 = vpop.f32.mrf.mxu0
      %v1316 = vadd.f32 0.0, %v1315
      %v1317 = vpop.f32.mrf.mxu0
      %v1318 = vadd.f32 0.0, %v1317
      %1319 = vmatmul.bf16.gmra.mxu0 %v1238
      %v1320 = vpop.f32.mrf.mxu0
      %v1321 = vadd.f32 0.0, %v1320
      %v1322 = vpop.f32.mrf.mxu0
      %v1323 = vadd.f32 0.0, %v1322
      %1324 = vmatmul.bf16.gmra.mxu0 %v1241
      %v1325 = vpop.f32.mrf.mxu0
      %v1326 = vadd.f32 0.0, %v1325
      %v1327 = vpop.f32.mrf.mxu0
      %v1328 = vadd.f32 0.0, %v1327
      %1329 = vmatmul.bf16.gmra.mxu0 %v1244
      %v1330 = vpop.f32.mrf.mxu0
      %v1331 = vadd.f32 0.0, %v1330
      %v1332 = vpop.f32.mrf.mxu0
      %v1333 = vadd.f32 0.0, %v1332
      %1334 = vdwg.mxu0
      %v1335 = vadd.f32 %v1021, %v1256
      %v1336 = vadd.f32 %v1022, %v1258
      %v1337 = vadd.f32 %v1023, %v1261
      %v1338 = vadd.f32 %v1024, %v1263
      %v1339 = vadd.f32 %v1025, %v1266
      %v1340 = vadd.f32 %v1026, %v1268
      %v1341 = vadd.f32 %v1027, %v1271
      %v1342 = vadd.f32 %v1028, %v1273
      %v1343 = vadd.f32 %v1029, %v1276
      %v1344 = vadd.f32 %v1030, %v1278
      %v1345 = vadd.f32 %v1031, %v1281
      %v1346 = vadd.f32 %v1032, %v1283
      %v1347 = vadd.f32 %v1033, %v1286
      %v1348 = vadd.f32 %v1034, %v1288
      %v1349 = vadd.f32 %v1035, %v1291
      %v1350 = vadd.f32 %v1036, %v1293
      %v1351 = vadd.f32 %v1037, %v1296
      %v1352 = vadd.f32 %v1038, %v1298
      %v1353 = vadd.f32 %v1039, %v1301
      %v1354 = vadd.f32 %v1040, %v1303
      %v1355 = vadd.f32 %v1041, %v1306
      %v1356 = vadd.f32 %v1042, %v1308
      %v1357 = vadd.f32 %v1043, %v1311
      %v1358 = vadd.f32 %v1044, %v1313
      %v1359 = vadd.f32 %v1045, %v1316
      %v1360 = vadd.f32 %v1046, %v1318
      %v1361 = vadd.f32 %v1047, %v1321
      %v1362 = vadd.f32 %v1048, %v1323
      %v1363 = vadd.f32 %v1049, %v1326
      %v1364 = vadd.f32 %v1050, %v1328
      %v1365 = vadd.f32 %v1051, %v1331
      %v1366 = vadd.f32 %v1052, %v1333
      %v1367 = vld [vmem:[%s213 + $0x8] sm:$0xf]
      %v1368 = vld [vmem:[%s213 + $0xc] sm:$0xf]
      %v1369 = vld [vmem:[%s213 + $0x10] sm:$0xf]
      %v1370 = vld [vmem:[%s213 + $0x14] sm:$0xf]
      %v1371 = vld [vmem:[%s213 + $0x18] sm:$0xf]
      %v1372 = vld [vmem:[%s213 + $0x1c] sm:$0xf]
      %v1373 = vld [vmem:[%s213 + $0x20] sm:$0xf]
      %v1374 = vld [vmem:[%s213 + $0x24] sm:$0xf]
      %v1375 = vld [vmem:[%s213 + $0x28] sm:$0xf]
      %v1376 = vld [vmem:[%s213 + $0x2c] sm:$0xf]
      %v1377 = vld [vmem:[%s213 + $0x30] sm:$0xf]
      %v1378 = vld [vmem:[%s213 + $0x34] sm:$0xf]
      %v1379 = vld [vmem:[%s213 + $0x38] sm:$0xf]
      %v1380 = vld [vmem:[%s213 + $0x3c] sm:$0xf]
      %v1381 = vld [vmem:[%s213 + $0x40] sm:$0xf]
      %v1382 = vld [vmem:[%s213 + $0x44] sm:$0xf]
      %v1383 = vld [vmem:[%s213 + $0x48] sm:$0xf]
      %v1384 = vld [vmem:[%s213 + $0x4c] sm:$0xf]
      %v1385 = vld [vmem:[%s213 + $0x50] sm:$0xf]
      %v1386 = vld [vmem:[%s213 + $0x54] sm:$0xf]
      %v1387 = vld [vmem:[%s213 + $0x58] sm:$0xf]
      %v1388 = vld [vmem:[%s213 + $0x5c] sm:$0xf]
      %v1389 = vld [vmem:[%s213 + $0x60] sm:$0xf]
      %v1390 = vld [vmem:[%s213 + $0x64] sm:$0xf]
      %v1391 = vld [vmem:[%s213 + $0x68] sm:$0xf]
      %v1392 = vld [vmem:[%s213 + $0x6c] sm:$0xf]
      %v1393 = vld [vmem:[%s213 + $0x70] sm:$0xf]
      %v1394 = vld [vmem:[%s213 + $0x74] sm:$0xf]
      %v1395 = vld [vmem:[%s213 + $0x78] sm:$0xf]
      %v1396 = vld [vmem:[%s213 + $0x7c] sm:$0xf]
      %v1397 = vld [vmem:[%s213 + $0x80] sm:$0xf]
      %v1398 = vld [vmem:[%s213 + $0x84] sm:$0xf]
      %s1399 = scalar_lea.vmem %s1, 128
      %v1400 = vld [vmem:[%s1399] sm:$0xf]
      %v1401 = vld [vmem:[%s1399 + $0x4] sm:$0xf]
      %v1402 = vld [vmem:[%s1399 + $0x8] sm:$0xf]
      %v1403 = vld [vmem:[%s1399 + $0xc] sm:$0xf]
      %v1404 = vld [vmem:[%s1399 + $0x10] sm:$0xf]
      %v1405 = vld [vmem:[%s1399 + $0x14] sm:$0xf]
      %v1406 = vld [vmem:[%s1399 + $0x18] sm:$0xf]
      %v1407 = vld [vmem:[%s1399 + $0x1c] sm:$0xf]
      %v1440 = vunpack.c.l.b16 %v1367
      %v1441 = vunpack.c.l.b16 %v1368
      %v1442 = vunpack.c.l.b16 %v1369
      %v1443 = vunpack.c.l.b16 %v1370
      %v1444 = vunpack.c.l.b16 %v1371
      %v1445 = vunpack.c.l.b16 %v1372
      %v1446 = vunpack.c.l.b16 %v1373
      %v1447 = vunpack.c.l.b16 %v1374
      %v1448 = vunpack.c.l.b16 %v1375
      %v1449 = vunpack.c.l.b16 %v1376
      %v1450 = vunpack.c.l.b16 %v1377
      %v1451 = vunpack.c.l.b16 %v1378
      %v1452 = vunpack.c.l.b16 %v1379
      %v1453 = vunpack.c.l.b16 %v1380
      %v1454 = vunpack.c.l.b16 %v1381
      %v1455 = vunpack.c.l.b16 %v1382
      %v1456 = vunpack.c.l.b16 %v1383
      %v1457 = vunpack.c.l.b16 %v1384
      %v1458 = vunpack.c.l.b16 %v1385
      %v1459 = vunpack.c.l.b16 %v1386
      %v1460 = vunpack.c.l.b16 %v1387
      %v1461 = vunpack.c.l.b16 %v1388
      %v1462 = vunpack.c.l.b16 %v1389
      %v1463 = vunpack.c.l.b16 %v1390
      %v1464 = vunpack.c.l.b16 %v1391
      %v1465 = vunpack.c.l.b16 %v1392
      %v1466 = vunpack.c.l.b16 %v1393
      %v1467 = vunpack.c.l.b16 %v1394
      %v1468 = vunpack.c.l.b16 %v1395
      %v1469 = vunpack.c.l.b16 %v1396
      %v1470 = vunpack.c.l.b16 %v1397
      %v1471 = vunpack.c.l.b16 %v1398
      %v1472 = vpack.c.b16 %v1441, %v1440
      %v1473 = vpack.c.b16 %v1443, %v1442
      %v1474 = vpack.c.b16 %v1445, %v1444
      %v1475 = vpack.c.b16 %v1447, %v1446
      %v1476 = vpack.c.b16 %v1449, %v1448
      %v1477 = vpack.c.b16 %v1451, %v1450
      %v1478 = vpack.c.b16 %v1453, %v1452
      %v1479 = vpack.c.b16 %v1455, %v1454
      %v1480 = vpack.c.b16 %v1457, %v1456
      %v1481 = vpack.c.b16 %v1459, %v1458
      %v1482 = vpack.c.b16 %v1461, %v1460
      %v1483 = vpack.c.b16 %v1463, %v1462
      %v1484 = vpack.c.b16 %v1465, %v1464
      %v1485 = vpack.c.b16 %v1467, %v1466
      %v1486 = vpack.c.b16 %v1469, %v1468
      %v1487 = vpack.c.b16 %v1471, %v1470
      %v1496 = vunpack.c.l.b16 %v1400
      %v1497 = vunpack.c.l.b16 %v1401
      %v1498 = vunpack.c.l.b16 %v1402
      %v1499 = vunpack.c.l.b16 %v1403
      %v1500 = vunpack.c.l.b16 %v1404
      %v1501 = vunpack.c.l.b16 %v1405
      %v1502 = vunpack.c.l.b16 %v1406
      %v1503 = vunpack.c.l.b16 %v1407
      %v1504 = vpack.c.b16 %v1497, %v1496
      %v1505 = vpack.c.b16 %v1499, %v1498
      %v1506 = vpack.c.b16 %v1501, %v1500
      %v1507 = vpack.c.b16 %v1503, %v1502
      %v1513 = vsel %vm359, %v1472, 0
      %v1516 = vsel %vm359, %v1473, 0
      %v1519 = vsel %vm359, %v1474, 0
      %v1522 = vsel %vm359, %v1475, 0
      %v1525 = vsel %vm359, %v1476, 0
      %v1528 = vsel %vm359, %v1477, 0
      %v1531 = vsel %vm359, %v1478, 0
      %v1534 = vsel %vm359, %v1479, 0
      %v1537 = vsel %vm359, %v1480, 0
      %v1540 = vsel %vm359, %v1481, 0
      %v1543 = vsel %vm359, %v1482, 0
      %v1546 = vsel %vm359, %v1483, 0
      %v1549 = vsel %vm359, %v1484, 0
      %v1552 = vsel %vm359, %v1485, 0
      %v1555 = vsel %vm359, %v1486, 0
      %v1558 = vsel %vm359, %v1487, 0
      %1560 = vmatpush.bf16.msra.mxu0 0
      %1561 = vmatpush.bf16.msra.mxu0 0
      %1562 = vmatpush.bf16.msra.mxu0 0
      %1563 = vmatpush.bf16.msra.mxu0 0
      %1564 = vmatpush.bf16.msra.mxu0 %v1507
      %1565 = vmatpush.bf16.msra.mxu0 %v1506
      %1566 = vmatpush.bf16.msra.mxu0 %v1505
      %1567 = vmatpush.bf16.msra.mxu0 %v1504
      %1568 = vmatmul.bf16.gmra.mxu0 %v1513
      %v1569 = vpop.f32.mrf.mxu0
      %v1570 = vadd.f32 0.0, %v1569
      %v1571 = vpop.f32.mrf.mxu0
      %v1572 = vadd.f32 0.0, %v1571
      %1573 = vmatmul.bf16.gmra.mxu0 %v1516
      %v1574 = vpop.f32.mrf.mxu0
      %v1575 = vadd.f32 0.0, %v1574
      %v1576 = vpop.f32.mrf.mxu0
      %v1577 = vadd.f32 0.0, %v1576
      %1578 = vmatmul.bf16.gmra.mxu0 %v1519
      %v1579 = vpop.f32.mrf.mxu0
      %v1580 = vadd.f32 0.0, %v1579
      %v1581 = vpop.f32.mrf.mxu0
      %v1582 = vadd.f32 0.0, %v1581
      %1583 = vmatmul.bf16.gmra.mxu0 %v1522
      %v1584 = vpop.f32.mrf.mxu0
      %v1585 = vadd.f32 0.0, %v1584
      %v1586 = vpop.f32.mrf.mxu0
      %v1587 = vadd.f32 0.0, %v1586
      %1588 = vmatmul.bf16.gmra.mxu0 %v1525
      %v1589 = vpop.f32.mrf.mxu0
      %v1590 = vadd.f32 0.0, %v1589
      %v1591 = vpop.f32.mrf.mxu0
      %v1592 = vadd.f32 0.0, %v1591
      %1593 = vmatmul.bf16.gmra.mxu0 %v1528
      %v1594 = vpop.f32.mrf.mxu0
      %v1595 = vadd.f32 0.0, %v1594
      %v1596 = vpop.f32.mrf.mxu0
      %v1597 = vadd.f32 0.0, %v1596
      %1598 = vmatmul.bf16.gmra.mxu0 %v1531
      %v1599 = vpop.f32.mrf.mxu0
      %v1600 = vadd.f32 0.0, %v1599
      %v1601 = vpop.f32.mrf.mxu0
      %v1602 = vadd.f32 0.0, %v1601
      %1603 = vmatmul.bf16.gmra.mxu0 %v1534
      %v1604 = vpop.f32.mrf.mxu0
      %v1605 = vadd.f32 0.0, %v1604
      %v1606 = vpop.f32.mrf.mxu0
      %v1607 = vadd.f32 0.0, %v1606
      %1608 = vmatmul.bf16.gmra.mxu0 %v1537
      %v1609 = vpop.f32.mrf.mxu0
      %v1610 = vadd.f32 0.0, %v1609
      %v1611 = vpop.f32.mrf.mxu0
      %v1612 = vadd.f32 0.0, %v1611
      %1613 = vmatmul.bf16.gmra.mxu0 %v1540
      %v1614 = vpop.f32.mrf.mxu0
      %v1615 = vadd.f32 0.0, %v1614
      %v1616 = vpop.f32.mrf.mxu0
      %v1617 = vadd.f32 0.0, %v1616
      %1618 = vmatmul.bf16.gmra.mxu0 %v1543
      %v1619 = vpop.f32.mrf.mxu0
      %v1620 = vadd.f32 0.0, %v1619
      %v1621 = vpop.f32.mrf.mxu0
      %v1622 = vadd.f32 0.0, %v1621
      %1623 = vmatmul.bf16.gmra.mxu0 %v1546
      %v1624 = vpop.f32.mrf.mxu0
      %v1625 = vadd.f32 0.0, %v1624
      %v1626 = vpop.f32.mrf.mxu0
      %v1627 = vadd.f32 0.0, %v1626
      %1628 = vmatmul.bf16.gmra.mxu0 %v1549
      %v1629 = vpop.f32.mrf.mxu0
      %v1630 = vadd.f32 0.0, %v1629
      %v1631 = vpop.f32.mrf.mxu0
      %v1632 = vadd.f32 0.0, %v1631
      %1633 = vmatmul.bf16.gmra.mxu0 %v1552
      %v1634 = vpop.f32.mrf.mxu0
      %v1635 = vadd.f32 0.0, %v1634
      %v1636 = vpop.f32.mrf.mxu0
      %v1637 = vadd.f32 0.0, %v1636
      %1638 = vmatmul.bf16.gmra.mxu0 %v1555
      %v1639 = vpop.f32.mrf.mxu0
      %v1640 = vadd.f32 0.0, %v1639
      %v1641 = vpop.f32.mrf.mxu0
      %v1642 = vadd.f32 0.0, %v1641
      %1643 = vmatmul.bf16.gmra.mxu0 %v1558
      %v1644 = vpop.f32.mrf.mxu0
      %v1645 = vadd.f32 0.0, %v1644
      %v1646 = vpop.f32.mrf.mxu0
      %v1647 = vadd.f32 0.0, %v1646
      %1648 = vdwg.mxu0
      %v1649 = vadd.f32 %v1335, %v1570
      %v1650 = vadd.f32 %v1336, %v1572
      %v1651 = vadd.f32 %v1337, %v1575
      %v1652 = vadd.f32 %v1338, %v1577
      %v1653 = vadd.f32 %v1339, %v1580
      %v1654 = vadd.f32 %v1340, %v1582
      %v1655 = vadd.f32 %v1341, %v1585
      %v1656 = vadd.f32 %v1342, %v1587
      %v1657 = vadd.f32 %v1343, %v1590
      %v1658 = vadd.f32 %v1344, %v1592
      %v1659 = vadd.f32 %v1345, %v1595
      %v1660 = vadd.f32 %v1346, %v1597
      %v1661 = vadd.f32 %v1347, %v1600
      %v1662 = vadd.f32 %v1348, %v1602
      %v1663 = vadd.f32 %v1349, %v1605
      %v1664 = vadd.f32 %v1350, %v1607
      %v1665 = vadd.f32 %v1351, %v1610
      %v1666 = vadd.f32 %v1352, %v1612
      %v1667 = vadd.f32 %v1353, %v1615
      %v1668 = vadd.f32 %v1354, %v1617
      %v1669 = vadd.f32 %v1355, %v1620
      %v1670 = vadd.f32 %v1356, %v1622
      %v1671 = vadd.f32 %v1357, %v1625
      %v1672 = vadd.f32 %v1358, %v1627
      %v1673 = vadd.f32 %v1359, %v1630
      %v1674 = vadd.f32 %v1360, %v1632
      %v1675 = vadd.f32 %v1361, %v1635
      %v1676 = vadd.f32 %v1362, %v1637
      %v1677 = vadd.f32 %v1363, %v1640
      %v1678 = vadd.f32 %v1364, %v1642
      %v1679 = vadd.f32 %v1365, %v1645
      %v1680 = vadd.f32 %v1366, %v1647
      %v1681 = vld [vmem:[%s738 + $0x8] sm:$0xf]
      %v1682 = vld [vmem:[%s738 + $0xc] sm:$0xf]
      %v1683 = vld [vmem:[%s738 + $0x10] sm:$0xf]
      %v1684 = vld [vmem:[%s738 + $0x14] sm:$0xf]
      %v1685 = vld [vmem:[%s738 + $0x18] sm:$0xf]
      %v1686 = vld [vmem:[%s738 + $0x1c] sm:$0xf]
      %v1687 = vld [vmem:[%s738 + $0x20] sm:$0xf]
      %v1688 = vld [vmem:[%s738 + $0x24] sm:$0xf]
      %v1689 = vld [vmem:[%s738 + $0x28] sm:$0xf]
      %v1690 = vld [vmem:[%s738 + $0x2c] sm:$0xf]
      %v1691 = vld [vmem:[%s738 + $0x30] sm:$0xf]
      %v1692 = vld [vmem:[%s738 + $0x34] sm:$0xf]
      %v1693 = vld [vmem:[%s738 + $0x38] sm:$0xf]
      %v1694 = vld [vmem:[%s738 + $0x3c] sm:$0xf]
      %v1695 = vld [vmem:[%s738 + $0x40] sm:$0xf]
      %v1696 = vld [vmem:[%s738 + $0x44] sm:$0xf]
      %v1697 = vld [vmem:[%s738 + $0x48] sm:$0xf]
      %v1698 = vld [vmem:[%s738 + $0x4c] sm:$0xf]
      %v1699 = vld [vmem:[%s738 + $0x50] sm:$0xf]
      %v1700 = vld [vmem:[%s738 + $0x54] sm:$0xf]
      %v1701 = vld [vmem:[%s738 + $0x58] sm:$0xf]
      %v1702 = vld [vmem:[%s738 + $0x5c] sm:$0xf]
      %v1703 = vld [vmem:[%s738 + $0x60] sm:$0xf]
      %v1704 = vld [vmem:[%s738 + $0x64] sm:$0xf]
      %v1705 = vld [vmem:[%s738 + $0x68] sm:$0xf]
      %v1706 = vld [vmem:[%s738 + $0x6c] sm:$0xf]
      %v1707 = vld [vmem:[%s738 + $0x70] sm:$0xf]
      %v1708 = vld [vmem:[%s738 + $0x74] sm:$0xf]
      %v1709 = vld [vmem:[%s738 + $0x78] sm:$0xf]
      %v1710 = vld [vmem:[%s738 + $0x7c] sm:$0xf]
      %v1711 = vld [vmem:[%s738 + $0x80] sm:$0xf]
      %v1712 = vld [vmem:[%s738 + $0x84] sm:$0xf]
      %s1713 = scalar_lea.vmem %s1, 160
      %v1714 = vld [vmem:[%s1713] sm:$0xf]
      %v1715 = vld [vmem:[%s1713 + $0x4] sm:$0xf]
      %v1716 = vld [vmem:[%s1713 + $0x8] sm:$0xf]
      %v1717 = vld [vmem:[%s1713 + $0xc] sm:$0xf]
      %v1718 = vld [vmem:[%s1713 + $0x10] sm:$0xf]
      %v1719 = vld [vmem:[%s1713 + $0x14] sm:$0xf]
      %v1720 = vld [vmem:[%s1713 + $0x18] sm:$0xf]
      %v1721 = vld [vmem:[%s1713 + $0x1c] sm:$0xf]
      %v1754 = vunpack.c.l.b16 %v1681
      %v1755 = vunpack.c.l.b16 %v1682
      %v1756 = vunpack.c.l.b16 %v1683
      %v1757 = vunpack.c.l.b16 %v1684
      %v1758 = vunpack.c.l.b16 %v1685
      %v1759 = vunpack.c.l.b16 %v1686
      %v1760 = vunpack.c.l.b16 %v1687
      %v1761 = vunpack.c.l.b16 %v1688
      %v1762 = vunpack.c.l.b16 %v1689
      %v1763 = vunpack.c.l.b16 %v1690
      %v1764 = vunpack.c.l.b16 %v1691
      %v1765 = vunpack.c.l.b16 %v1692
      %v1766 = vunpack.c.l.b16 %v1693
      %v1767 = vunpack.c.l.b16 %v1694
      %v1768 = vunpack.c.l.b16 %v1695
      %v1769 = vunpack.c.l.b16 %v1696
      %v1770 = vunpack.c.l.b16 %v1697
      %v1771 = vunpack.c.l.b16 %v1698
      %v1772 = vunpack.c.l.b16 %v1699
      %v1773 = vunpack.c.l.b16 %v1700
      %v1774 = vunpack.c.l.b16 %v1701
      %v1775 = vunpack.c.l.b16 %v1702
      %v1776 = vunpack.c.l.b16 %v1703
      %v1777 = vunpack.c.l.b16 %v1704
      %v1778 = vunpack.c.l.b16 %v1705
      %v1779 = vunpack.c.l.b16 %v1706
      %v1780 = vunpack.c.l.b16 %v1707
      %v1781 = vunpack.c.l.b16 %v1708
      %v1782 = vunpack.c.l.b16 %v1709
      %v1783 = vunpack.c.l.b16 %v1710
      %v1784 = vunpack.c.l.b16 %v1711
      %v1785 = vunpack.c.l.b16 %v1712
      %v1786 = vpack.c.b16 %v1755, %v1754
      %v1787 = vpack.c.b16 %v1757, %v1756
      %v1788 = vpack.c.b16 %v1759, %v1758
      %v1789 = vpack.c.b16 %v1761, %v1760
      %v1790 = vpack.c.b16 %v1763, %v1762
      %v1791 = vpack.c.b16 %v1765, %v1764
      %v1792 = vpack.c.b16 %v1767, %v1766
      %v1793 = vpack.c.b16 %v1769, %v1768
      %v1794 = vpack.c.b16 %v1771, %v1770
      %v1795 = vpack.c.b16 %v1773, %v1772
      %v1796 = vpack.c.b16 %v1775, %v1774
      %v1797 = vpack.c.b16 %v1777, %v1776
      %v1798 = vpack.c.b16 %v1779, %v1778
      %v1799 = vpack.c.b16 %v1781, %v1780
      %v1800 = vpack.c.b16 %v1783, %v1782
      %v1801 = vpack.c.b16 %v1785, %v1784
      %v1810 = vunpack.c.l.b16 %v1714
      %v1811 = vunpack.c.l.b16 %v1715
      %v1812 = vunpack.c.l.b16 %v1716
      %v1813 = vunpack.c.l.b16 %v1717
      %v1814 = vunpack.c.l.b16 %v1718
      %v1815 = vunpack.c.l.b16 %v1719
      %v1816 = vunpack.c.l.b16 %v1720
      %v1817 = vunpack.c.l.b16 %v1721
      %v1818 = vpack.c.b16 %v1811, %v1810
      %v1819 = vpack.c.b16 %v1813, %v1812
      %v1820 = vpack.c.b16 %v1815, %v1814
      %v1821 = vpack.c.b16 %v1817, %v1816
      %v1827 = vsel %vm359, %v1786, 0
      %v1830 = vsel %vm359, %v1787, 0
      %v1833 = vsel %vm359, %v1788, 0
      %v1836 = vsel %vm359, %v1789, 0
      %v1839 = vsel %vm359, %v1790, 0
      %v1842 = vsel %vm359, %v1791, 0
      %v1845 = vsel %vm359, %v1792, 0
      %v1848 = vsel %vm359, %v1793, 0
      %v1851 = vsel %vm359, %v1794, 0
      %v1854 = vsel %vm359, %v1795, 0
      %v1857 = vsel %vm359, %v1796, 0
      %v1860 = vsel %vm359, %v1797, 0
      %v1863 = vsel %vm359, %v1798, 0
      %v1866 = vsel %vm359, %v1799, 0
      %v1869 = vsel %vm359, %v1800, 0
      %v1872 = vsel %vm359, %v1801, 0
      %1874 = vmatpush.bf16.msra.mxu0 0
      %1875 = vmatpush.bf16.msra.mxu0 0
      %1876 = vmatpush.bf16.msra.mxu0 0
      %1877 = vmatpush.bf16.msra.mxu0 0
      %1878 = vmatpush.bf16.msra.mxu0 %v1821
      %1879 = vmatpush.bf16.msra.mxu0 %v1820
      %1880 = vmatpush.bf16.msra.mxu0 %v1819
      %1881 = vmatpush.bf16.msra.mxu0 %v1818
      %1882 = vmatmul.bf16.gmra.mxu0 %v1827
      %v1883 = vpop.f32.mrf.mxu0
      %v1884 = vadd.f32 0.0, %v1883
      %v1885 = vpop.f32.mrf.mxu0
      %v1886 = vadd.f32 0.0, %v1885
      %1887 = vmatmul.bf16.gmra.mxu0 %v1830
      %v1888 = vpop.f32.mrf.mxu0
      %v1889 = vadd.f32 0.0, %v1888
      %v1890 = vpop.f32.mrf.mxu0
      %v1891 = vadd.f32 0.0, %v1890
      %1892 = vmatmul.bf16.gmra.mxu0 %v1833
      %v1893 = vpop.f32.mrf.mxu0
      %v1894 = vadd.f32 0.0, %v1893
      %v1895 = vpop.f32.mrf.mxu0
      %v1896 = vadd.f32 0.0, %v1895
      %1897 = vmatmul.bf16.gmra.mxu0 %v1836
      %v1898 = vpop.f32.mrf.mxu0
      %v1899 = vadd.f32 0.0, %v1898
      %v1900 = vpop.f32.mrf.mxu0
      %v1901 = vadd.f32 0.0, %v1900
      %1902 = vmatmul.bf16.gmra.mxu0 %v1839
      %v1903 = vpop.f32.mrf.mxu0
      %v1904 = vadd.f32 0.0, %v1903
      %v1905 = vpop.f32.mrf.mxu0
      %v1906 = vadd.f32 0.0, %v1905
      %1907 = vmatmul.bf16.gmra.mxu0 %v1842
      %v1908 = vpop.f32.mrf.mxu0
      %v1909 = vadd.f32 0.0, %v1908
      %v1910 = vpop.f32.mrf.mxu0
      %v1911 = vadd.f32 0.0, %v1910
      %1912 = vmatmul.bf16.gmra.mxu0 %v1845
      %v1913 = vpop.f32.mrf.mxu0
      %v1914 = vadd.f32 0.0, %v1913
      %v1915 = vpop.f32.mrf.mxu0
      %v1916 = vadd.f32 0.0, %v1915
      %1917 = vmatmul.bf16.gmra.mxu0 %v1848
      %v1918 = vpop.f32.mrf.mxu0
      %v1919 = vadd.f32 0.0, %v1918
      %v1920 = vpop.f32.mrf.mxu0
      %v1921 = vadd.f32 0.0, %v1920
      %1922 = vmatmul.bf16.gmra.mxu0 %v1851
      %v1923 = vpop.f32.mrf.mxu0
      %v1924 = vadd.f32 0.0, %v1923
      %v1925 = vpop.f32.mrf.mxu0
      %v1926 = vadd.f32 0.0, %v1925
      %1927 = vmatmul.bf16.gmra.mxu0 %v1854
      %v1928 = vpop.f32.mrf.mxu0
      %v1929 = vadd.f32 0.0, %v1928
      %v1930 = vpop.f32.mrf.mxu0
      %v1931 = vadd.f32 0.0, %v1930
      %1932 = vmatmul.bf16.gmra.mxu0 %v1857
      %v1933 = vpop.f32.mrf.mxu0
      %v1934 = vadd.f32 0.0, %v1933
      %v1935 = vpop.f32.mrf.mxu0
      %v1936 = vadd.f32 0.0, %v1935
      %1937 = vmatmul.bf16.gmra.mxu0 %v1860
      %v1938 = vpop.f32.mrf.mxu0
      %v1939 = vadd.f32 0.0, %v1938
      %v1940 = vpop.f32.mrf.mxu0
      %v1941 = vadd.f32 0.0, %v1940
      %1942 = vmatmul.bf16.gmra.mxu0 %v1863
      %v1943 = vpop.f32.mrf.mxu0
      %v1944 = vadd.f32 0.0, %v1943
      %v1945 = vpop.f32.mrf.mxu0
      %v1946 = vadd.f32 0.0, %v1945
      %1947 = vmatmul.bf16.gmra.mxu0 %v1866
      %v1948 = vpop.f32.mrf.mxu0
      %v1949 = vadd.f32 0.0, %v1948
      %v1950 = vpop.f32.mrf.mxu0
      %v1951 = vadd.f32 0.0, %v1950
      %1952 = vmatmul.bf16.gmra.mxu0 %v1869
      %v1953 = vpop.f32.mrf.mxu0
      %v1954 = vadd.f32 0.0, %v1953
      %v1955 = vpop.f32.mrf.mxu0
      %v1956 = vadd.f32 0.0, %v1955
      %1957 = vmatmul.bf16.gmra.mxu0 %v1872
      %v1958 = vpop.f32.mrf.mxu0
      %v1959 = vadd.f32 0.0, %v1958
      %v1960 = vpop.f32.mrf.mxu0
      %v1961 = vadd.f32 0.0, %v1960
      %1962 = vdwg.mxu0
      %v1963 = vadd.f32 %v1649, %v1884
      %v1964 = vadd.f32 %v1650, %v1886
      %v1965 = vadd.f32 %v1651, %v1889
      %v1966 = vadd.f32 %v1652, %v1891
      %v1967 = vadd.f32 %v1653, %v1894
      %v1968 = vadd.f32 %v1654, %v1896
      %v1969 = vadd.f32 %v1655, %v1899
      %v1970 = vadd.f32 %v1656, %v1901
      %v1971 = vadd.f32 %v1657, %v1904
      %v1972 = vadd.f32 %v1658, %v1906
      %v1973 = vadd.f32 %v1659, %v1909
      %v1974 = vadd.f32 %v1660, %v1911
      %v1975 = vadd.f32 %v1661, %v1914
      %v1976 = vadd.f32 %v1662, %v1916
      %v1977 = vadd.f32 %v1663, %v1919
      %v1978 = vadd.f32 %v1664, %v1921
      %v1979 = vadd.f32 %v1665, %v1924
      %v1980 = vadd.f32 %v1666, %v1926
      %v1981 = vadd.f32 %v1667, %v1929
      %v1982 = vadd.f32 %v1668, %v1931
      %v1983 = vadd.f32 %v1669, %v1934
      %v1984 = vadd.f32 %v1670, %v1936
      %v1985 = vadd.f32 %v1671, %v1939
      %v1986 = vadd.f32 %v1672, %v1941
      %v1987 = vadd.f32 %v1673, %v1944
      %v1988 = vadd.f32 %v1674, %v1946
      %v1989 = vadd.f32 %v1675, %v1949
      %v1990 = vadd.f32 %v1676, %v1951
      %v1991 = vadd.f32 %v1677, %v1954
      %v1992 = vadd.f32 %v1678, %v1956
      %v1993 = vadd.f32 %v1679, %v1959
      %v1994 = vadd.f32 %v1680, %v1961
      %v1995 = vld [vmem:[%s165 + $0x10] sm:$0xf]
      %v1996 = vld [vmem:[%s165 + $0x14] sm:$0xf]
      %v1997 = vld [vmem:[%s165 + $0x18] sm:$0xf]
      %v1998 = vld [vmem:[%s165 + $0x1c] sm:$0xf]
      %v1999 = vld [vmem:[%s165 + $0x20] sm:$0xf]
      %v2000 = vld [vmem:[%s165 + $0x24] sm:$0xf]
      %v2001 = vld [vmem:[%s165 + $0x28] sm:$0xf]
      %v2002 = vld [vmem:[%s165 + $0x2c] sm:$0xf]
      %v2003 = vld [vmem:[%s165 + $0x30] sm:$0xf]
      %v2004 = vld [vmem:[%s165 + $0x34] sm:$0xf]
      %v2005 = vld [vmem:[%s165 + $0x38] sm:$0xf]
      %v2006 = vld [vmem:[%s165 + $0x3c] sm:$0xf]
      %v2007 = vld [vmem:[%s165 + $0x40] sm:$0xf]
      %v2008 = vld [vmem:[%s165 + $0x44] sm:$0xf]
      %v2009 = vld [vmem:[%s165 + $0x48] sm:$0xf]
      %v2010 = vld [vmem:[%s165 + $0x4c] sm:$0xf]
      %v2011 = vld [vmem:[%s165 + $0x50] sm:$0xf]
      %v2012 = vld [vmem:[%s165 + $0x54] sm:$0xf]
      %v2013 = vld [vmem:[%s165 + $0x58] sm:$0xf]
      %v2014 = vld [vmem:[%s165 + $0x5c] sm:$0xf]
      %v2015 = vld [vmem:[%s165 + $0x60] sm:$0xf]
      %v2016 = vld [vmem:[%s165 + $0x64] sm:$0xf]
      %v2017 = vld [vmem:[%s165 + $0x68] sm:$0xf]
      %v2018 = vld [vmem:[%s165 + $0x6c] sm:$0xf]
      %v2019 = vld [vmem:[%s165 + $0x70] sm:$0xf]
      %v2020 = vld [vmem:[%s165 + $0x74] sm:$0xf]
      %v2021 = vld [vmem:[%s165 + $0x78] sm:$0xf]
      %v2022 = vld [vmem:[%s165 + $0x7c] sm:$0xf]
      %v2023 = vld [vmem:[%s165 + $0x80] sm:$0xf]
      %v2024 = vld [vmem:[%s165 + $0x84] sm:$0xf]
      %v2025 = vld [vmem:[%s165 + $0x88] sm:$0xf]
      %v2026 = vld [vmem:[%s165 + $0x8c] sm:$0xf]
      %s2027 = scalar_lea.vmem %s1, 192
      %v2028 = vld [vmem:[%s2027] sm:$0xf]
      %v2029 = vld [vmem:[%s2027 + $0x4] sm:$0xf]
      %v2030 = vld [vmem:[%s2027 + $0x8] sm:$0xf]
      %v2031 = vld [vmem:[%s2027 + $0xc] sm:$0xf]
      %v2032 = vld [vmem:[%s2027 + $0x10] sm:$0xf]
      %v2033 = vld [vmem:[%s2027 + $0x14] sm:$0xf]
      %v2034 = vld [vmem:[%s2027 + $0x18] sm:$0xf]
      %v2035 = vld [vmem:[%s2027 + $0x1c] sm:$0xf]
      %v2068 = vunpack.c.l.b16 %v1995
      %v2069 = vunpack.c.l.b16 %v1996
      %v2070 = vunpack.c.l.b16 %v1997
      %v2071 = vunpack.c.l.b16 %v1998
      %v2072 = vunpack.c.l.b16 %v1999
      %v2073 = vunpack.c.l.b16 %v2000
      %v2074 = vunpack.c.l.b16 %v2001
      %v2075 = vunpack.c.l.b16 %v2002
      %v2076 = vunpack.c.l.b16 %v2003
      %v2077 = vunpack.c.l.b16 %v2004
      %v2078 = vunpack.c.l.b16 %v2005
      %v2079 = vunpack.c.l.b16 %v2006
      %v2080 = vunpack.c.l.b16 %v2007
      %v2081 = vunpack.c.l.b16 %v2008
      %v2082 = vunpack.c.l.b16 %v2009
      %v2083 = vunpack.c.l.b16 %v2010
      %v2084 = vunpack.c.l.b16 %v2011
      %v2085 = vunpack.c.l.b16 %v2012
      %v2086 = vunpack.c.l.b16 %v2013
      %v2087 = vunpack.c.l.b16 %v2014
      %v2088 = vunpack.c.l.b16 %v2015
      %v2089 = vunpack.c.l.b16 %v2016
      %v2090 = vunpack.c.l.b16 %v2017
      %v2091 = vunpack.c.l.b16 %v2018
      %v2092 = vunpack.c.l.b16 %v2019
      %v2093 = vunpack.c.l.b16 %v2020
      %v2094 = vunpack.c.l.b16 %v2021
      %v2095 = vunpack.c.l.b16 %v2022
      %v2096 = vunpack.c.l.b16 %v2023
      %v2097 = vunpack.c.l.b16 %v2024
      %v2098 = vunpack.c.l.b16 %v2025
      %v2099 = vunpack.c.l.b16 %v2026
      %v2100 = vpack.c.b16 %v2069, %v2068
      %v2101 = vpack.c.b16 %v2071, %v2070
      %v2102 = vpack.c.b16 %v2073, %v2072
      %v2103 = vpack.c.b16 %v2075, %v2074
      %v2104 = vpack.c.b16 %v2077, %v2076
      %v2105 = vpack.c.b16 %v2079, %v2078
      %v2106 = vpack.c.b16 %v2081, %v2080
      %v2107 = vpack.c.b16 %v2083, %v2082
      %v2108 = vpack.c.b16 %v2085, %v2084
      %v2109 = vpack.c.b16 %v2087, %v2086
      %v2110 = vpack.c.b16 %v2089, %v2088
      %v2111 = vpack.c.b16 %v2091, %v2090
      %v2112 = vpack.c.b16 %v2093, %v2092
      %v2113 = vpack.c.b16 %v2095, %v2094
      %v2114 = vpack.c.b16 %v2097, %v2096
      %v2115 = vpack.c.b16 %v2099, %v2098
      %v2124 = vunpack.c.l.b16 %v2028
      %v2125 = vunpack.c.l.b16 %v2029
      %v2126 = vunpack.c.l.b16 %v2030
      %v2127 = vunpack.c.l.b16 %v2031
      %v2128 = vunpack.c.l.b16 %v2032
      %v2129 = vunpack.c.l.b16 %v2033
      %v2130 = vunpack.c.l.b16 %v2034
      %v2131 = vunpack.c.l.b16 %v2035
      %v2132 = vpack.c.b16 %v2125, %v2124
      %v2133 = vpack.c.b16 %v2127, %v2126
      %v2134 = vpack.c.b16 %v2129, %v2128
      %v2135 = vpack.c.b16 %v2131, %v2130
      %v2141 = vsel %vm359, %v2100, 0
      %v2144 = vsel %vm359, %v2101, 0
      %v2147 = vsel %vm359, %v2102, 0
      %v2150 = vsel %vm359, %v2103, 0
      %v2153 = vsel %vm359, %v2104, 0
      %v2156 = vsel %vm359, %v2105, 0
      %v2159 = vsel %vm359, %v2106, 0
      %v2162 = vsel %vm359, %v2107, 0
      %v2165 = vsel %vm359, %v2108, 0
      %v2168 = vsel %vm359, %v2109, 0
      %v2171 = vsel %vm359, %v2110, 0
      %v2174 = vsel %vm359, %v2111, 0
      %v2177 = vsel %vm359, %v2112, 0
      %v2180 = vsel %vm359, %v2113, 0
      %v2183 = vsel %vm359, %v2114, 0
      %v2186 = vsel %vm359, %v2115, 0
      %2188 = vmatpush.bf16.msra.mxu0 0
      %2189 = vmatpush.bf16.msra.mxu0 0
      %2190 = vmatpush.bf16.msra.mxu0 0
      %2191 = vmatpush.bf16.msra.mxu0 0
      %2192 = vmatpush.bf16.msra.mxu0 %v2135
      %2193 = vmatpush.bf16.msra.mxu0 %v2134
      %2194 = vmatpush.bf16.msra.mxu0 %v2133
      %2195 = vmatpush.bf16.msra.mxu0 %v2132
      %2196 = vmatmul.bf16.gmra.mxu0 %v2141
      %v2197 = vpop.f32.mrf.mxu0
      %v2198 = vadd.f32 0.0, %v2197
      %v2199 = vpop.f32.mrf.mxu0
      %v2200 = vadd.f32 0.0, %v2199
      %2201 = vmatmul.bf16.gmra.mxu0 %v2144
      %v2202 = vpop.f32.mrf.mxu0
      %v2203 = vadd.f32 0.0, %v2202
      %v2204 = vpop.f32.mrf.mxu0
      %v2205 = vadd.f32 0.0, %v2204
      %2206 = vmatmul.bf16.gmra.mxu0 %v2147
      %v2207 = vpop.f32.mrf.mxu0
      %v2208 = vadd.f32 0.0, %v2207
      %v2209 = vpop.f32.mrf.mxu0
      %v2210 = vadd.f32 0.0, %v2209
      %2211 = vmatmul.bf16.gmra.mxu0 %v2150
      %v2212 = vpop.f32.mrf.mxu0
      %v2213 = vadd.f32 0.0, %v2212
      %v2214 = vpop.f32.mrf.mxu0
      %v2215 = vadd.f32 0.0, %v2214
      %2216 = vmatmul.bf16.gmra.mxu0 %v2153
      %v2217 = vpop.f32.mrf.mxu0
      %v2218 = vadd.f32 0.0, %v2217
      %v2219 = vpop.f32.mrf.mxu0
      %v2220 = vadd.f32 0.0, %v2219
      %2221 = vmatmul.bf16.gmra.mxu0 %v2156
      %v2222 = vpop.f32.mrf.mxu0
      %v2223 = vadd.f32 0.0, %v2222
      %v2224 = vpop.f32.mrf.mxu0
      %v2225 = vadd.f32 0.0, %v2224
      %2226 = vmatmul.bf16.gmra.mxu0 %v2159
      %v2227 = vpop.f32.mrf.mxu0
      %v2228 = vadd.f32 0.0, %v2227
      %v2229 = vpop.f32.mrf.mxu0
      %v2230 = vadd.f32 0.0, %v2229
      %2231 = vmatmul.bf16.gmra.mxu0 %v2162
      %v2232 = vpop.f32.mrf.mxu0
      %v2233 = vadd.f32 0.0, %v2232
      %v2234 = vpop.f32.mrf.mxu0
      %v2235 = vadd.f32 0.0, %v2234
      %2236 = vmatmul.bf16.gmra.mxu0 %v2165
      %v2237 = vpop.f32.mrf.mxu0
      %v2238 = vadd.f32 0.0, %v2237
      %v2239 = vpop.f32.mrf.mxu0
      %v2240 = vadd.f32 0.0, %v2239
      %2241 = vmatmul.bf16.gmra.mxu0 %v2168
      %v2242 = vpop.f32.mrf.mxu0
      %v2243 = vadd.f32 0.0, %v2242
      %v2244 = vpop.f32.mrf.mxu0
      %v2245 = vadd.f32 0.0, %v2244
      %2246 = vmatmul.bf16.gmra.mxu0 %v2171
      %v2247 = vpop.f32.mrf.mxu0
      %v2248 = vadd.f32 0.0, %v2247
      %v2249 = vpop.f32.mrf.mxu0
      %v2250 = vadd.f32 0.0, %v2249
      %2251 = vmatmul.bf16.gmra.mxu0 %v2174
      %v2252 = vpop.f32.mrf.mxu0
      %v2253 = vadd.f32 0.0, %v2252
      %v2254 = vpop.f32.mrf.mxu0
      %v2255 = vadd.f32 0.0, %v2254
      %2256 = vmatmul.bf16.gmra.mxu0 %v2177
      %v2257 = vpop.f32.mrf.mxu0
      %v2258 = vadd.f32 0.0, %v2257
      %v2259 = vpop.f32.mrf.mxu0
      %v2260 = vadd.f32 0.0, %v2259
      %2261 = vmatmul.bf16.gmra.mxu0 %v2180
      %v2262 = vpop.f32.mrf.mxu0
      %v2263 = vadd.f32 0.0, %v2262
      %v2264 = vpop.f32.mrf.mxu0
      %v2265 = vadd.f32 0.0, %v2264
      %2266 = vmatmul.bf16.gmra.mxu0 %v2183
      %v2267 = vpop.f32.mrf.mxu0
      %v2268 = vadd.f32 0.0, %v2267
      %v2269 = vpop.f32.mrf.mxu0
      %v2270 = vadd.f32 0.0, %v2269
      %2271 = vmatmul.bf16.gmra.mxu0 %v2186
      %v2272 = vpop.f32.mrf.mxu0
      %v2273 = vadd.f32 0.0, %v2272
      %v2274 = vpop.f32.mrf.mxu0
      %v2275 = vadd.f32 0.0, %v2274
      %2276 = vdwg.mxu0
      %v2277 = vadd.f32 %v1963, %v2198
      %v2278 = vadd.f32 %v1964, %v2200
      %v2279 = vadd.f32 %v1965, %v2203
      %v2280 = vadd.f32 %v1966, %v2205
      %v2281 = vadd.f32 %v1967, %v2208
      %v2282 = vadd.f32 %v1968, %v2210
      %v2283 = vadd.f32 %v1969, %v2213
      %v2284 = vadd.f32 %v1970, %v2215
      %v2285 = vadd.f32 %v1971, %v2218
      %v2286 = vadd.f32 %v1972, %v2220
      %v2287 = vadd.f32 %v1973, %v2223
      %v2288 = vadd.f32 %v1974, %v2225
      %v2289 = vadd.f32 %v1975, %v2228
      %v2290 = vadd.f32 %v1976, %v2230
      %v2291 = vadd.f32 %v1977, %v2233
      %v2292 = vadd.f32 %v1978, %v2235
      %v2293 = vadd.f32 %v1979, %v2238
      %v2294 = vadd.f32 %v1980, %v2240
      %v2295 = vadd.f32 %v1981, %v2243
      %v2296 = vadd.f32 %v1982, %v2245
      %v2297 = vadd.f32 %v1983, %v2248
      %v2298 = vadd.f32 %v1984, %v2250
      %v2299 = vadd.f32 %v1985, %v2253
      %v2300 = vadd.f32 %v1986, %v2255
      %v2301 = vadd.f32 %v1987, %v2258
      %v2302 = vadd.f32 %v1988, %v2260
      %v2303 = vadd.f32 %v1989, %v2263
      %v2304 = vadd.f32 %v1990, %v2265
      %v2305 = vadd.f32 %v1991, %v2268
      %v2306 = vadd.f32 %v1992, %v2270
      %v2307 = vadd.f32 %v1993, %v2273
      %v2308 = vadd.f32 %v1994, %v2275
      %v2309 = vld [vmem:[%s213 + $0x10] sm:$0xf]
      %v2310 = vld [vmem:[%s213 + $0x14] sm:$0xf]
      %v2311 = vld [vmem:[%s213 + $0x18] sm:$0xf]
      %v2312 = vld [vmem:[%s213 + $0x1c] sm:$0xf]
      %v2313 = vld [vmem:[%s213 + $0x20] sm:$0xf]
      %v2314 = vld [vmem:[%s213 + $0x24] sm:$0xf]
      %v2315 = vld [vmem:[%s213 + $0x28] sm:$0xf]
      %v2316 = vld [vmem:[%s213 + $0x2c] sm:$0xf]
      %v2317 = vld [vmem:[%s213 + $0x30] sm:$0xf]
      %v2318 = vld [vmem:[%s213 + $0x34] sm:$0xf]
      %v2319 = vld [vmem:[%s213 + $0x38] sm:$0xf]
      %v2320 = vld [vmem:[%s213 + $0x3c] sm:$0xf]
      %v2321 = vld [vmem:[%s213 + $0x40] sm:$0xf]
      %v2322 = vld [vmem:[%s213 + $0x44] sm:$0xf]
      %v2323 = vld [vmem:[%s213 + $0x48] sm:$0xf]
      %v2324 = vld [vmem:[%s213 + $0x4c] sm:$0xf]
      %v2325 = vld [vmem:[%s213 + $0x50] sm:$0xf]
      %v2326 = vld [vmem:[%s213 + $0x54] sm:$0xf]
      %v2327 = vld [vmem:[%s213 + $0x58] sm:$0xf]
      %v2328 = vld [vmem:[%s213 + $0x5c] sm:$0xf]
      %v2329 = vld [vmem:[%s213 + $0x60] sm:$0xf]
      %v2330 = vld [vmem:[%s213 + $0x64] sm:$0xf]
      %v2331 = vld [vmem:[%s213 + $0x68] sm:$0xf]
      %v2332 = vld [vmem:[%s213 + $0x6c] sm:$0xf]
      %v2333 = vld [vmem:[%s213 + $0x70] sm:$0xf]
      %v2334 = vld [vmem:[%s213 + $0x74] sm:$0xf]
      %v2335 = vld [vmem:[%s213 + $0x78] sm:$0xf]
      %v2336 = vld [vmem:[%s213 + $0x7c] sm:$0xf]
      %v2337 = vld [vmem:[%s213 + $0x80] sm:$0xf]
      %v2338 = vld [vmem:[%s213 + $0x84] sm:$0xf]
      %v2339 = vld [vmem:[%s213 + $0x88] sm:$0xf]
      %v2340 = vld [vmem:[%s213 + $0x8c] sm:$0xf]
      %s2341 = scalar_lea.vmem %s1, 224
      %v2342 = vld [vmem:[%s2341] sm:$0xf]
      %v2343 = vld [vmem:[%s2341 + $0x4] sm:$0xf]
      %v2344 = vld [vmem:[%s2341 + $0x8] sm:$0xf]
      %v2345 = vld [vmem:[%s2341 + $0xc] sm:$0xf]
      %v2346 = vld [vmem:[%s2341 + $0x10] sm:$0xf]
      %v2347 = vld [vmem:[%s2341 + $0x14] sm:$0xf]
      %v2348 = vld [vmem:[%s2341 + $0x18] sm:$0xf]
      %v2349 = vld [vmem:[%s2341 + $0x1c] sm:$0xf]
      %v2382 = vunpack.c.l.b16 %v2309
      %v2383 = vunpack.c.l.b16 %v2310
      %v2384 = vunpack.c.l.b16 %v2311
      %v2385 = vunpack.c.l.b16 %v2312
      %v2386 = vunpack.c.l.b16 %v2313
      %v2387 = vunpack.c.l.b16 %v2314
      %v2388 = vunpack.c.l.b16 %v2315
      %v2389 = vunpack.c.l.b16 %v2316
      %v2390 = vunpack.c.l.b16 %v2317
      %v2391 = vunpack.c.l.b16 %v2318
      %v2392 = vunpack.c.l.b16 %v2319
      %v2393 = vunpack.c.l.b16 %v2320
      %v2394 = vunpack.c.l.b16 %v2321
      %v2395 = vunpack.c.l.b16 %v2322
      %v2396 = vunpack.c.l.b16 %v2323
      %v2397 = vunpack.c.l.b16 %v2324
      %v2398 = vunpack.c.l.b16 %v2325
      %v2399 = vunpack.c.l.b16 %v2326
      %v2400 = vunpack.c.l.b16 %v2327
      %v2401 = vunpack.c.l.b16 %v2328
      %v2402 = vunpack.c.l.b16 %v2329
      %v2403 = vunpack.c.l.b16 %v2330
      %v2404 = vunpack.c.l.b16 %v2331
      %v2405 = vunpack.c.l.b16 %v2332
      %v2406 = vunpack.c.l.b16 %v2333
      %v2407 = vunpack.c.l.b16 %v2334
      %v2408 = vunpack.c.l.b16 %v2335
      %v2409 = vunpack.c.l.b16 %v2336
      %v2410 = vunpack.c.l.b16 %v2337
      %v2411 = vunpack.c.l.b16 %v2338
      %v2412 = vunpack.c.l.b16 %v2339
      %v2413 = vunpack.c.l.b16 %v2340
      %v2414 = vpack.c.b16 %v2383, %v2382
      %v2415 = vpack.c.b16 %v2385, %v2384
      %v2416 = vpack.c.b16 %v2387, %v2386
      %v2417 = vpack.c.b16 %v2389, %v2388
      %v2418 = vpack.c.b16 %v2391, %v2390
      %v2419 = vpack.c.b16 %v2393, %v2392
      %v2420 = vpack.c.b16 %v2395, %v2394
      %v2421 = vpack.c.b16 %v2397, %v2396
      %v2422 = vpack.c.b16 %v2399, %v2398
      %v2423 = vpack.c.b16 %v2401, %v2400
      %v2424 = vpack.c.b16 %v2403, %v2402
      %v2425 = vpack.c.b16 %v2405, %v2404
      %v2426 = vpack.c.b16 %v2407, %v2406
      %v2427 = vpack.c.b16 %v2409, %v2408
      %v2428 = vpack.c.b16 %v2411, %v2410
      %v2429 = vpack.c.b16 %v2413, %v2412
      %v2438 = vunpack.c.l.b16 %v2342
      %v2439 = vunpack.c.l.b16 %v2343
      %v2440 = vunpack.c.l.b16 %v2344
      %v2441 = vunpack.c.l.b16 %v2345
      %v2442 = vunpack.c.l.b16 %v2346
      %v2443 = vunpack.c.l.b16 %v2347
      %v2444 = vunpack.c.l.b16 %v2348
      %v2445 = vunpack.c.l.b16 %v2349
      %v2446 = vpack.c.b16 %v2439, %v2438
      %v2447 = vpack.c.b16 %v2441, %v2440
      %v2448 = vpack.c.b16 %v2443, %v2442
      %v2449 = vpack.c.b16 %v2445, %v2444
      %v2455 = vsel %vm359, %v2414, 0
      %v2458 = vsel %vm359, %v2415, 0
      %v2461 = vsel %vm359, %v2416, 0
      %v2464 = vsel %vm359, %v2417, 0
      %v2467 = vsel %vm359, %v2418, 0
      %v2470 = vsel %vm359, %v2419, 0
      %v2473 = vsel %vm359, %v2420, 0
      %v2476 = vsel %vm359, %v2421, 0
      %v2479 = vsel %vm359, %v2422, 0
      %v2482 = vsel %vm359, %v2423, 0
      %v2485 = vsel %vm359, %v2424, 0
      %v2488 = vsel %vm359, %v2425, 0
      %v2491 = vsel %vm359, %v2426, 0
      %v2494 = vsel %vm359, %v2427, 0
      %v2497 = vsel %vm359, %v2428, 0
      %v2500 = vsel %vm359, %v2429, 0
      %2502 = vmatpush.bf16.msra.mxu0 0
      %2503 = vmatpush.bf16.msra.mxu0 0
      %2504 = vmatpush.bf16.msra.mxu0 0
      %2505 = vmatpush.bf16.msra.mxu0 0
      %2506 = vmatpush.bf16.msra.mxu0 %v2449
      %2507 = vmatpush.bf16.msra.mxu0 %v2448
      %2508 = vmatpush.bf16.msra.mxu0 %v2447
      %2509 = vmatpush.bf16.msra.mxu0 %v2446
      %2510 = vmatmul.bf16.gmra.mxu0 %v2455
      %v2511 = vpop.f32.mrf.mxu0
      %v2512 = vadd.f32 0.0, %v2511
      %v2513 = vpop.f32.mrf.mxu0
      %v2514 = vadd.f32 0.0, %v2513
      %2515 = vmatmul.bf16.gmra.mxu0 %v2458
      %v2516 = vpop.f32.mrf.mxu0
      %v2517 = vadd.f32 0.0, %v2516
      %v2518 = vpop.f32.mrf.mxu0
      %v2519 = vadd.f32 0.0, %v2518
      %2520 = vmatmul.bf16.gmra.mxu0 %v2461
      %v2521 = vpop.f32.mrf.mxu0
      %v2522 = vadd.f32 0.0, %v2521
      %v2523 = vpop.f32.mrf.mxu0
      %v2524 = vadd.f32 0.0, %v2523
      %2525 = vmatmul.bf16.gmra.mxu0 %v2464
      %v2526 = vpop.f32.mrf.mxu0
      %v2527 = vadd.f32 0.0, %v2526
      %v2528 = vpop.f32.mrf.mxu0
      %v2529 = vadd.f32 0.0, %v2528
      %2530 = vmatmul.bf16.gmra.mxu0 %v2467
      %v2531 = vpop.f32.mrf.mxu0
      %v2532 = vadd.f32 0.0, %v2531
      %v2533 = vpop.f32.mrf.mxu0
      %v2534 = vadd.f32 0.0, %v2533
      %2535 = vmatmul.bf16.gmra.mxu0 %v2470
      %v2536 = vpop.f32.mrf.mxu0
      %v2537 = vadd.f32 0.0, %v2536
      %v2538 = vpop.f32.mrf.mxu0
      %v2539 = vadd.f32 0.0, %v2538
      %2540 = vmatmul.bf16.gmra.mxu0 %v2473
      %v2541 = vpop.f32.mrf.mxu0
      %v2542 = vadd.f32 0.0, %v2541
      %v2543 = vpop.f32.mrf.mxu0
      %v2544 = vadd.f32 0.0, %v2543
      %2545 = vmatmul.bf16.gmra.mxu0 %v2476
      %v2546 = vpop.f32.mrf.mxu0
      %v2547 = vadd.f32 0.0, %v2546
      %v2548 = vpop.f32.mrf.mxu0
      %v2549 = vadd.f32 0.0, %v2548
      %2550 = vmatmul.bf16.gmra.mxu0 %v2479
      %v2551 = vpop.f32.mrf.mxu0
      %v2552 = vadd.f32 0.0, %v2551
      %v2553 = vpop.f32.mrf.mxu0
      %v2554 = vadd.f32 0.0, %v2553
      %2555 = vmatmul.bf16.gmra.mxu0 %v2482
      %v2556 = vpop.f32.mrf.mxu0
      %v2557 = vadd.f32 0.0, %v2556
      %v2558 = vpop.f32.mrf.mxu0
      %v2559 = vadd.f32 0.0, %v2558
      %2560 = vmatmul.bf16.gmra.mxu0 %v2485
      %v2561 = vpop.f32.mrf.mxu0
      %v2562 = vadd.f32 0.0, %v2561
      %v2563 = vpop.f32.mrf.mxu0
      %v2564 = vadd.f32 0.0, %v2563
      %2565 = vmatmul.bf16.gmra.mxu0 %v2488
      %v2566 = vpop.f32.mrf.mxu0
      %v2567 = vadd.f32 0.0, %v2566
      %v2568 = vpop.f32.mrf.mxu0
      %v2569 = vadd.f32 0.0, %v2568
      %2570 = vmatmul.bf16.gmra.mxu0 %v2491
      %v2571 = vpop.f32.mrf.mxu0
      %v2572 = vadd.f32 0.0, %v2571
      %v2573 = vpop.f32.mrf.mxu0
      %v2574 = vadd.f32 0.0, %v2573
      %2575 = vmatmul.bf16.gmra.mxu0 %v2494
      %v2576 = vpop.f32.mrf.mxu0
      %v2577 = vadd.f32 0.0, %v2576
      %v2578 = vpop.f32.mrf.mxu0
      %v2579 = vadd.f32 0.0, %v2578
      %2580 = vmatmul.bf16.gmra.mxu0 %v2497
      %v2581 = vpop.f32.mrf.mxu0
      %v2582 = vadd.f32 0.0, %v2581
      %v2583 = vpop.f32.mrf.mxu0
      %v2584 = vadd.f32 0.0, %v2583
      %2585 = vmatmul.bf16.gmra.mxu0 %v2500
      %v2586 = vpop.f32.mrf.mxu0
      %v2587 = vadd.f32 0.0, %v2586
      %v2588 = vpop.f32.mrf.mxu0
      %v2589 = vadd.f32 0.0, %v2588
      %2590 = vdwg.mxu0
      %v2591 = vadd.f32 %v2277, %v2512
      %v2592 = vadd.f32 %v2278, %v2514
      %v2593 = vadd.f32 %v2279, %v2517
      %v2594 = vadd.f32 %v2280, %v2519
      %v2595 = vadd.f32 %v2281, %v2522
      %v2596 = vadd.f32 %v2282, %v2524
      %v2597 = vadd.f32 %v2283, %v2527
      %v2598 = vadd.f32 %v2284, %v2529
      %v2599 = vadd.f32 %v2285, %v2532
      %v2600 = vadd.f32 %v2286, %v2534
      %v2601 = vadd.f32 %v2287, %v2537
      %v2602 = vadd.f32 %v2288, %v2539
      %v2603 = vadd.f32 %v2289, %v2542
      %v2604 = vadd.f32 %v2290, %v2544
      %v2605 = vadd.f32 %v2291, %v2547
      %v2606 = vadd.f32 %v2292, %v2549
      %v2607 = vadd.f32 %v2293, %v2552
      %v2608 = vadd.f32 %v2294, %v2554
      %v2609 = vadd.f32 %v2295, %v2557
      %v2610 = vadd.f32 %v2296, %v2559
      %v2611 = vadd.f32 %v2297, %v2562
      %v2612 = vadd.f32 %v2298, %v2564
      %v2613 = vadd.f32 %v2299, %v2567
      %v2614 = vadd.f32 %v2300, %v2569
      %v2615 = vadd.f32 %v2301, %v2572
      %v2616 = vadd.f32 %v2302, %v2574
      %v2617 = vadd.f32 %v2303, %v2577
      %v2618 = vadd.f32 %v2304, %v2579
      %v2619 = vadd.f32 %v2305, %v2582
      %v2620 = vadd.f32 %v2306, %v2584
      %v2621 = vadd.f32 %v2307, %v2587
      %v2622 = vadd.f32 %v2308, %v2589
      %v2623 = vld [vmem:[%s738 + $0x10] sm:$0xf]
      %v2624 = vld [vmem:[%s738 + $0x14] sm:$0xf]
      %v2625 = vld [vmem:[%s738 + $0x18] sm:$0xf]
      %v2626 = vld [vmem:[%s738 + $0x1c] sm:$0xf]
      %v2627 = vld [vmem:[%s738 + $0x20] sm:$0xf]
      %v2628 = vld [vmem:[%s738 + $0x24] sm:$0xf]
      %v2629 = vld [vmem:[%s738 + $0x28] sm:$0xf]
      %v2630 = vld [vmem:[%s738 + $0x2c] sm:$0xf]
      %v2631 = vld [vmem:[%s738 + $0x30] sm:$0xf]
      %v2632 = vld [vmem:[%s738 + $0x34] sm:$0xf]
      %v2633 = vld [vmem:[%s738 + $0x38] sm:$0xf]
      %v2634 = vld [vmem:[%s738 + $0x3c] sm:$0xf]
      %v2635 = vld [vmem:[%s738 + $0x40] sm:$0xf]
      %v2636 = vld [vmem:[%s738 + $0x44] sm:$0xf]
      %v2637 = vld [vmem:[%s738 + $0x48] sm:$0xf]
      %v2638 = vld [vmem:[%s738 + $0x4c] sm:$0xf]
      %v2639 = vld [vmem:[%s738 + $0x50] sm:$0xf]
      %v2640 = vld [vmem:[%s738 + $0x54] sm:$0xf]
      %v2641 = vld [vmem:[%s738 + $0x58] sm:$0xf]
      %v2642 = vld [vmem:[%s738 + $0x5c] sm:$0xf]
      %v2643 = vld [vmem:[%s738 + $0x60] sm:$0xf]
      %v2644 = vld [vmem:[%s738 + $0x64] sm:$0xf]
      %v2645 = vld [vmem:[%s738 + $0x68] sm:$0xf]
      %v2646 = vld [vmem:[%s738 + $0x6c] sm:$0xf]
      %v2647 = vld [vmem:[%s738 + $0x70] sm:$0xf]
      %v2648 = vld [vmem:[%s738 + $0x74] sm:$0xf]
      %v2649 = vld [vmem:[%s738 + $0x78] sm:$0xf]
      %v2650 = vld [vmem:[%s738 + $0x7c] sm:$0xf]
      %v2651 = vld [vmem:[%s738 + $0x80] sm:$0xf]
      %v2652 = vld [vmem:[%s738 + $0x84] sm:$0xf]
      %v2653 = vld [vmem:[%s738 + $0x88] sm:$0xf]
      %v2654 = vld [vmem:[%s738 + $0x8c] sm:$0xf]
      %s2655 = scalar_lea.vmem %s1, 256
      %v2656 = vld [vmem:[%s2655] sm:$0xf]
      %v2657 = vld [vmem:[%s2655 + $0x4] sm:$0xf]
      %v2658 = vld [vmem:[%s2655 + $0x8] sm:$0xf]
      %v2659 = vld [vmem:[%s2655 + $0xc] sm:$0xf]
      %v2660 = vld [vmem:[%s2655 + $0x10] sm:$0xf]
      %v2661 = vld [vmem:[%s2655 + $0x14] sm:$0xf]
      %v2662 = vld [vmem:[%s2655 + $0x18] sm:$0xf]
      %v2663 = vld [vmem:[%s2655 + $0x1c] sm:$0xf]
      %v2696 = vunpack.c.l.b16 %v2623
      %v2697 = vunpack.c.l.b16 %v2624
      %v2698 = vunpack.c.l.b16 %v2625
      %v2699 = vunpack.c.l.b16 %v2626
      %v2700 = vunpack.c.l.b16 %v2627
      %v2701 = vunpack.c.l.b16 %v2628
      %v2702 = vunpack.c.l.b16 %v2629
      %v2703 = vunpack.c.l.b16 %v2630
      %v2704 = vunpack.c.l.b16 %v2631
      %v2705 = vunpack.c.l.b16 %v2632
      %v2706 = vunpack.c.l.b16 %v2633
      %v2707 = vunpack.c.l.b16 %v2634
      %v2708 = vunpack.c.l.b16 %v2635
      %v2709 = vunpack.c.l.b16 %v2636
      %v2710 = vunpack.c.l.b16 %v2637
      %v2711 = vunpack.c.l.b16 %v2638
      %v2712 = vunpack.c.l.b16 %v2639
      %v2713 = vunpack.c.l.b16 %v2640
      %v2714 = vunpack.c.l.b16 %v2641
      %v2715 = vunpack.c.l.b16 %v2642
      %v2716 = vunpack.c.l.b16 %v2643
      %v2717 = vunpack.c.l.b16 %v2644
      %v2718 = vunpack.c.l.b16 %v2645
      %v2719 = vunpack.c.l.b16 %v2646
      %v2720 = vunpack.c.l.b16 %v2647
      %v2721 = vunpack.c.l.b16 %v2648
      %v2722 = vunpack.c.l.b16 %v2649
      %v2723 = vunpack.c.l.b16 %v2650
      %v2724 = vunpack.c.l.b16 %v2651
      %v2725 = vunpack.c.l.b16 %v2652
      %v2726 = vunpack.c.l.b16 %v2653
      %v2727 = vunpack.c.l.b16 %v2654
      %v2728 = vpack.c.b16 %v2697, %v2696
      %v2729 = vpack.c.b16 %v2699, %v2698
      %v2730 = vpack.c.b16 %v2701, %v2700
      %v2731 = vpack.c.b16 %v2703, %v2702
      %v2732 = vpack.c.b16 %v2705, %v2704
      %v2733 = vpack.c.b16 %v2707, %v2706
      %v2734 = vpack.c.b16 %v2709, %v2708
      %v2735 = vpack.c.b16 %v2711, %v2710
      %v2736 = vpack.c.b16 %v2713, %v2712
      %v2737 = vpack.c.b16 %v2715, %v2714
      %v2738 = vpack.c.b16 %v2717, %v2716
      %v2739 = vpack.c.b16 %v2719, %v2718
      %v2740 = vpack.c.b16 %v2721, %v2720
      %v2741 = vpack.c.b16 %v2723, %v2722
      %v2742 = vpack.c.b16 %v2725, %v2724
      %v2743 = vpack.c.b16 %v2727, %v2726
      %v2752 = vunpack.c.l.b16 %v2656
      %v2753 = vunpack.c.l.b16 %v2657
      %v2754 = vunpack.c.l.b16 %v2658
      %v2755 = vunpack.c.l.b16 %v2659
      %v2756 = vunpack.c.l.b16 %v2660
      %v2757 = vunpack.c.l.b16 %v2661
      %v2758 = vunpack.c.l.b16 %v2662
      %v2759 = vunpack.c.l.b16 %v2663
      %v2760 = vpack.c.b16 %v2753, %v2752
      %v2761 = vpack.c.b16 %v2755, %v2754
      %v2762 = vpack.c.b16 %v2757, %v2756
      %v2763 = vpack.c.b16 %v2759, %v2758
      %v2769 = vsel %vm359, %v2728, 0
      %v2772 = vsel %vm359, %v2729, 0
      %v2775 = vsel %vm359, %v2730, 0
      %v2778 = vsel %vm359, %v2731, 0
      %v2781 = vsel %vm359, %v2732, 0
      %v2784 = vsel %vm359, %v2733, 0
      %v2787 = vsel %vm359, %v2734, 0
      %v2790 = vsel %vm359, %v2735, 0
      %v2793 = vsel %vm359, %v2736, 0
      %v2796 = vsel %vm359, %v2737, 0
      %v2799 = vsel %vm359, %v2738, 0
      %v2802 = vsel %vm359, %v2739, 0
      %v2805 = vsel %vm359, %v2740, 0
      %v2808 = vsel %vm359, %v2741, 0
      %v2811 = vsel %vm359, %v2742, 0
      %v2814 = vsel %vm359, %v2743, 0
      %2816 = vmatpush.bf16.msra.mxu0 0
      %2817 = vmatpush.bf16.msra.mxu0 0
      %2818 = vmatpush.bf16.msra.mxu0 0
      %2819 = vmatpush.bf16.msra.mxu0 0
      %2820 = vmatpush.bf16.msra.mxu0 %v2763
      %2821 = vmatpush.bf16.msra.mxu0 %v2762
      %2822 = vmatpush.bf16.msra.mxu0 %v2761
      %2823 = vmatpush.bf16.msra.mxu0 %v2760
      %2824 = vmatmul.bf16.gmra.mxu0 %v2769
      %v2825 = vpop.f32.mrf.mxu0
      %v2826 = vadd.f32 0.0, %v2825
      %v2827 = vpop.f32.mrf.mxu0
      %v2828 = vadd.f32 0.0, %v2827
      %2829 = vmatmul.bf16.gmra.mxu0 %v2772
      %v2830 = vpop.f32.mrf.mxu0
      %v2831 = vadd.f32 0.0, %v2830
      %v2832 = vpop.f32.mrf.mxu0
      %v2833 = vadd.f32 0.0, %v2832
      %2834 = vmatmul.bf16.gmra.mxu0 %v2775
      %v2835 = vpop.f32.mrf.mxu0
      %v2836 = vadd.f32 0.0, %v2835
      %v2837 = vpop.f32.mrf.mxu0
      %v2838 = vadd.f32 0.0, %v2837
      %2839 = vmatmul.bf16.gmra.mxu0 %v2778
      %v2840 = vpop.f32.mrf.mxu0
      %v2841 = vadd.f32 0.0, %v2840
      %v2842 = vpop.f32.mrf.mxu0
      %v2843 = vadd.f32 0.0, %v2842
      %2844 = vmatmul.bf16.gmra.mxu0 %v2781
      %v2845 = vpop.f32.mrf.mxu0
      %v2846 = vadd.f32 0.0, %v2845
      %v2847 = vpop.f32.mrf.mxu0
      %v2848 = vadd.f32 0.0, %v2847
      %2849 = vmatmul.bf16.gmra.mxu0 %v2784
      %v2850 = vpop.f32.mrf.mxu0
      %v2851 = vadd.f32 0.0, %v2850
      %v2852 = vpop.f32.mrf.mxu0
      %v2853 = vadd.f32 0.0, %v2852
      %2854 = vmatmul.bf16.gmra.mxu0 %v2787
      %v2855 = vpop.f32.mrf.mxu0
      %v2856 = vadd.f32 0.0, %v2855
      %v2857 = vpop.f32.mrf.mxu0
      %v2858 = vadd.f32 0.0, %v2857
      %2859 = vmatmul.bf16.gmra.mxu0 %v2790
      %v2860 = vpop.f32.mrf.mxu0
      %v2861 = vadd.f32 0.0, %v2860
      %v2862 = vpop.f32.mrf.mxu0
      %v2863 = vadd.f32 0.0, %v2862
      %2864 = vmatmul.bf16.gmra.mxu0 %v2793
      %v2865 = vpop.f32.mrf.mxu0
      %v2866 = vadd.f32 0.0, %v2865
      %v2867 = vpop.f32.mrf.mxu0
      %v2868 = vadd.f32 0.0, %v2867
      %2869 = vmatmul.bf16.gmra.mxu0 %v2796
      %v2870 = vpop.f32.mrf.mxu0
      %v2871 = vadd.f32 0.0, %v2870
      %v2872 = vpop.f32.mrf.mxu0
      %v2873 = vadd.f32 0.0, %v2872
      %2874 = vmatmul.bf16.gmra.mxu0 %v2799
      %v2875 = vpop.f32.mrf.mxu0
      %v2876 = vadd.f32 0.0, %v2875
      %v2877 = vpop.f32.mrf.mxu0
      %v2878 = vadd.f32 0.0, %v2877
      %2879 = vmatmul.bf16.gmra.mxu0 %v2802
      %v2880 = vpop.f32.mrf.mxu0
      %v2881 = vadd.f32 0.0, %v2880
      %v2882 = vpop.f32.mrf.mxu0
      %v2883 = vadd.f32 0.0, %v2882
      %2884 = vmatmul.bf16.gmra.mxu0 %v2805
      %v2885 = vpop.f32.mrf.mxu0
      %v2886 = vadd.f32 0.0, %v2885
      %v2887 = vpop.f32.mrf.mxu0
      %v2888 = vadd.f32 0.0, %v2887
      %2889 = vmatmul.bf16.gmra.mxu0 %v2808
      %v2890 = vpop.f32.mrf.mxu0
      %v2891 = vadd.f32 0.0, %v2890
      %v2892 = vpop.f32.mrf.mxu0
      %v2893 = vadd.f32 0.0, %v2892
      %2894 = vmatmul.bf16.gmra.mxu0 %v2811
      %v2895 = vpop.f32.mrf.mxu0
      %v2896 = vadd.f32 0.0, %v2895
      %v2897 = vpop.f32.mrf.mxu0
      %v2898 = vadd.f32 0.0, %v2897
      %2899 = vmatmul.bf16.gmra.mxu0 %v2814
      %v2900 = vpop.f32.mrf.mxu0
      %v2901 = vadd.f32 0.0, %v2900
      %v2902 = vpop.f32.mrf.mxu0
      %v2903 = vadd.f32 0.0, %v2902
      %2904 = vdwg.mxu0
      %v2905 = vadd.f32 %v2591, %v2826
      %v2906 = vadd.f32 %v2592, %v2828
      %v2907 = vadd.f32 %v2593, %v2831
      %v2908 = vadd.f32 %v2594, %v2833
      %v2909 = vadd.f32 %v2595, %v2836
      %v2910 = vadd.f32 %v2596, %v2838
      %v2911 = vadd.f32 %v2597, %v2841
      %v2912 = vadd.f32 %v2598, %v2843
      %v2913 = vadd.f32 %v2599, %v2846
      %v2914 = vadd.f32 %v2600, %v2848
      %v2915 = vadd.f32 %v2601, %v2851
      %v2916 = vadd.f32 %v2602, %v2853
      %v2917 = vadd.f32 %v2603, %v2856
      %v2918 = vadd.f32 %v2604, %v2858
      %v2919 = vadd.f32 %v2605, %v2861
      %v2920 = vadd.f32 %v2606, %v2863
      %v2921 = vadd.f32 %v2607, %v2866
      %v2922 = vadd.f32 %v2608, %v2868
      %v2923 = vadd.f32 %v2609, %v2871
      %v2924 = vadd.f32 %v2610, %v2873
      %v2925 = vadd.f32 %v2611, %v2876
      %v2926 = vadd.f32 %v2612, %v2878
      %v2927 = vadd.f32 %v2613, %v2881
      %v2928 = vadd.f32 %v2614, %v2883
      %v2929 = vadd.f32 %v2615, %v2886
      %v2930 = vadd.f32 %v2616, %v2888
      %v2931 = vadd.f32 %v2617, %v2891
      %v2932 = vadd.f32 %v2618, %v2893
      %v2933 = vadd.f32 %v2619, %v2896
      %v2934 = vadd.f32 %v2620, %v2898
      %v2935 = vadd.f32 %v2621, %v2901
      %v2936 = vadd.f32 %v2622, %v2903
      %v2937 = vld [vmem:[%s2] sm:$0x1]
      %v2939 = vperm.slane %v2937, 0
      %v2941 = vadd.f32 %v2905, %v2939
      %v2942 = vadd.f32 %v2906, %v2939
      %v2943 = vadd.f32 %v2907, %v2939
      %v2944 = vadd.f32 %v2908, %v2939
      %v2945 = vadd.f32 %v2909, %v2939
      %v2946 = vadd.f32 %v2910, %v2939
      %v2947 = vadd.f32 %v2911, %v2939
      %v2948 = vadd.f32 %v2912, %v2939
      %v2949 = vadd.f32 %v2913, %v2939
      %v2950 = vadd.f32 %v2914, %v2939
      %v2951 = vadd.f32 %v2915, %v2939
      %v2952 = vadd.f32 %v2916, %v2939
      %v2953 = vadd.f32 %v2917, %v2939
      %v2954 = vadd.f32 %v2918, %v2939
      %v2955 = vadd.f32 %v2919, %v2939
      %v2956 = vadd.f32 %v2920, %v2939
      %v2957 = vadd.f32 %v2921, %v2939
      %v2958 = vadd.f32 %v2922, %v2939
      %v2959 = vadd.f32 %v2923, %v2939
      %v2960 = vadd.f32 %v2924, %v2939
      %v2961 = vadd.f32 %v2925, %v2939
      %v2962 = vadd.f32 %v2926, %v2939
      %v2963 = vadd.f32 %v2927, %v2939
      %v2964 = vadd.f32 %v2928, %v2939
      %v2965 = vadd.f32 %v2929, %v2939
      %v2966 = vadd.f32 %v2930, %v2939
      %v2967 = vadd.f32 %v2931, %v2939
      %v2968 = vadd.f32 %v2932, %v2939
      %v2969 = vadd.f32 %v2933, %v2939
      %v2970 = vadd.f32 %v2934, %v2939
      %v2971 = vadd.f32 %v2935, %v2939
      %v2972 = vadd.f32 %v2936, %v2939
      %v2973 = vmax.f32 %v2941, 0.0
      %v2974 = vmax.f32 %v2942, 0.0
      %v2975 = vmax.f32 %v2943, 0.0
      %v2976 = vmax.f32 %v2944, 0.0
      %v2977 = vmax.f32 %v2945, 0.0
      %v2978 = vmax.f32 %v2946, 0.0
      %v2979 = vmax.f32 %v2947, 0.0
      %v2980 = vmax.f32 %v2948, 0.0
      %v2981 = vmax.f32 %v2949, 0.0
      %v2982 = vmax.f32 %v2950, 0.0
      %v2983 = vmax.f32 %v2951, 0.0
      %v2984 = vmax.f32 %v2952, 0.0
      %v2985 = vmax.f32 %v2953, 0.0
      %v2986 = vmax.f32 %v2954, 0.0
      %v2987 = vmax.f32 %v2955, 0.0
      %v2988 = vmax.f32 %v2956, 0.0
      %v2989 = vmax.f32 %v2957, 0.0
      %v2990 = vmax.f32 %v2958, 0.0
      %v2991 = vmax.f32 %v2959, 0.0
      %v2992 = vmax.f32 %v2960, 0.0
      %v2993 = vmax.f32 %v2961, 0.0
      %v2994 = vmax.f32 %v2962, 0.0
      %v2995 = vmax.f32 %v2963, 0.0
      %v2996 = vmax.f32 %v2964, 0.0
      %v2997 = vmax.f32 %v2965, 0.0
      %v2998 = vmax.f32 %v2966, 0.0
      %v2999 = vmax.f32 %v2967, 0.0
      %v3000 = vmax.f32 %v2968, 0.0
      %v3001 = vmax.f32 %v2969, 0.0
      %v3002 = vmax.f32 %v2970, 0.0
      %v3003 = vmax.f32 %v2971, 0.0
      %v3004 = vmax.f32 %v2972, 0.0
      %v3005 = vpack.c.bf16 %v2973, %v2973
      %v3006 = vpack.c.bf16 %v2974, %v2974
      %v3007 = vpack.c.bf16 %v2975, %v2975
      %v3008 = vpack.c.bf16 %v2976, %v2976
      %v3009 = vpack.c.bf16 %v2977, %v2977
      %v3010 = vpack.c.bf16 %v2978, %v2978
      %v3011 = vpack.c.bf16 %v2979, %v2979
      %v3012 = vpack.c.bf16 %v2980, %v2980
      %v3013 = vpack.c.bf16 %v2981, %v2981
      %v3014 = vpack.c.bf16 %v2982, %v2982
      %v3015 = vpack.c.bf16 %v2983, %v2983
      %v3016 = vpack.c.bf16 %v2984, %v2984
      %v3017 = vpack.c.bf16 %v2985, %v2985
      %v3018 = vpack.c.bf16 %v2986, %v2986
      %v3019 = vpack.c.bf16 %v2987, %v2987
      %v3020 = vpack.c.bf16 %v2988, %v2988
      %v3021 = vpack.c.bf16 %v2989, %v2989
      %v3022 = vpack.c.bf16 %v2990, %v2990
      %v3023 = vpack.c.bf16 %v2991, %v2991
      %v3024 = vpack.c.bf16 %v2992, %v2992
      %v3025 = vpack.c.bf16 %v2993, %v2993
      %v3026 = vpack.c.bf16 %v2994, %v2994
      %v3027 = vpack.c.bf16 %v2995, %v2995
      %v3028 = vpack.c.bf16 %v2996, %v2996
      %v3029 = vpack.c.bf16 %v2997, %v2997
      %v3030 = vpack.c.bf16 %v2998, %v2998
      %v3031 = vpack.c.bf16 %v2999, %v2999
      %v3032 = vpack.c.bf16 %v3000, %v3000
      %v3033 = vpack.c.bf16 %v3001, %v3001
      %v3034 = vpack.c.bf16 %v3002, %v3002
      %v3035 = vpack.c.bf16 %v3003, %v3003
      %v3036 = vpack.c.bf16 %v3004, %v3004
      %vm3037 = vcmask 519168
      %3038 = vst.msk [vmem:[%s170] sm:$0xf] %vm3037, %v3005
      %3039 = vst.msk [vmem:[%s170 + $0x4] sm:$0xf] %vm3037, %v3006
      %3040 = vst.msk [vmem:[%s170 + $0x8] sm:$0xf] %vm3037, %v3007
      %3041 = vst.msk [vmem:[%s170 + $0xc] sm:$0xf] %vm3037, %v3008
      %3042 = vst.msk [vmem:[%s170 + $0x10] sm:$0xf] %vm3037, %v3009
      %3043 = vst.msk [vmem:[%s170 + $0x14] sm:$0xf] %vm3037, %v3010
      %3044 = vst.msk [vmem:[%s170 + $0x18] sm:$0xf] %vm3037, %v3011
      %3045 = vst.msk [vmem:[%s170 + $0x1c] sm:$0xf] %vm3037, %v3012
      %3046 = vst.msk [vmem:[%s170 + $0x20] sm:$0xf] %vm3037, %v3013
      %3047 = vst.msk [vmem:[%s170 + $0x24] sm:$0xf] %vm3037, %v3014
      %3048 = vst.msk [vmem:[%s170 + $0x28] sm:$0xf] %vm3037, %v3015
      %3049 = vst.msk [vmem:[%s170 + $0x2c] sm:$0xf] %vm3037, %v3016
      %3050 = vst.msk [vmem:[%s170 + $0x30] sm:$0xf] %vm3037, %v3017
      %3051 = vst.msk [vmem:[%s170 + $0x34] sm:$0xf] %vm3037, %v3018
      %3052 = vst.msk [vmem:[%s170 + $0x38] sm:$0xf] %vm3037, %v3019
      %3053 = vst.msk [vmem:[%s170 + $0x3c] sm:$0xf] %vm3037, %v3020
      %3054 = vst.msk [vmem:[%s170 + $0x40] sm:$0xf] %vm3037, %v3021
      %3055 = vst.msk [vmem:[%s170 + $0x44] sm:$0xf] %vm3037, %v3022
      %3056 = vst.msk [vmem:[%s170 + $0x48] sm:$0xf] %vm3037, %v3023
      %3057 = vst.msk [vmem:[%s170 + $0x4c] sm:$0xf] %vm3037, %v3024
      %3058 = vst.msk [vmem:[%s170 + $0x50] sm:$0xf] %vm3037, %v3025
      %3059 = vst.msk [vmem:[%s170 + $0x54] sm:$0xf] %vm3037, %v3026
      %3060 = vst.msk [vmem:[%s170 + $0x58] sm:$0xf] %vm3037, %v3027
      %3061 = vst.msk [vmem:[%s170 + $0x5c] sm:$0xf] %vm3037, %v3028
      %3062 = vst.msk [vmem:[%s170 + $0x60] sm:$0xf] %vm3037, %v3029
      %3063 = vst.msk [vmem:[%s170 + $0x64] sm:$0xf] %vm3037, %v3030
      %3064 = vst.msk [vmem:[%s170 + $0x68] sm:$0xf] %vm3037, %v3031
      %3065 = vst.msk [vmem:[%s170 + $0x6c] sm:$0xf] %vm3037, %v3032
      %3066 = vst.msk [vmem:[%s170 + $0x70] sm:$0xf] %vm3037, %v3033
      %3067 = vst.msk [vmem:[%s170 + $0x74] sm:$0xf] %vm3037, %v3034
      %3068 = vst.msk [vmem:[%s170 + $0x78] sm:$0xf] %vm3037, %v3035
      %3069 = vst.msk [vmem:[%s170 + $0x7c] sm:$0xf] %vm3037, %v3036
      %s3070 = smul.u32 32, %s14
      %p3071 = scmp.lt.s32.totalorder %s3070, 63
      %s3072 = scalar_select %p3071, %s3070, 63
      %s3073 = smul.addr %s3072, 4
      %s3074 = scalar_lea.vmem %s3, %s3073
      // Predicated region
      $region33: #{bottleneck_forward.5} parent=31 // pred_check
        %p3075 = pneg %p100
      $region34: #{bottleneck_forward.5} parent=31 // pred_check_branch
        %3077 = sbr.rel (%p3075) target = $region36
      $region35: #{bottleneck_forward.5} parent=31 // pred_region
        %s3078 = smul.u32 32, %s14
      $region36: #{bottleneck_forward.5} parent=31 // pred_fallthru
        _
    $region32: #{bottleneck_forward.5} parent=5 // pred_fallthru
      _
    %p3079 = scmp.le.s32.totalorder 2, %s9
    // Predicated region
    $region37: #{bottleneck_forward.5} parent=5 // pred_check
      %p3080 = pneg %p3079
    $region38: #{bottleneck_forward.5} parent=5 // pred_check_branch
      %3082 = sbr.rel (%p3080) target = $region40
    $region39: #{bottleneck_forward.5} parent=5 // pred_region
      %s3083 = ssub.s32 %s9, 2
      // Predicated region
      $region41: #{bottleneck_forward.5} parent=39 // pred_check
        %p3084 = pneg %p106
      $region42: #{bottleneck_forward.5} parent=39 // pred_check_branch
        %3086 = sbr.rel (%p3084) target = $region44
      $region43: #{bottleneck_forward.5} parent=39 // pred_region
        %s3087 = smul.u32 32, %s15
        %p3088 = scmp.lt.s32.totalorder %s3087, 63
        %s3089 = scalar_select %p3088, %s3087, 63
        %s3090 = smul.addr %s3089, 4
        %s3091 = scalar_lea.vmem %s3, %s3090
      $region44: #{bottleneck_forward.5} parent=39 // pred_fallthru
        _
    $region40: #{bottleneck_forward.5} parent=5 // pred_fallthru
      _
  $region6: #{bottleneck_forward.5} parent=0 // loop_footer
    %s13 = sadd.s32 1, %s9
  $region7: #{bottleneck_forward.5} parent=0 // loop_footer_branch
    %8 = sbr.rel target = $region3
  $region8: #{bottleneck_forward.5} parent=0 // loop_exit
    _

</llo_original>
